<compile_context>
chip_gen: v7x
topology: tpu7x:2x2x1
jax: 0.10.0
libtpu: 0.0.40
codegen_flags: <defaults>
</compile_context>

<pallas_src>
import functools

import jax
import jax.numpy as jnp
from jax.experimental import pallas as pl
from jax.experimental.pallas import tpu as pltpu


_BN_EPS = 1e-5
_LANE = 128


def _round_up(n, m):
    return -(-n // m) * m


# ----------------------------------------------------------------------------
# Kernel
# ----------------------------------------------------------------------------
def _fc_model_kernel(x_ref,
                     w1_ref, b1_ref,
                     w2_ref, b2_ref,
                     w3_ref, b3_ref,
                     w4_ref, b4_ref,
                     w5_ref, b5_ref,
                     o_ref, *, n_classes):
    """One batch tile: five folded (matmul + bias [+ relu]) layers + masked softmax.

    attn1 / eval-mode BN / biases are pre-folded into (w, b); dropout is
    identity in eval mode, so the body is MXU work plus a cheap epilogue.
    """
    def layer(h, w_ref, b_ref, relu):
        y = jnp.dot(h.astype(jnp.bfloat16), w_ref[...],
                    preferred_element_type=jnp.float32) + b_ref[...]
        return jnp.maximum(y, 0.0) if relu else y

    h = x_ref[...]                                    # (TB, F)       f32
    h = layer(h, w1_ref, b1_ref, relu=True)           # (TB, 896)     lane-dense
    h = layer(h, w2_ref, b2_ref, relu=True)           # (TB, 128)     lane-dense
    h = layer(h, w3_ref, b3_ref, relu=True)           # (TB, 896)     lane-dense
    h = layer(h, w4_ref, b4_ref, relu=True)           # (TB, F)
    logits = layer(h, w5_ref, b5_ref, relu=False)     # (TB, OUT_PAD) lane-dense

    # Softmax over the real class lanes only.  Explicit mask + exact division:
    # padded lanes are exactly 0, rows sum to 1 up to f32 rounding (no approx
    # reciprocal, no reliance on exp() underflow of huge negative biases).
    lane = jax.lax.broadcasted_iota(jnp.int32, logits.shape, 1)
    valid = lane < n_classes
    m = jnp.max(jnp.where(valid, logits, -1e30), axis=1, keepdims=True)
    e = jnp.where(valid, jnp.exp(logits - m), 0.0)
    denom = jnp.sum(e, axis=1, keepdims=True)
    o_ref[...] = (e * (1.0 / denom)).astype(o_ref.dtype)


# ----------------------------------------------------------------------------
# Wrapper
# ----------------------------------------------------------------------------
def _choose_batch_tile(B, requested=None, *, max_tile=512, min_grid=2):
    """Largest tile up to max_tile (rounded to a sublane multiple of 8), but
    keep >= min_grid grid steps once B is large enough so v7x's two
    TensorCores both get work; on single-TC v5e/v6e the extra step is ~free."""
    if requested is not None:
        tb = requested
    elif B >= min_grid * 256:
        tb = min(max_tile, -(-B // min_grid))
    else:
        tb = min(B, max_tile)
    return max(8, _round_up(tb, 8))


def fc_model_forward(x, folded, *, n_classes, batch_tile=None,
                     out_dtype=jnp.float32):
    """x: (B, F) float32.  folded: dict with bf16 'w1..w5' and f32 'b1..b5'.

    Returns the padded softmax (B_pad, OUT_PAD); caller slices [:B, :n_classes].
    Padded class columns are exactly zero.
    """
    B, F = x.shape
    out_pad = folded["w5"].shape[1]
    h1p = folded["w1"].shape[1]
    h2p = folded["w2"].shape[1]

    tb = _choose_batch_tile(B, batch_tile)
    n_tiles = pl.cdiv(B, tb)
    b_pad = n_tiles * tb
    if b_pad != B:
        x = jnp.pad(x, ((0, b_pad - B), (0, 0)))

    param_names = ("w1", "b1", "w2", "b2", "w3", "b3", "w4", "b4", "w5", "b5")
    params = [folded[n] for n in param_names]

    in_specs = [pl.BlockSpec((tb, F), lambda i: (i, 0))]          # batch-tiled x
    for arr in params:
        # Full-array block, constant block index -> stays VMEM-resident across
        # grid steps (no per-step weight re-DMA).
        in_specs.append(pl.BlockSpec(arr.shape, lambda i: (0, 0)))

    # Only override the scoped-VMEM limit when a big tile would approach v5e's
    # 16 MiB default (v6e/v7x default 32 MiB); cap far below v7x's 64 MiB.
    est_bytes = (3 * tb * max(h1p, h2p) * 4                      # live f32 intermediates
                 + 2 * tb * (F + out_pad) * 4                    # double-buffered x/out tiles
                 + 2 * sum(a.size * a.dtype.itemsize for a in params))
    vmem_limit = None
    if est_bytes > 12 * 1024 * 1024:
        vmem_limit = min(int(est_bytes * 1.4), 32 * 1024 * 1024)

    kernel = functools.partial(_fc_model_kernel, n_classes=n_classes)
    return pl.pallas_call(
        kernel,
        out_shape=jax.ShapeDtypeStruct((b_pad, out_pad), out_dtype),
        grid=(n_tiles,),
        in_specs=in_specs,
        out_specs=pl.BlockSpec((tb, out_pad), lambda i: (i, 0)),
        compiler_params=pltpu.CompilerParams(
            dimension_semantics=("parallel",),     # lets v7x shard tiles over 2 TCs
            vmem_limit_bytes=vmem_limit),
    )(x, *params)


# ----------------------------------------------------------------------------
# Parameter construction / folding (plain-JAX glue, one-time cost)
# ----------------------------------------------------------------------------
def init_raw_params(key, in_features, out_features):
    """PyTorch-style raw parameters (attn1, per-layer Linear, per-BN stats)."""
    F = in_features
    dims = [(F, 100 * F), (100 * F, 10 * F), (10 * F, 100 * F), (100 * F, F),
            (F, out_features)]
    bn_dims = [F, 100 * F, 10 * F, 100 * F, F, out_features]   # bn0..bn5

    raw = {}
    k_attn, k_bn, k_lin = jax.random.split(key, 3)
    raw["attn1"] = jax.random.normal(k_attn, (F,), jnp.float32)

    bn_keys = jax.random.split(k_bn, 4 * len(bn_dims))
    for i, c in enumerate(bn_dims):
        kg, kb, km, kv = bn_keys[4 * i: 4 * i + 4]
        raw[f"bn{i}_gamma"] = 1.0 + 0.1 * jax.random.normal(kg, (c,), jnp.float32)
        raw[f"bn{i}_beta"] = 0.1 * jax.random.normal(kb, (c,), jnp.float32)
        raw[f"bn{i}_mean"] = 0.05 * jax.random.normal(km, (c,), jnp.float32)
        raw[f"bn{i}_var"] = 0.9 + 0.2 * jax.random.uniform(kv, (c,), jnp.float32)

    lin_keys = jax.random.split(k_lin, 2 * len(dims))
    for i, (d_in, d_out) in enumerate(dims, start=1):
        scale = 1.0 / jnp.sqrt(jnp.float32(d_in))
        raw[f"w{i}"] = scale * jax.random.normal(
            lin_keys[2 * (i - 1)], (d_in, d_out), jnp.float32)   # stored (in, out)
        raw[f"b{i}"] = scale * jax.random.normal(
            lin_keys[2 * (i - 1) + 1], (d_out,), jnp.float32)
    return raw


def fold_params(raw, out_features, *, lane=_LANE):
    """Fold attn1 + eval-mode BN affines + biases into per-layer (W, b) and pad
    every layer width to a lane-dense multiple of 128 with zeros.

    Exact identities:
      ((x*a)*s0 + t0) @ W1 + b1 = x @ (diag(a*s0) W1) + (t0 @ W1 + b1)
      (x @ W + b) * s + t       = x @ (W diag(s))    + (b*s + t)
    Zero-padding is numerically exact: padded output lanes get 0 weight and 0
    bias (ReLU keeps them 0) and padded input rows multiply zero activations.
    The class padding of layer 5 is masked out of the softmax inside the kernel.
    """
    F = raw["attn1"].shape[0]
    h1, h2 = 100 * F, 10 * F
    h1p, h2p = _round_up(h1, lane), _round_up(h2, lane)
    out_pad = _round_up(out_features, lane)
    pad_in = {1: F, 2: h1p, 3: h2p, 4: h1p, 5: F}
    pad_out = {1: h1p, 2: h2p, 3: h1p, 4: F, 5: out_pad}

    def bn_affine(i):
        s = raw[f"bn{i}_gamma"] / jnp.sqrt(raw[f"bn{i}_var"] + _BN_EPS)
        t = raw[f"bn{i}_beta"] - raw[f"bn{i}_mean"] * s
        return s, t

    s0, t0 = bn_affine(0)
    folded = {}
    for i in range(1, 6):
        w = raw[f"w{i}"]
        b = raw[f"b{i}"]
        if i == 1:
            pre = raw["attn1"] * s0                    # fold attn1 * bn0 into W1
            w = pre[:, None] * w
            b = t0 @ raw["w1"] + b
        s, t = bn_affine(i)                            # fold bn_i into W_i, b_i
        w = w * s[None, :]
        b = b * s + t
        w = jnp.pad(w, ((0, pad_in[i] - w.shape[0]), (0, pad_out[i] - w.shape[1])))
        b = jnp.pad(b, (0, pad_out[i] - b.shape[0]))
        folded[f"w{i}"] = w.astype(jnp.bfloat16)       # bf16 weights, f32 biases
        folded[f"b{i}"] = b[None, :].astype(jnp.float32)
    return folded


# ----------------------------------------------------------------------------
# Pure-JAX references
# ----------------------------------------------------------------------------
def reference_forward_raw(x, raw):
    """Unfused f32 eval-mode forward of the original PyTorch module."""
    def bn(h, i):
        s = raw[f"bn{i}_gamma"] / jnp.sqrt(raw[f"bn{i}_var"] + _BN_EPS)
        return (h - raw[f"bn{i}_mean"]) * s + raw[f"bn{i}_beta"]

    h = bn(x * raw["attn1"], 0)
    for i in range(1, 5):
        h = h @ raw[f"w{i}"] + raw[f"b{i}"]            # dropout = identity (eval)
        h = jnp.maximum(bn(h, i), 0.0)
    h = h @ raw["w5"] + raw["b5"]
    return jax.nn.softmax(bn(h, 5), axis=1)


def reference_forward_folded(x, folded, n_classes):
    """Same math/precision as the kernel (bf16 dots, f32 accum, exact softmax)."""
    h = x
    for i in range(1, 5):
        h = jnp.dot(h.astype(jnp.bfloat16), folded[f"w{i}"],
                    preferred_element_type=jnp.float32) + folded[f"b{i}"]
        h = jnp.maximum(h, 0.0)
    logits = jnp.dot(h.astype(jnp.bfloat16), folded["w5"],
                     preferred_element_type=jnp.float32) + folded["b5"]
    return jax.nn.softmax(logits[:, :n_classes], axis=1)


# ----------------------------------------------------------------------------
# Demo / self-check
# ----------------------------------------------------------------------------
if __name__ == "__main__":
    in_features = 8
    out_features = 16
    batch = 512                      # heuristic tile -> 2 grid steps of 256 rows

    key = jax.random.PRNGKey(0)
    kx, kp = jax.random.split(key)
    x = jax.random.normal(kx, (batch, in_features), jnp.float32)
    raw = init_raw_params(kp, in_features, out_features)
    folded = fold_params(raw, out_features)

    out_full = fc_model_forward(x, folded, n_classes=out_features)
    out_full = jax.block_until_ready(out_full)
    out = out_full[:batch, :out_features]            # drop padded classes (== 0)

    assert out.shape == (batch, out_features)
    assert bool(jnp.all(jnp.isfinite(out)))
    # Exact normalization (division, not approx reciprocal) -> ~1e-6 error.
    assert jnp.allclose(jnp.sum(out, axis=1), 1.0, atol=1e-3)
    # Padded class lanes are masked to exactly zero.
    assert float(jnp.max(jnp.abs(out_full[:batch, out_features:]))) == 0.0

    # Tight check vs. a reference that uses identical folded/bf16 math.
    ref_folded = reference_forward_folded(x, folded, out_features)
    assert jnp.allclose(out, ref_folded, atol=2e-3, rtol=2e-3)

    # Loose semantic check vs. the unfused f32 module (bf16 weights dominate error).
    ref_raw = reference_forward_raw(x, raw)
    assert jnp.allclose(out, ref_raw, atol=5e-2, rtol=5e-2)

    # bf16 output option (halves the dominant HBM writeback stream at large B).
    out_bf16 = fc_model_forward(x, folded, n_classes=out_features,
                                out_dtype=jnp.bfloat16)
    out_bf16 = jax.block_until_ready(out_bf16)[:batch, :out_features]
    assert jnp.allclose(out_bf16.astype(jnp.float32), out, atol=1.5e-2)

    print("KERNEL_OK")
</pallas_src>

<mosaic_0001>
module attributes {stable_mosaic.version = 11 : i64} {
  func.func @_fc_model_kernel(%arg0: i32, %arg1: memref<256x8xf32, #tpu.memory_space<vmem>>, %arg2: memref<8x896xbf16, #tpu.memory_space<vmem>>, %arg3: memref<1x896xf32, #tpu.memory_space<vmem>>, %arg4: memref<896x128xbf16, #tpu.memory_space<vmem>>, %arg5: memref<1x128xf32, #tpu.memory_space<vmem>>, %arg6: memref<128x896xbf16, #tpu.memory_space<vmem>>, %arg7: memref<1x896xf32, #tpu.memory_space<vmem>>, %arg8: memref<896x8xbf16, #tpu.memory_space<vmem>>, %arg9: memref<1x8xf32, #tpu.memory_space<vmem>>, %arg10: memref<8x128xbf16, #tpu.memory_space<vmem>>, %arg11: memref<1x128xf32, #tpu.memory_space<vmem>>, %arg12: memref<256x128xf32, #tpu.memory_space<vmem>>) attributes {dimension_semantics = [#tpu.dimension_semantics<parallel>], iteration_bounds = array<i64: 2>, scalar_prefetch = 0 : i64, scratch_operands = 0 : i64, tpu.core_type = #tpu.core_type<tc>, window_params = [{transform_indices = @transform_0, window_bounds = array<i64: 256, 8>}, {pipeline_mode = #tpu.pipeline_mode<synchronous>, transform_indices = @transform_1, window_bounds = array<i64: 8, 896>}, {pipeline_mode = #tpu.pipeline_mode<synchronous>, transform_indices = @transform_2, window_bounds = array<i64: 1, 896>}, {pipeline_mode = #tpu.pipeline_mode<synchronous>, transform_indices = @transform_3, window_bounds = array<i64: 896, 128>}, {pipeline_mode = #tpu.pipeline_mode<synchronous>, transform_indices = @transform_4, window_bounds = array<i64: 1, 128>}, {pipeline_mode = #tpu.pipeline_mode<synchronous>, transform_indices = @transform_5, window_bounds = array<i64: 128, 896>}, {pipeline_mode = #tpu.pipeline_mode<synchronous>, transform_indices = @transform_6, window_bounds = array<i64: 1, 896>}, {pipeline_mode = #tpu.pipeline_mode<synchronous>, transform_indices = @transform_7, window_bounds = array<i64: 896, 8>}, {pipeline_mode = #tpu.pipeline_mode<synchronous>, transform_indices = @transform_8, window_bounds = array<i64: 1, 8>}, {pipeline_mode = #tpu.pipeline_mode<synchronous>, transform_indices = @transform_9, window_bounds = array<i64: 8, 128>}, {pipeline_mode = #tpu.pipeline_mode<synchronous>, transform_indices = @transform_10, window_bounds = array<i64: 1, 128>}, {transform_indices = @transform_11, window_bounds = array<i64: 256, 128>}]} {
    %c0 = arith.constant 0 : index
    %c0_0 = arith.constant 0 : index
    %0 = vector.load %arg1[%c0, %c0_0] : memref<256x8xf32, #tpu.memory_space<vmem>>, vector<256x8xf32>
    %1 = arith.truncf %0 : vector<256x8xf32> to vector<256x8xbf16>
    %c0_1 = arith.constant 0 : index
    %c0_2 = arith.constant 0 : index
    %2 = vector.load %arg2[%c0_1, %c0_2] : memref<8x896xbf16, #tpu.memory_space<vmem>>, vector<8x896xbf16>
    %cst = arith.constant dense<0.000000e+00> : vector<256x896xf32>
    %3 = tpu.matmul %1, %2, %cst {dimension_numbers = #tpu.dot_dimension_numbers<[1], [0], [0], [1], [0, 0, 1, 1], [], []>} : vector<256x8xbf16>, vector<8x896xbf16>, vector<256x896xf32> -> vector<256x896xf32>
    %c0_3 = arith.constant 0 : index
    %c0_4 = arith.constant 0 : index
    %4 = vector.load %arg3[%c0_3, %c0_4] : memref<1x896xf32, #tpu.memory_space<vmem>>, vector<1x896xf32>
    %5 = vector.broadcast %4 : vector<1x896xf32> to vector<256x896xf32>
    %6 = arith.addf %3, %5 : vector<256x896xf32>
    %cst_5 = arith.constant 0.000000e+00 : f32
    %7 = vector.broadcast %cst_5 : f32 to vector<256x896xf32>
    %8 = arith.maximumf %6, %7 : vector<256x896xf32>
    %9 = arith.truncf %8 : vector<256x896xf32> to vector<256x896xbf16>
    %c0_6 = arith.constant 0 : index
    %c0_7 = arith.constant 0 : index
    %10 = vector.load %arg4[%c0_6, %c0_7] : memref<896x128xbf16, #tpu.memory_space<vmem>>, vector<896x128xbf16>
    %cst_8 = arith.constant dense<0.000000e+00> : vector<256x128xf32>
    %11 = tpu.matmul %9, %10, %cst_8 {dimension_numbers = #tpu.dot_dimension_numbers<[1], [0], [0], [1], [0, 0, 1, 1], [], []>} : vector<256x896xbf16>, vector<896x128xbf16>, vector<256x128xf32> -> vector<256x128xf32>
    %c0_9 = arith.constant 0 : index
    %c0_10 = arith.constant 0 : index
    %12 = vector.load %arg5[%c0_9, %c0_10] : memref<1x128xf32, #tpu.memory_space<vmem>>, vector<1x128xf32>
    %13 = vector.broadcast %12 : vector<1x128xf32> to vector<256x128xf32>
    %14 = arith.addf %11, %13 : vector<256x128xf32>
    %cst_11 = arith.constant 0.000000e+00 : f32
    %15 = vector.broadcast %cst_11 : f32 to vector<256x128xf32>
    %16 = arith.maximumf %14, %15 : vector<256x128xf32>
    %17 = arith.truncf %16 : vector<256x128xf32> to vector<256x128xbf16>
    %c0_12 = arith.constant 0 : index
    %c0_13 = arith.constant 0 : index
    %18 = vector.load %arg6[%c0_12, %c0_13] : memref<128x896xbf16, #tpu.memory_space<vmem>>, vector<128x896xbf16>
    %cst_14 = arith.constant dense<0.000000e+00> : vector<256x896xf32>
    %19 = tpu.matmul %17, %18, %cst_14 {dimension_numbers = #tpu.dot_dimension_numbers<[1], [0], [0], [1], [0, 0, 1, 1], [], []>} : vector<256x128xbf16>, vector<128x896xbf16>, vector<256x896xf32> -> vector<256x896xf32>
    %c0_15 = arith.constant 0 : index
    %c0_16 = arith.constant 0 : index
    %20 = vector.load %arg7[%c0_15, %c0_16] : memref<1x896xf32, #tpu.memory_space<vmem>>, vector<1x896xf32>
    %21 = vector.broadcast %20 : vector<1x896xf32> to vector<256x896xf32>
    %22 = arith.addf %19, %21 : vector<256x896xf32>
    %cst_17 = arith.constant 0.000000e+00 : f32
    %23 = vector.broadcast %cst_17 : f32 to vector<256x896xf32>
    %24 = arith.maximumf %22, %23 : vector<256x896xf32>
    %25 = arith.truncf %24 : vector<256x896xf32> to vector<256x896xbf16>
    %c0_18 = arith.constant 0 : index
    %c0_19 = arith.constant 0 : index
    %26 = vector.load %arg8[%c0_18, %c0_19] : memref<896x8xbf16, #tpu.memory_space<vmem>>, vector<896x8xbf16>
    %cst_20 = arith.constant dense<0.000000e+00> : vector<256x8xf32>
    %27 = tpu.matmul %25, %26, %cst_20 {dimension_numbers = #tpu.dot_dimension_numbers<[1], [0], [0], [1], [0, 0, 1, 1], [], []>} : vector<256x896xbf16>, vector<896x8xbf16>, vector<256x8xf32> -> vector<256x8xf32>
    %c0_21 = arith.constant 0 : index
    %c0_22 = arith.constant 0 : index
    %28 = vector.load %arg9[%c0_21, %c0_22] : memref<1x8xf32, #tpu.memory_space<vmem>>, vector<1x8xf32>
    %29 = vector.broadcast %28 : vector<1x8xf32> to vector<256x8xf32>
    %30 = arith.addf %27, %29 : vector<256x8xf32>
    %cst_23 = arith.constant 0.000000e+00 : f32
    %31 = vector.broadcast %cst_23 : f32 to vector<256x8xf32>
    %32 = arith.maximumf %30, %31 : vector<256x8xf32>
    %33 = arith.truncf %32 : vector<256x8xf32> to vector<256x8xbf16>
    %c0_24 = arith.constant 0 : index
    %c0_25 = arith.constant 0 : index
    %34 = vector.load %arg10[%c0_24, %c0_25] : memref<8x128xbf16, #tpu.memory_space<vmem>>, vector<8x128xbf16>
    %cst_26 = arith.constant dense<0.000000e+00> : vector<256x128xf32>
    %35 = tpu.matmul %33, %34, %cst_26 {dimension_numbers = #tpu.dot_dimension_numbers<[1], [0], [0], [1], [0, 0, 1, 1], [], []>} : vector<256x8xbf16>, vector<8x128xbf16>, vector<256x128xf32> -> vector<256x128xf32>
    %c0_27 = arith.constant 0 : index
    %c0_28 = arith.constant 0 : index
    %36 = vector.load %arg11[%c0_27, %c0_28] : memref<1x128xf32, #tpu.memory_space<vmem>>, vector<1x128xf32>
    %37 = vector.broadcast %36 : vector<1x128xf32> to vector<256x128xf32>
    %38 = arith.addf %35, %37 : vector<256x128xf32>
    %39 = tpu.iota {dimensions = array<i32: 1>} : vector<256x128xi32>
    %c16_i32 = arith.constant 16 : i32
    %40 = vector.broadcast %c16_i32 : i32 to vector<256x128xi32>
    %41 = arith.cmpi slt, %39, %40 : vector<256x128xi32>
    %cst_29 = arith.constant -1.000000e+30 : f32
    %42 = vector.broadcast %cst_29 : f32 to vector<256x128xf32>
    %43 = arith.select %41, %38, %42 : vector<256x128xi1>, vector<256x128xf32>
    %cst_30 = arith.constant dense<0xFF800000> : vector<256xf32>
    %44 = vector.multi_reduction <maximumf>, %43, %cst_30 [1] : vector<256x128xf32> to vector<256xf32>
    %45 = vector.shape_cast %44 : vector<256xf32> to vector<256x1xf32>
    %46 = vector.broadcast %45 : vector<256x1xf32> to vector<256x128xf32>
    %47 = arith.subf %38, %46 : vector<256x128xf32>
    %48 = math.exp %47 : vector<256x128xf32>
    %cst_31 = arith.constant 0.000000e+00 : f32
    %49 = vector.broadcast %cst_31 : f32 to vector<256x128xf32>
    %50 = arith.select %41, %48, %49 : vector<256x128xi1>, vector<256x128xf32>
    %cst_32 = arith.constant dense<0.000000e+00> : vector<256xf32>
    %51 = vector.multi_reduction <add>, %50, %cst_32 [1] : vector<256x128xf32> to vector<256xf32>
    %52 = vector.shape_cast %51 : vector<256xf32> to vector<256x1xf32>
    %cst_33 = arith.constant 1.000000e+00 : f32
    %53 = vector.broadcast %cst_33 : f32 to vector<256x1xf32>
    %54 = arith.divf %53, %52 : vector<256x1xf32>
    %55 = vector.broadcast %54 : vector<256x1xf32> to vector<256x128xf32>
    %56 = arith.mulf %50, %55 : vector<256x128xf32>
    %c0_34 = arith.constant 0 : index
    %c0_35 = arith.constant 0 : index
    %57 = vector.load %arg12[%c0_34, %c0_35] : memref<256x128xf32, #tpu.memory_space<vmem>>, vector<256x128xf32>
    tpu.vector_store %arg12[%c0_34, %c0_35], %56 {strides = array<i32>} : memref<256x128xf32, #tpu.memory_space<vmem>>, vector<256x128xf32>,
    return
  }
  func.func @transform_0(%arg0: i32) -> (i32, i32) {
    %c0_i32 = arith.constant 0 : i32
    %c0_i32_0 = arith.constant 0 : i32
    return %arg0, %c0_i32 : i32, i32
  }
  func.func @transform_1(%arg0: i32) -> (i32, i32) {
    %c0_i32 = arith.constant 0 : i32
    %c0_i32_0 = arith.constant 0 : i32
    %c0_i32_1 = arith.constant 0 : i32
    return %c0_i32, %c0_i32_0 : i32, i32
  }
  func.func @transform_2(%arg0: i32) -> (i32, i32) {
    %c0_i32 = arith.constant 0 : i32
    %c0_i32_0 = arith.constant 0 : i32
    %c0_i32_1 = arith.constant 0 : i32
    return %c0_i32, %c0_i32_0 : i32, i32
  }
  func.func @transform_3(%arg0: i32) -> (i32, i32) {
    %c0_i32 = arith.constant 0 : i32
    %c0_i32_0 = arith.constant 0 : i32
    %c0_i32_1 = arith.constant 0 : i32
    return %c0_i32, %c0_i32_0 : i32, i32
  }
  func.func @transform_4(%arg0: i32) -> (i32, i32) {
    %c0_i32 = arith.constant 0 : i32
    %c0_i32_0 = arith.constant 0 : i32
    %c0_i32_1 = arith.constant 0 : i32
    return %c0_i32, %c0_i32_0 : i32, i32
  }
  func.func @transform_5(%arg0: i32) -> (i32, i32) {
    %c0_i32 = arith.constant 0 : i32
    %c0_i32_0 = arith.constant 0 : i32
    %c0_i32_1 = arith.constant 0 : i32
    return %c0_i32, %c0_i32_0 : i32, i32
  }
  func.func @transform_6(%arg0: i32) -> (i32, i32) {
    %c0_i32 = arith.constant 0 : i32
    %c0_i32_0 = arith.constant 0 : i32
    %c0_i32_1 = arith.constant 0 : i32
    return %c0_i32, %c0_i32_0 : i32, i32
  }
  func.func @transform_7(%arg0: i32) -> (i32, i32) {
    %c0_i32 = arith.constant 0 : i32
    %c0_i32_0 = arith.constant 0 : i32
    %c0_i32_1 = arith.constant 0 : i32
    return %c0_i32, %c0_i32_0 : i32, i32
  }
  func.func @transform_8(%arg0: i32) -> (i32, i32) {
    %c0_i32 = arith.constant 0 : i32
    %c0_i32_0 = arith.constant 0 : i32
    %c0_i32_1 = arith.constant 0 : i32
    return %c0_i32, %c0_i32_0 : i32, i32
  }
  func.func @transform_9(%arg0: i32) -> (i32, i32) {
    %c0_i32 = arith.constant 0 : i32
    %c0_i32_0 = arith.constant 0 : i32
    %c0_i32_1 = arith.constant 0 : i32
    return %c0_i32, %c0_i32_0 : i32, i32
  }
  func.func @transform_10(%arg0: i32) -> (i32, i32) {
    %c0_i32 = arith.constant 0 : i32
    %c0_i32_0 = arith.constant 0 : i32
    %c0_i32_1 = arith.constant 0 : i32
    return %c0_i32, %c0_i32_0 : i32, i32
  }
  func.func @transform_11(%arg0: i32) -> (i32, i32) {
    %c0_i32 = arith.constant 0 : i32
    %c0_i32_0 = arith.constant 0 : i32
    return %arg0, %c0_i32 : i32, i32
  }
}

</mosaic_0001>

<llo_original>
// kernel: tpu_custom_call.1
$region0: #{tpu_custom_call.1}
  #allocation0 [shape = 'u32[]', space=smem, size = 0x4, offset = 0x4, fixed_abs, tag = 'smem constant byte address 0x4 - core index']
  #allocation1 [shape = 'u32[144,128]{1,0:T(1,128)}', space=vmem, size = 0x12000, scoped, tag = 'internal scratch']
  %s0 = inlined_call_operand.vmem [shape: f32[512,8], index: 0, kind: input, shape index: {}]
  %s1 = inlined_call_operand.vmem [shape: bf16[8,896], index: 1, kind: input, shape index: {}]
  %s2 = inlined_call_operand.vmem [shape: f32[1,896], index: 2, kind: input, shape index: {}]
  %s3 = inlined_call_operand.vmem [shape: bf16[896,128], index: 3, kind: input, shape index: {}]
  %s4 = inlined_call_operand.vmem [shape: f32[1,128], index: 4, kind: input, shape index: {}]
  %s5 = inlined_call_operand.vmem [shape: bf16[128,896], index: 5, kind: input, shape index: {}]
  %s6 = inlined_call_operand.vmem [shape: f32[1,896], index: 6, kind: input, shape index: {}]
  %s7 = inlined_call_operand.vmem [shape: bf16[896,8], index: 7, kind: input, shape index: {}]
  %s8 = inlined_call_operand.vmem [shape: f32[1,8], index: 8, kind: input, shape index: {}]
  %s9 = inlined_call_operand.vmem [shape: bf16[8,128], index: 9, kind: input, shape index: {}]
  %s10 = inlined_call_operand.vmem [shape: f32[1,128], index: 10, kind: input, shape index: {}]
  %s11 = inlined_call_operand.hbm [shape: f32[512,128], index: 11, kind: output, shape index: {}]
  %s12 = sld [smem:[#allocation0]]
  $region77: #{tpu_custom_call.1} parent=0
    _
  %s14 = ssub.s32 1, %s12
  %s15 = scalar_select 0, %s14, %s12
  $region1: #{tpu_custom_call.1} parent=0
    #allocation2 [shape = 'u8[262144]{0}', space=vmem, size = 0x40000, scoped, tag = 'output window, operand 0']
    #allocation3 [shape = 's32[2]{0}', space=sflag, size = 0x8, scoped, tag = 'scoped memory for tpu_custom_call.1']
    %16 = vsyncpa [#allocation3], 0
    %s17 = scalar_lea.sflag [#allocation3], 1
    %18 = vsyncpa %s17, 0
    loop: start=0, step=1, limit=4
    $region2: #{tpu_custom_call.1} parent=1 // loop_pre_header
      _
    $region3: #{tpu_custom_call.1} parent=1 // loop_header
      %s20 = sphi 0, %s24
      %p21 = scmp.ge.s32.totalorder %s20, 4
      %s30 = sphi 0, %s32
      %s33 = sphi 0, %s30
      %s34 = sphi 0, %s33
      %s50 = sphi 0, %s34
      %s54 = sphi 0, %s54
      %s56 = sphi 0, %s54
      %s57 = sphi 0, %s56
      %s71 = sphi 0, %s57
      %s75 = sphi 0, %s75
      %s77 = sphi 0, %s75
      %s78 = sphi 0, %s77
      %s92 = sphi 0, %s78
      %s96 = sphi 0, %s96
      %s98 = sphi 0, %s96
      %s99 = sphi 0, %s98
      %s113 = sphi 0, %s99
      %s117 = sphi 0, %s117
      %s119 = sphi 0, %s117
      %s120 = sphi 0, %s119
      %s134 = sphi 0, %s120
      %s138 = sphi 0, %s138
      %s140 = sphi 0, %s138
      %s141 = sphi 0, %s140
      %s155 = sphi 0, %s141
      %s159 = sphi 0, %s159
      %s161 = sphi 0, %s159
      %s162 = sphi 0, %s161
      %s176 = sphi 0, %s162
      %s180 = sphi 0, %s180
      %s182 = sphi 0, %s180
      %s183 = sphi 0, %s182
      %s197 = sphi 0, %s183
      %s201 = sphi 0, %s201
      %s203 = sphi 0, %s201
      %s204 = sphi 0, %s203
      %s218 = sphi 0, %s204
      %s222 = sphi 0, %s222
      %s224 = sphi 0, %s222
      %s225 = sphi 0, %s224
      %s239 = sphi 0, %s225
      %s243 = sphi 0, %s243
      %s245 = sphi 0, %s243
      %s246 = sphi 0, %s245
      %s260 = sphi 0, %s246
      %s266 = sphi 0, %s268
      %s269 = sphi 0, %s266
      %s270 = sphi 0, %s269
      %s286 = sphi 0, %s270
    $region4: #{tpu_custom_call.1} parent=1 // loop_header_branch
      %23 = sbr.rel (%p21) target = $region8
    $region5: #{tpu_custom_call.1} parent=1 // loop_body
      %s25 = ssub.s32 %s20, 1
      %s26 = ssub.s32 %s20, 2
      %s27 = sadd.s32 %s20, 1
      %s28 = ssub.s32 %s20, %s27
      %p29 = scmp.eq.s32.totalorder %s28, 0
      %s31 = sadd.s32 %s30, 1
      %s32 = scalar_select %p29, %s30, %s31
      %p35 = pneg %p29
      %p36 = scmp.eq.s32.totalorder %s20, 1
      %p37 = por %p35, %p36
      %p38 = scmp.ne.s32.totalorder %s30, %s33
      %p39 = scmp.eq.s32.totalorder %s20, 0
      %p40 = por %p38, %p39
      %p41 = scmp.ne.s32.totalorder %s30, %s33
      %p42 = scmp.eq.s32.totalorder %s25, 1
      %p43 = por %p41, %p42
      %p44 = scmp.ne.s32.totalorder %s33, %s34
      %p45 = scmp.eq.s32.totalorder %s25, 0
      %p46 = por %p44, %p45
      %p47 = scmp.ne.s32.totalorder %s33, %s34
      %p48 = scmp.eq.s32.totalorder %s26, 1
      %p49 = por %p47, %p48
      %p51 = scmp.ne.s32.totalorder %s34, %s50
      %p52 = scmp.eq.s32.totalorder %s26, 0
      %p53 = por %p51, %p52
      %s55 = sadd.s32 %s54, 1
      %p58 = scmp.eq.s32.totalorder %s20, 1
      %p59 = scmp.ne.s32.totalorder %s54, %s56
      %p60 = scmp.eq.s32.totalorder %s20, 0
      %p61 = por %p59, %p60
      %p62 = scmp.ne.s32.totalorder %s54, %s56
      %p63 = scmp.eq.s32.totalorder %s25, 1
      %p64 = por %p62, %p63
      %p65 = scmp.ne.s32.totalorder %s56, %s57
      %p66 = scmp.eq.s32.totalorder %s25, 0
      %p67 = por %p65, %p66
      %p68 = scmp.ne.s32.totalorder %s56, %s57
      %p69 = scmp.eq.s32.totalorder %s26, 1
      %p70 = por %p68, %p69
      %p72 = scmp.ne.s32.totalorder %s57, %s71
      %p73 = scmp.eq.s32.totalorder %s26, 0
      %p74 = por %p72, %p73
      %s76 = sadd.s32 %s75, 1
      %p79 = scmp.eq.s32.totalorder %s20, 1
      %p80 = scmp.ne.s32.totalorder %s75, %s77
      %p81 = scmp.eq.s32.totalorder %s20, 0
      %p82 = por %p80, %p81
      %p83 = scmp.ne.s32.totalorder %s75, %s77
      %p84 = scmp.eq.s32.totalorder %s25, 1
      %p85 = por %p83, %p84
      %p86 = scmp.ne.s32.totalorder %s77, %s78
      %p87 = scmp.eq.s32.totalorder %s25, 0
      %p88 = por %p86, %p87
      %p89 = scmp.ne.s32.totalorder %s77, %s78
      %p90 = scmp.eq.s32.totalorder %s26, 1
      %p91 = por %p89, %p90
      %p93 = scmp.ne.s32.totalorder %s78, %s92
      %p94 = scmp.eq.s32.totalorder %s26, 0
      %p95 = por %p93, %p94
      %s97 = sadd.s32 %s96, 1
      %p100 = scmp.eq.s32.totalorder %s20, 1
      %p101 = scmp.ne.s32.totalorder %s96, %s98
      %p102 = scmp.eq.s32.totalorder %s20, 0
      %p103 = por %p101, %p102
      %p104 = scmp.ne.s32.totalorder %s96, %s98
      %p105 = scmp.eq.s32.totalorder %s25, 1
      %p106 = por %p104, %p105
      %p107 = scmp.ne.s32.totalorder %s98, %s99
      %p108 = scmp.eq.s32.totalorder %s25, 0
      %p109 = por %p107, %p108
      %p110 = scmp.ne.s32.totalorder %s98, %s99
      %p111 = scmp.eq.s32.totalorder %s26, 1
      %p112 = por %p110, %p111
      %p114 = scmp.ne.s32.totalorder %s99, %s113
      %p115 = scmp.eq.s32.totalorder %s26, 0
      %p116 = por %p114, %p115
      %s118 = sadd.s32 %s117, 1
      %p121 = scmp.eq.s32.totalorder %s20, 1
      %p122 = scmp.ne.s32.totalorder %s117, %s119
      %p123 = scmp.eq.s32.totalorder %s20, 0
      %p124 = por %p122, %p123
      %p125 = scmp.ne.s32.totalorder %s117, %s119
      %p126 = scmp.eq.s32.totalorder %s25, 1
      %p127 = por %p125, %p126
      %p128 = scmp.ne.s32.totalorder %s119, %s120
      %p129 = scmp.eq.s32.totalorder %s25, 0
      %p130 = por %p128, %p129
      %p131 = scmp.ne.s32.totalorder %s119, %s120
      %p132 = scmp.eq.s32.totalorder %s26, 1
      %p133 = por %p131, %p132
      %p135 = scmp.ne.s32.totalorder %s120, %s134
      %p136 = scmp.eq.s32.totalorder %s26, 0
      %p137 = por %p135, %p136
      %s139 = sadd.s32 %s138, 1
      %p142 = scmp.eq.s32.totalorder %s20, 1
      %p143 = scmp.ne.s32.totalorder %s138, %s140
      %p144 = scmp.eq.s32.totalorder %s20, 0
      %p145 = por %p143, %p144
      %p146 = scmp.ne.s32.totalorder %s138, %s140
      %p147 = scmp.eq.s32.totalorder %s25, 1
      %p148 = por %p146, %p147
      %p149 = scmp.ne.s32.totalorder %s140, %s141
      %p150 = scmp.eq.s32.totalorder %s25, 0
      %p151 = por %p149, %p150
      %p152 = scmp.ne.s32.totalorder %s140, %s141
      %p153 = scmp.eq.s32.totalorder %s26, 1
      %p154 = por %p152, %p153
      %p156 = scmp.ne.s32.totalorder %s141, %s155
      %p157 = scmp.eq.s32.totalorder %s26, 0
      %p158 = por %p156, %p157
      %s160 = sadd.s32 %s159, 1
      %p163 = scmp.eq.s32.totalorder %s20, 1
      %p164 = scmp.ne.s32.totalorder %s159, %s161
      %p165 = scmp.eq.s32.totalorder %s20, 0
      %p166 = por %p164, %p165
      %p167 = scmp.ne.s32.totalorder %s159, %s161
      %p168 = scmp.eq.s32.totalorder %s25, 1
      %p169 = por %p167, %p168
      %p170 = scmp.ne.s32.totalorder %s161, %s162
      %p171 = scmp.eq.s32.totalorder %s25, 0
      %p172 = por %p170, %p171
      %p173 = scmp.ne.s32.totalorder %s161, %s162
      %p174 = scmp.eq.s32.totalorder %s26, 1
      %p175 = por %p173, %p174
      %p177 = scmp.ne.s32.totalorder %s162, %s176
      %p178 = scmp.eq.s32.totalorder %s26, 0
      %p179 = por %p177, %p178
      %s181 = sadd.s32 %s180, 1
      %p184 = scmp.eq.s32.totalorder %s20, 1
      %p185 = scmp.ne.s32.totalorder %s180, %s182
      %p186 = scmp.eq.s32.totalorder %s20, 0
      %p187 = por %p185, %p186
      %p188 = scmp.ne.s32.totalorder %s180, %s182
      %p189 = scmp.eq.s32.totalorder %s25, 1
      %p190 = por %p188, %p189
      %p191 = scmp.ne.s32.totalorder %s182, %s183
      %p192 = scmp.eq.s32.totalorder %s25, 0
      %p193 = por %p191, %p192
      %p194 = scmp.ne.s32.totalorder %s182, %s183
      %p195 = scmp.eq.s32.totalorder %s26, 1
      %p196 = por %p194, %p195
      %p198 = scmp.ne.s32.totalorder %s183, %s197
      %p199 = scmp.eq.s32.totalorder %s26, 0
      %p200 = por %p198, %p199
      %s202 = sadd.s32 %s201, 1
      %p205 = scmp.eq.s32.totalorder %s20, 1
      %p206 = scmp.ne.s32.totalorder %s201, %s203
      %p207 = scmp.eq.s32.totalorder %s20, 0
      %p208 = por %p206, %p207
      %p209 = scmp.ne.s32.totalorder %s201, %s203
      %p210 = scmp.eq.s32.totalorder %s25, 1
      %p211 = por %p209, %p210
      %p212 = scmp.ne.s32.totalorder %s203, %s204
      %p213 = scmp.eq.s32.totalorder %s25, 0
      %p214 = por %p212, %p213
      %p215 = scmp.ne.s32.totalorder %s203, %s204
      %p216 = scmp.eq.s32.totalorder %s26, 1
      %p217 = por %p215, %p216
      %p219 = scmp.ne.s32.totalorder %s204, %s218
      %p220 = scmp.eq.s32.totalorder %s26, 0
      %p221 = por %p219, %p220
      %s223 = sadd.s32 %s222, 1
      %p226 = scmp.eq.s32.totalorder %s20, 1
      %p227 = scmp.ne.s32.totalorder %s222, %s224
      %p228 = scmp.eq.s32.totalorder %s20, 0
      %p229 = por %p227, %p228
      %p230 = scmp.ne.s32.totalorder %s222, %s224
      %p231 = scmp.eq.s32.totalorder %s25, 1
      %p232 = por %p230, %p231
      %p233 = scmp.ne.s32.totalorder %s224, %s225
      %p234 = scmp.eq.s32.totalorder %s25, 0
      %p235 = por %p233, %p234
      %p236 = scmp.ne.s32.totalorder %s224, %s225
      %p237 = scmp.eq.s32.totalorder %s26, 1
      %p238 = por %p236, %p237
      %p240 = scmp.ne.s32.totalorder %s225, %s239
      %p241 = scmp.eq.s32.totalorder %s26, 0
      %p242 = por %p240, %p241
      %s244 = sadd.s32 %s243, 1
      %p247 = scmp.eq.s32.totalorder %s20, 1
      %p248 = scmp.ne.s32.totalorder %s243, %s245
      %p249 = scmp.eq.s32.totalorder %s20, 0
      %p250 = por %p248, %p249
      %p251 = scmp.ne.s32.totalorder %s243, %s245
      %p252 = scmp.eq.s32.totalorder %s25, 1
      %p253 = por %p251, %p252
      %p254 = scmp.ne.s32.totalorder %s245, %s246
      %p255 = scmp.eq.s32.totalorder %s25, 0
      %p256 = por %p254, %p255
      %p257 = scmp.ne.s32.totalorder %s245, %s246
      %p258 = scmp.eq.s32.totalorder %s26, 1
      %p259 = por %p257, %p258
      %p261 = scmp.ne.s32.totalorder %s246, %s260
      %p262 = scmp.eq.s32.totalorder %s26, 0
      %p263 = por %p261, %p262
      %s264 = ssub.s32 %s20, %s27
      %p265 = scmp.eq.s32.totalorder %s264, 0
      %s267 = sadd.s32 %s266, 1
      %s268 = scalar_select %p265, %s266, %s267
      %p271 = pneg %p265
      %p272 = scmp.eq.s32.totalorder %s20, 1
      %p273 = por %p271, %p272
      %p274 = scmp.ne.s32.totalorder %s266, %s269
      %p275 = scmp.eq.s32.totalorder %s20, 0
      %p276 = por %p274, %p275
      %p277 = scmp.ne.s32.totalorder %s266, %s269
      %p278 = scmp.eq.s32.totalorder %s25, 1
      %p279 = por %p277, %p278
      %p280 = scmp.ne.s32.totalorder %s269, %s270
      %p281 = scmp.eq.s32.totalorder %s25, 0
      %p282 = por %p280, %p281
      %p283 = scmp.ne.s32.totalorder %s269, %s270
      %p284 = scmp.eq.s32.totalorder %s26, 1
      %p285 = por %p283, %p284
      %p287 = scmp.ne.s32.totalorder %s270, %s286
      %p288 = scmp.eq.s32.totalorder %s26, 0
      %p289 = por %p287, %p288
      %p290 = scmp.le.s32.totalorder 1, %s20
      %p291 = scmp.lt.s32.totalorder %s20, 3
      %p292 = pnand %p290, %p291
      %p293 = pneg %p292
      // Predicated region
      $region9: #{tpu_custom_call.1} parent=5 // pred_check
        _
      $region10: #{tpu_custom_call.1} parent=5 // pred_check_branch
        %295 = sbr.rel (%p292) target = $region12
      $region11: #{tpu_custom_call.1} parent=5 // pred_region
        %s296 = ssub.s32 %s20, 1
        // Predicated region
        $region13: #{tpu_custom_call.1} parent=11 // pred_check
          %p297 = pneg %p67
        $region14: #{tpu_custom_call.1} parent=11 // pred_check_branch
          %299 = sbr.rel (%p297) target = $region16
        $region15: #{tpu_custom_call.1} parent=11 // pred_region
          _
        $region16: #{tpu_custom_call.1} parent=11 // pred_fallthru
          _
        // Predicated region
        $region17: #{tpu_custom_call.1} parent=11 // pred_check
          %p300 = pneg %p88
        $region18: #{tpu_custom_call.1} parent=11 // pred_check_branch
          %302 = sbr.rel (%p300) target = $region20
        $region19: #{tpu_custom_call.1} parent=11 // pred_region
          _
        $region20: #{tpu_custom_call.1} parent=11 // pred_fallthru
          _
        // Predicated region
        $region21: #{tpu_custom_call.1} parent=11 // pred_check
          %p303 = pneg %p109
        $region22: #{tpu_custom_call.1} parent=11 // pred_check_branch
          %305 = sbr.rel (%p303) target = $region24
        $region23: #{tpu_custom_call.1} parent=11 // pred_region
          _
        $region24: #{tpu_custom_call.1} parent=11 // pred_fallthru
          _
        // Predicated region
        $region25: #{tpu_custom_call.1} parent=11 // pred_check
          %p306 = pneg %p130
        $region26: #{tpu_custom_call.1} parent=11 // pred_check_branch
          %308 = sbr.rel (%p306) target = $region28
        $region27: #{tpu_custom_call.1} parent=11 // pred_region
          _
        $region28: #{tpu_custom_call.1} parent=11 // pred_fallthru
          _
        // Predicated region
        $region29: #{tpu_custom_call.1} parent=11 // pred_check
          %p309 = pneg %p151
        $region30: #{tpu_custom_call.1} parent=11 // pred_check_branch
          %311 = sbr.rel (%p309) target = $region32
        $region31: #{tpu_custom_call.1} parent=11 // pred_region
          _
        $region32: #{tpu_custom_call.1} parent=11 // pred_fallthru
          _
        // Predicated region
        $region33: #{tpu_custom_call.1} parent=11 // pred_check
          %p312 = pneg %p172
        $region34: #{tpu_custom_call.1} parent=11 // pred_check_branch
          %314 = sbr.rel (%p312) target = $region36
        $region35: #{tpu_custom_call.1} parent=11 // pred_region
          _
        $region36: #{tpu_custom_call.1} parent=11 // pred_fallthru
          _
        // Predicated region
        $region37: #{tpu_custom_call.1} parent=11 // pred_check
          %p315 = pneg %p193
        $region38: #{tpu_custom_call.1} parent=11 // pred_check_branch
          %317 = sbr.rel (%p315) target = $region40
        $region39: #{tpu_custom_call.1} parent=11 // pred_region
          _
        $region40: #{tpu_custom_call.1} parent=11 // pred_fallthru
          _
        // Predicated region
        $region41: #{tpu_custom_call.1} parent=11 // pred_check
          %p318 = pneg %p214
        $region42: #{tpu_custom_call.1} parent=11 // pred_check_branch
          %320 = sbr.rel (%p318) target = $region44
        $region43: #{tpu_custom_call.1} parent=11 // pred_region
          _
        $region44: #{tpu_custom_call.1} parent=11 // pred_fallthru
          _
        // Predicated region
        $region45: #{tpu_custom_call.1} parent=11 // pred_check
          %p321 = pneg %p235
        $region46: #{tpu_custom_call.1} parent=11 // pred_check_branch
          %323 = sbr.rel (%p321) target = $region48
        $region47: #{tpu_custom_call.1} parent=11 // pred_region
          _
        $region48: #{tpu_custom_call.1} parent=11 // pred_fallthru
          _
        // Predicated region
        $region49: #{tpu_custom_call.1} parent=11 // pred_check
          %p324 = pneg %p256
        $region50: #{tpu_custom_call.1} parent=11 // pred_check_branch
          %326 = sbr.rel (%p324) target = $region52
        $region51: #{tpu_custom_call.1} parent=11 // pred_region
          _
        $region52: #{tpu_custom_call.1} parent=11 // pred_fallthru
          _
      $region12: #{tpu_custom_call.1} parent=5 // pred_fallthru
        _
      %p327 = scmp.lt.s32.totalorder %s20, 2
      // Predicated region
      $region53: #{tpu_custom_call.1} parent=5 // pred_check
        %p328 = pneg %p327
      $region54: #{tpu_custom_call.1} parent=5 // pred_check_branch
        %330 = sbr.rel (%p328) target = $region56
      $region55: #{tpu_custom_call.1} parent=5 // pred_region
        // Predicated region
        $region57: #{tpu_custom_call.1} parent=55 // pred_check
          %p331 = pneg %p40
        $region58: #{tpu_custom_call.1} parent=55 // pred_check_branch
          %333 = sbr.rel (%p331) target = $region60
        $region59: #{tpu_custom_call.1} parent=55 // pred_region
          %s334 = smul.u32 32, %s20
          %p335 = scmp.lt.s32.totalorder %s334, 63
          %s336 = scalar_select %p335, %s334, 63
          %s337 = smul.addr %s336, 8
          %s338 = scalar_lea.vmem %s0, %s337
          %s339 = smul.u32 32, %s20
        $region60: #{tpu_custom_call.1} parent=55 // pred_fallthru
          _
      $region56: #{tpu_custom_call.1} parent=5 // pred_fallthru
        _
      %p340 = scmp.le.s32.totalorder 1, %s20
      %p341 = scmp.lt.s32.totalorder %s20, 3
      %p342 = pnand %p340, %p341
      %p343 = pneg %p342
      // Predicated region
      $region61: #{tpu_custom_call.1} parent=5 // pred_check
        _
      $region62: #{tpu_custom_call.1} parent=5 // pred_check_branch
        %345 = sbr.rel (%p342) target = $region64
      $region63: #{tpu_custom_call.1} parent=5 // pred_region
        %s346 = ssub.s32 %s20, 1
        %s347 = smul.u32 32, %s25
        %p348 = scmp.lt.s32.totalorder %s347, 63
        %s349 = scalar_select %p348, %s347, 63
        %s350 = smul.addr %s349, 8
        %s351 = scalar_lea.vmem %s0, %s350
        %p352 = pneg %p46
        %p353 = pneg %p43
        %p354 = pneg %p67
        %p355 = pneg %p64
        %p356 = pneg %p88
        %p357 = pneg %p85
        %p358 = pneg %p109
        %p359 = pneg %p106
        %p360 = pneg %p130
        %p361 = pneg %p127
        %p362 = pneg %p151
        %p363 = pneg %p148
        %p364 = pneg %p172
        %p365 = pneg %p169
        %p366 = pneg %p193
        %p367 = pneg %p190
        %p368 = pneg %p214
        %p369 = pneg %p211
        %p370 = pneg %p235
        %p371 = pneg %p232
        %p372 = pneg %p256
        %p373 = pneg %p253
        %p374 = pneg %p282
        %p375 = pneg %p279
        %s376 = sand.u32 %s269, 1
        %s377 = scalar_lea.sflag [#allocation3], %s376
        %s378 = sand.u32 %s269, 1
        %s379 = smul.addr %s378, 256
        %s380 = scalar_lea.vmem [#allocation2], %s379
        %s381 = smul.u32 32, %s25
        %p382 = scmp.lt.s32.totalorder %s381, 63
        %s383 = scalar_select %p382, %s381, 63
        %s384 = smul.addr %s383, 8
        %s385 = scalar_lea.vmem %s0, %s384
        %s386 = smul.u32 32, %s25
        %s387 = smul.u32 32, %s25
        %v389 = vld [vmem:[%s385] sm:$0xff]
        %v390 = vld [vmem:[%s385 + $0x8] sm:$0xff]
        %v391 = vld [vmem:[%s385 + $0x10] sm:$0xff]
        %v392 = vld [vmem:[%s385 + $0x18] sm:$0xff]
        %v393 = vld [vmem:[%s385 + $0x20] sm:$0xff]
        %v394 = vld [vmem:[%s385 + $0x28] sm:$0xff]
        %v395 = vld [vmem:[%s385 + $0x30] sm:$0xff]
        %v396 = vld [vmem:[%s385 + $0x38] sm:$0xff]
        %v397 = vld [vmem:[%s385 + $0x40] sm:$0xff]
        %v398 = vld [vmem:[%s385 + $0x48] sm:$0xff]
        %v399 = vld [vmem:[%s385 + $0x50] sm:$0xff]
        %v400 = vld [vmem:[%s385 + $0x58] sm:$0xff]
        %v401 = vld [vmem:[%s385 + $0x60] sm:$0xff]
        %v402 = vld [vmem:[%s385 + $0x68] sm:$0xff]
        %v403 = vld [vmem:[%s385 + $0x70] sm:$0xff]
        %v404 = vld [vmem:[%s385 + $0x78] sm:$0xff]
        %v405 = vld [vmem:[%s385 + $0x80] sm:$0xff]
        %v406 = vld [vmem:[%s385 + $0x88] sm:$0xff]
        %v407 = vld [vmem:[%s385 + $0x90] sm:$0xff]
        %v408 = vld [vmem:[%s385 + $0x98] sm:$0xff]
        %v409 = vld [vmem:[%s385 + $0xa0] sm:$0xff]
        %v410 = vld [vmem:[%s385 + $0xa8] sm:$0xff]
        %v411 = vld [vmem:[%s385 + $0xb0] sm:$0xff]
        %v412 = vld [vmem:[%s385 + $0xb8] sm:$0xff]
        %v413 = vld [vmem:[%s385 + $0xc0] sm:$0xff]
        %v414 = vld [vmem:[%s385 + $0xc8] sm:$0xff]
        %v415 = vld [vmem:[%s385 + $0xd0] sm:$0xff]
        %v416 = vld [vmem:[%s385 + $0xd8] sm:$0xff]
        %v417 = vld [vmem:[%s385 + $0xe0] sm:$0xff]
        %v418 = vld [vmem:[%s385 + $0xe8] sm:$0xff]
        %v419 = vld [vmem:[%s385 + $0xf0] sm:$0xff]
        %v420 = vld [vmem:[%s385 + $0xf8] sm:$0xff]
        %v421 = vpack.c.bf16 %v390, %v389
        %v422 = vpack.c.bf16 %v392, %v391
        %v423 = vpack.c.bf16 %v394, %v393
        %v424 = vpack.c.bf16 %v396, %v395
        %v425 = vpack.c.bf16 %v398, %v397
        %v426 = vpack.c.bf16 %v400, %v399
        %v427 = vpack.c.bf16 %v402, %v401
        %v428 = vpack.c.bf16 %v404, %v403
        %v429 = vpack.c.bf16 %v406, %v405
        %v430 = vpack.c.bf16 %v408, %v407
        %v431 = vpack.c.bf16 %v410, %v409
        %v432 = vpack.c.bf16 %v412, %v411
        %v433 = vpack.c.bf16 %v414, %v413
        %v434 = vpack.c.bf16 %v416, %v415
        %v435 = vpack.c.bf16 %v418, %v417
        %v436 = vpack.c.bf16 %v420, %v419
        %v437 = vld [vmem:[%s1] sm:$0xff]
        %v438 = vld [vmem:[%s1 + $0x8] sm:$0xff]
        %v439 = vld [vmem:[%s1 + $0x10] sm:$0xff]
        %v440 = vld [vmem:[%s1 + $0x18] sm:$0xf]
        %v441 = vld [vmem:[%s2] sm:$0xff]
        %v443 = vlaneseq
        %v444 = vshrl.u32 %v443, 7
        %v445 = vsub.s32 0, %v444
        %v446 = vrot.slane %v441, %v445
        %v447 = vlaneseq
        %v448 = vshrl.u32 %v447, 7
        %v449 = vsub.s32 1, %v448
        %v450 = vrot.slane %v441, %v449
        %v451 = vlaneseq
        %v452 = vshrl.u32 %v451, 7
        %v453 = vsub.s32 2, %v452
        %v454 = vrot.slane %v441, %v453
        %v455 = vlaneseq
        %v456 = vshrl.u32 %v455, 7
        %v457 = vsub.s32 3, %v456
        %v458 = vrot.slane %v441, %v457
        %v459 = vlaneseq
        %v460 = vshrl.u32 %v459, 7
        %v461 = vsub.s32 4, %v460
        %v462 = vrot.slane %v441, %v461
        %v463 = vlaneseq
        %v464 = vshrl.u32 %v463, 7
        %v465 = vsub.s32 5, %v464
        %v466 = vrot.slane %v441, %v465
        %v467 = vlaneseq
        %v468 = vshrl.u32 %v467, 7
        %v469 = vsub.s32 6, %v468
        %v470 = vrot.slane %v441, %v469
        %v482 = vunpack.c.l.b16 %v437
        %v483 = vunpack.c.h.b16 %v437
        %v484 = vunpack.c.l.b16 %v438
        %v485 = vunpack.c.h.b16 %v438
        %v486 = vunpack.c.l.b16 %v439
        %v487 = vunpack.c.h.b16 %v439
        %v488 = vunpack.c.l.b16 %v440
        %v489 = vpack.c.b16 %v482, %v482
        %v490 = vpack.c.b16 %v483, %v483
        %v491 = vpack.c.b16 %v484, %v484
        %v492 = vpack.c.b16 %v485, %v485
        %v493 = vpack.c.b16 %v486, %v486
        %v494 = vpack.c.b16 %v487, %v487
        %v495 = vpack.c.b16 %v488, %v488
        %vm496 = vcmask 64512
        %v498 = vsel %vm496, %v421, 0
        %v501 = vsel %vm496, %v422, 0
        %v504 = vsel %vm496, %v423, 0
        %v507 = vsel %vm496, %v424, 0
        %v510 = vsel %vm496, %v425, 0
        %v513 = vsel %vm496, %v426, 0
        %v516 = vsel %vm496, %v427, 0
        %v519 = vsel %vm496, %v428, 0
        %v522 = vsel %vm496, %v429, 0
        %v525 = vsel %vm496, %v430, 0
        %v528 = vsel %vm496, %v431, 0
        %v531 = vsel %vm496, %v432, 0
        %v534 = vsel %vm496, %v433, 0
        %v537 = vsel %vm496, %v434, 0
        %v540 = vsel %vm496, %v435, 0
        %v543 = vsel %vm496, %v436, 0
        %vm545 = vcmask 1043456
        %v547 = vsel %vm545, %v489, 0
        %v550 = vsel %vm545, %v490, 0
        %v553 = vsel %vm545, %v491, 0
        %v556 = vsel %vm545, %v492, 0
        %v559 = vsel %vm545, %v493, 0
        %v562 = vsel %vm545, %v494, 0
        %v565 = vsel %vm545, %v495, 0
        %567 = vmatprep.subr.bf16.mxu0 %v550
        %568 = vmatpush1.bf16.msra.mxu0 %v547
        %569 = vmatprep.subr.bf16.mxu0 0
        %570 = vmatpush1.bf16.msra.mxu0 0
        %571 = vmatprep.subr.bf16.mxu0 0
        %572 = vmatpush1.bf16.msra.mxu0 0
        %573 = vmatprep.subr.bf16.mxu0 0
        %574 = vmatpush1.bf16.msra.mxu0 0
        %575 = vmatprep.subr.bf16.mxu0 0
        %576 = vmatpush1.bf16.msra.mxu0 0
        %577 = vmatprep.subr.bf16.mxu0 0
        %578 = vmatpush1.bf16.msra.mxu0 0
        %579 = vmatprep.subr.bf16.mxu0 0
        %580 = vmatpush1.bf16.msra.mxu0 0
        %581 = vmatprep.subr.bf16.mxu0 0
        %582 = vmatpush1.bf16.msra.mxu0 0
        %583 = vmatprep.subr.bf16.mxu0 0
        %584 = vmatpush1.bf16.msra.mxu0 0
        %585 = vmatprep.subr.bf16.mxu0 0
        %586 = vmatpush1.bf16.msra.mxu0 0
        %587 = vmatprep.subr.bf16.mxu0 0
        %588 = vmatpush1.bf16.msra.mxu0 0
        %589 = vmatprep.subr.bf16.mxu0 0
        %590 = vmatpush1.bf16.msra.mxu0 0
        %591 = vmatprep.subr.bf16.mxu0 0
        %592 = vmatpush1.bf16.msra.mxu0 0
        %593 = vmatprep.subr.bf16.mxu0 0
        %594 = vmatpush1.bf16.msra.mxu0 0
        %595 = vmatprep.subr.bf16.mxu0 0
        %596 = vmatpush1.bf16.msra.mxu0 0
        %597 = vmatprep.subr.bf16.mxu0 0
        %598 = vmatpush1.bf16.msra.mxu0 0
        %599 = vmatprep.mubr.bf16.mxu0 0
        %600 = vmatmul.mubr.bf16.gmra.mrb[0].mxu0 %v498
        %v601 = vpop.f32.mrb[0].mxu0
        %v602 = vadd.f32 %v446, %v601
        %v603 = vpop.f32.mrb[0].mxu0
        %v604 = vadd.f32 %v450, %v603
        %v605 = vpop.f32.mrb[0].mxu0
        %v606 = vadd.f32 %v446, %v605
        %v607 = vpop.f32.mrb[0].mxu0
        %v608 = vadd.f32 %v450, %v607
        %609 = vmatprep.mubr.bf16.mxu0 0
        %610 = vmatmul.mubr.bf16.gmra.mrb[0].mxu0 %v501
        %v611 = vpop.f32.mrb[0].mxu0
        %v612 = vadd.f32 %v446, %v611
        %v613 = vpop.f32.mrb[0].mxu0
        %v614 = vadd.f32 %v450, %v613
        %v615 = vpop.f32.mrb[0].mxu0
        %v616 = vadd.f32 %v446, %v615
        %v617 = vpop.f32.mrb[0].mxu0
        %v618 = vadd.f32 %v450, %v617
        %619 = vmatprep.mubr.bf16.mxu0 0
        %620 = vmatmul.mubr.bf16.gmra.mrb[0].mxu0 %v504
        %v621 = vpop.f32.mrb[0].mxu0
        %v622 = vadd.f32 %v446, %v621
        %v623 = vpop.f32.mrb[0].mxu0
        %v624 = vadd.f32 %v450, %v623
        %v625 = vpop.f32.mrb[0].mxu0
        %v626 = vadd.f32 %v446, %v625
        %v627 = vpop.f32.mrb[0].mxu0
        %v628 = vadd.f32 %v450, %v627
        %629 = vmatprep.mubr.bf16.mxu0 0
        %630 = vmatmul.mubr.bf16.gmra.mrb[0].mxu0 %v507
        %v631 = vpop.f32.mrb[0].mxu0
        %v632 = vadd.f32 %v446, %v631
        %v633 = vpop.f32.mrb[0].mxu0
        %v634 = vadd.f32 %v450, %v633
        %v635 = vpop.f32.mrb[0].mxu0
        %v636 = vadd.f32 %v446, %v635
        %v637 = vpop.f32.mrb[0].mxu0
        %v638 = vadd.f32 %v450, %v637
        %639 = vmatprep.mubr.bf16.mxu0 0
        %640 = vmatmul.mubr.bf16.gmra.mrb[0].mxu0 %v510
        %v641 = vpop.f32.mrb[0].mxu0
        %v642 = vadd.f32 %v446, %v641
        %v643 = vpop.f32.mrb[0].mxu0
        %v644 = vadd.f32 %v450, %v643
        %v645 = vpop.f32.mrb[0].mxu0
        %v646 = vadd.f32 %v446, %v645
        %v647 = vpop.f32.mrb[0].mxu0
        %v648 = vadd.f32 %v450, %v647
        %649 = vmatprep.mubr.bf16.mxu0 0
        %650 = vmatmul.mubr.bf16.gmra.mrb[0].mxu0 %v513
        %v651 = vpop.f32.mrb[0].mxu0
        %v652 = vadd.f32 %v446, %v651
        %v653 = vpop.f32.mrb[0].mxu0
        %v654 = vadd.f32 %v450, %v653
        %v655 = vpop.f32.mrb[0].mxu0
        %v656 = vadd.f32 %v446, %v655
        %v657 = vpop.f32.mrb[0].mxu0
        %v658 = vadd.f32 %v450, %v657
        %659 = vmatprep.mubr.bf16.mxu0 0
        %660 = vmatmul.mubr.bf16.gmra.mrb[0].mxu0 %v516
        %v661 = vpop.f32.mrb[0].mxu0
        %v662 = vadd.f32 %v446, %v661
        %v663 = vpop.f32.mrb[0].mxu0
        %v664 = vadd.f32 %v450, %v663
        %v665 = vpop.f32.mrb[0].mxu0
        %v666 = vadd.f32 %v446, %v665
        %v667 = vpop.f32.mrb[0].mxu0
        %v668 = vadd.f32 %v450, %v667
        %669 = vmatprep.mubr.bf16.mxu0 0
        %670 = vmatmul.mubr.bf16.gmra.mrb[0].mxu0 %v519
        %v671 = vpop.f32.mrb[0].mxu0
        %v672 = vadd.f32 %v446, %v671
        %v673 = vpop.f32.mrb[0].mxu0
        %v674 = vadd.f32 %v450, %v673
        %v675 = vpop.f32.mrb[0].mxu0
        %v676 = vadd.f32 %v446, %v675
        %v677 = vpop.f32.mrb[0].mxu0
        %v678 = vadd.f32 %v450, %v677
        %679 = vmatprep.mubr.bf16.mxu0 0
        %680 = vmatmul.mubr.bf16.gmra.mrb[0].mxu0 %v522
        %v681 = vpop.f32.mrb[0].mxu0
        %v682 = vadd.f32 %v446, %v681
        %v683 = vpop.f32.mrb[0].mxu0
        %v684 = vadd.f32 %v450, %v683
        %v685 = vpop.f32.mrb[0].mxu0
        %v686 = vadd.f32 %v446, %v685
        %v687 = vpop.f32.mrb[0].mxu0
        %v688 = vadd.f32 %v450, %v687
        %689 = vmatprep.mubr.bf16.mxu0 0
        %690 = vmatmul.mubr.bf16.gmra.mrb[0].mxu0 %v525
        %v691 = vpop.f32.mrb[0].mxu0
        %v692 = vadd.f32 %v446, %v691
        %v693 = vpop.f32.mrb[0].mxu0
        %v694 = vadd.f32 %v450, %v693
        %v695 = vpop.f32.mrb[0].mxu0
        %v696 = vadd.f32 %v446, %v695
        %v697 = vpop.f32.mrb[0].mxu0
        %v698 = vadd.f32 %v450, %v697
        %699 = vmatprep.mubr.bf16.mxu0 0
        %700 = vmatmul.mubr.bf16.gmra.mrb[0].mxu0 %v528
        %v701 = vpop.f32.mrb[0].mxu0
        %v702 = vadd.f32 %v446, %v701
        %v703 = vpop.f32.mrb[0].mxu0
        %v704 = vadd.f32 %v450, %v703
        %v705 = vpop.f32.mrb[0].mxu0
        %v706 = vadd.f32 %v446, %v705
        %v707 = vpop.f32.mrb[0].mxu0
        %v708 = vadd.f32 %v450, %v707
        %709 = vmatprep.mubr.bf16.mxu0 0
        %710 = vmatmul.mubr.bf16.gmra.mrb[0].mxu0 %v531
        %v711 = vpop.f32.mrb[0].mxu0
        %v712 = vadd.f32 %v446, %v711
        %v713 = vpop.f32.mrb[0].mxu0
        %v714 = vadd.f32 %v450, %v713
        %v715 = vpop.f32.mrb[0].mxu0
        %v716 = vadd.f32 %v446, %v715
        %v717 = vpop.f32.mrb[0].mxu0
        %v718 = vadd.f32 %v450, %v717
        %719 = vmatprep.mubr.bf16.mxu0 0
        %720 = vmatmul.mubr.bf16.gmra.mrb[0].mxu0 %v534
        %v721 = vpop.f32.mrb[0].mxu0
        %v722 = vadd.f32 %v446, %v721
        %v723 = vpop.f32.mrb[0].mxu0
        %v724 = vadd.f32 %v450, %v723
        %v725 = vpop.f32.mrb[0].mxu0
        %v726 = vadd.f32 %v446, %v725
        %v727 = vpop.f32.mrb[0].mxu0
        %v728 = vadd.f32 %v450, %v727
        %729 = vmatprep.mubr.bf16.mxu0 0
        %730 = vmatmul.mubr.bf16.gmra.mrb[0].mxu0 %v537
        %v731 = vpop.f32.mrb[0].mxu0
        %v732 = vadd.f32 %v446, %v731
        %v733 = vpop.f32.mrb[0].mxu0
        %v734 = vadd.f32 %v450, %v733
        %v735 = vpop.f32.mrb[0].mxu0
        %v736 = vadd.f32 %v446, %v735
        %v737 = vpop.f32.mrb[0].mxu0
        %v738 = vadd.f32 %v450, %v737
        %739 = vmatprep.mubr.bf16.mxu0 0
        %740 = vmatmul.mubr.bf16.gmra.mrb[0].mxu0 %v540
        %v741 = vpop.f32.mrb[0].mxu0
        %v742 = vadd.f32 %v446, %v741
        %v743 = vpop.f32.mrb[0].mxu0
        %v744 = vadd.f32 %v450, %v743
        %v745 = vpop.f32.mrb[0].mxu0
        %v746 = vadd.f32 %v446, %v745
        %v747 = vpop.f32.mrb[0].mxu0
        %v748 = vadd.f32 %v450, %v747
        %749 = vmatprep.mubr.bf16.mxu0 0
        %750 = vmatmul.mubr.bf16.gmra.mrb[0].mxu0 %v543
        %v751 = vpop.f32.mrb[0].mxu0
        %v752 = vadd.f32 %v446, %v751
        %v753 = vpop.f32.mrb[0].mxu0
        %v754 = vadd.f32 %v450, %v753
        %v755 = vpop.f32.mrb[0].mxu0
        %v756 = vadd.f32 %v446, %v755
        %v757 = vpop.f32.mrb[0].mxu0
        %v758 = vadd.f32 %v450, %v757
        %759 = vdwg.mxu0
        %760 = vmatprep.subr.bf16.mxu0 %v556
        %761 = vmatpush1.bf16.msra.mxu0 %v553
        %762 = vmatprep.subr.bf16.mxu0 0
        %763 = vmatpush1.bf16.msra.mxu0 0
        %764 = vmatprep.subr.bf16.mxu0 0
        %765 = vmatpush1.bf16.msra.mxu0 0
        %766 = vmatprep.subr.bf16.mxu0 0
        %767 = vmatpush1.bf16.msra.mxu0 0
        %768 = vmatprep.subr.bf16.mxu0 0
        %769 = vmatpush1.bf16.msra.mxu0 0
        %770 = vmatprep.subr.bf16.mxu0 0
        %771 = vmatpush1.bf16.msra.mxu0 0
        %772 = vmatprep.subr.bf16.mxu0 0
        %773 = vmatpush1.bf16.msra.mxu0 0
        %774 = vmatprep.subr.bf16.mxu0 0
        %775 = vmatpush1.bf16.msra.mxu0 0
        %776 = vmatprep.subr.bf16.mxu0 0
        %777 = vmatpush1.bf16.msra.mxu0 0
        %778 = vmatprep.subr.bf16.mxu0 0
        %779 = vmatpush1.bf16.msra.mxu0 0
        %780 = vmatprep.subr.bf16.mxu0 0
        %781 = vmatpush1.bf16.msra.mxu0 0
        %782 = vmatprep.subr.bf16.mxu0 0
        %783 = vmatpush1.bf16.msra.mxu0 0
        %784 = vmatprep.subr.bf16.mxu0 0
        %785 = vmatpush1.bf16.msra.mxu0 0
        %786 = vmatprep.subr.bf16.mxu0 0
        %787 = vmatpush1.bf16.msra.mxu0 0
        %788 = vmatprep.subr.bf16.mxu0 0
        %789 = vmatpush1.bf16.msra.mxu0 0
        %790 = vmatprep.subr.bf16.mxu0 0
        %791 = vmatpush1.bf16.msra.mxu0 0
        %792 = vmatprep.mubr.bf16.mxu0 0
        %793 = vmatmul.mubr.bf16.gmra.mrb[0].mxu0 %v498
        %v794 = vpop.f32.mrb[0].mxu0
        %v795 = vadd.f32 %v454, %v794
        %v796 = vpop.f32.mrb[0].mxu0
        %v797 = vadd.f32 %v458, %v796
        %v798 = vpop.f32.mrb[0].mxu0
        %v799 = vadd.f32 %v454, %v798
        %v800 = vpop.f32.mrb[0].mxu0
        %v801 = vadd.f32 %v458, %v800
        %802 = vmatprep.mubr.bf16.mxu0 0
        %803 = vmatmul.mubr.bf16.gmra.mrb[0].mxu0 %v501
        %v804 = vpop.f32.mrb[0].mxu0
        %v805 = vadd.f32 %v454, %v804
        %v806 = vpop.f32.mrb[0].mxu0
        %v807 = vadd.f32 %v458, %v806
        %v808 = vpop.f32.mrb[0].mxu0
        %v809 = vadd.f32 %v454, %v808
        %v810 = vpop.f32.mrb[0].mxu0
        %v811 = vadd.f32 %v458, %v810
        %812 = vmatprep.mubr.bf16.mxu0 0
        %813 = vmatmul.mubr.bf16.gmra.mrb[0].mxu0 %v504
        %v814 = vpop.f32.mrb[0].mxu0
        %v815 = vadd.f32 %v454, %v814
        %v816 = vpop.f32.mrb[0].mxu0
        %v817 = vadd.f32 %v458, %v816
        %v818 = vpop.f32.mrb[0].mxu0
        %v819 = vadd.f32 %v454, %v818
        %v820 = vpop.f32.mrb[0].mxu0
        %v821 = vadd.f32 %v458, %v820
        %822 = vmatprep.mubr.bf16.mxu0 0
        %823 = vmatmul.mubr.bf16.gmra.mrb[0].mxu0 %v507
        %v824 = vpop.f32.mrb[0].mxu0
        %v825 = vadd.f32 %v454, %v824
        %v826 = vpop.f32.mrb[0].mxu0
        %v827 = vadd.f32 %v458, %v826
        %v828 = vpop.f32.mrb[0].mxu0
        %v829 = vadd.f32 %v454, %v828
        %v830 = vpop.f32.mrb[0].mxu0
        %v831 = vadd.f32 %v458, %v830
        %832 = vmatprep.mubr.bf16.mxu0 0
        %833 = vmatmul.mubr.bf16.gmra.mrb[0].mxu0 %v510
        %v834 = vpop.f32.mrb[0].mxu0
        %v835 = vadd.f32 %v454, %v834
        %v836 = vpop.f32.mrb[0].mxu0
        %v837 = vadd.f32 %v458, %v836
        %v838 = vpop.f32.mrb[0].mxu0
        %v839 = vadd.f32 %v454, %v838
        %v840 = vpop.f32.mrb[0].mxu0
        %v841 = vadd.f32 %v458, %v840
        %842 = vmatprep.mubr.bf16.mxu0 0
        %843 = vmatmul.mubr.bf16.gmra.mrb[0].mxu0 %v513
        %v844 = vpop.f32.mrb[0].mxu0
        %v845 = vadd.f32 %v454, %v844
        %v846 = vpop.f32.mrb[0].mxu0
        %v847 = vadd.f32 %v458, %v846
        %v848 = vpop.f32.mrb[0].mxu0
        %v849 = vadd.f32 %v454, %v848
        %v850 = vpop.f32.mrb[0].mxu0
        %v851 = vadd.f32 %v458, %v850
        %852 = vmatprep.mubr.bf16.mxu0 0
        %853 = vmatmul.mubr.bf16.gmra.mrb[0].mxu0 %v516
        %v854 = vpop.f32.mrb[0].mxu0
        %v855 = vadd.f32 %v454, %v854
        %v856 = vpop.f32.mrb[0].mxu0
        %v857 = vadd.f32 %v458, %v856
        %v858 = vpop.f32.mrb[0].mxu0
        %v859 = vadd.f32 %v454, %v858
        %v860 = vpop.f32.mrb[0].mxu0
        %v861 = vadd.f32 %v458, %v860
        %862 = vmatprep.mubr.bf16.mxu0 0
        %863 = vmatmul.mubr.bf16.gmra.mrb[0].mxu0 %v519
        %v864 = vpop.f32.mrb[0].mxu0
        %v865 = vadd.f32 %v454, %v864
        %v866 = vpop.f32.mrb[0].mxu0
        %v867 = vadd.f32 %v458, %v866
        %v868 = vpop.f32.mrb[0].mxu0
        %v869 = vadd.f32 %v454, %v868
        %v870 = vpop.f32.mrb[0].mxu0
        %v871 = vadd.f32 %v458, %v870
        %872 = vmatprep.mubr.bf16.mxu0 0
        %873 = vmatmul.mubr.bf16.gmra.mrb[0].mxu0 %v522
        %v874 = vpop.f32.mrb[0].mxu0
        %v875 = vadd.f32 %v454, %v874
        %v876 = vpop.f32.mrb[0].mxu0
        %v877 = vadd.f32 %v458, %v876
        %v878 = vpop.f32.mrb[0].mxu0
        %v879 = vadd.f32 %v454, %v878
        %v880 = vpop.f32.mrb[0].mxu0
        %v881 = vadd.f32 %v458, %v880
        %882 = vmatprep.mubr.bf16.mxu0 0
        %883 = vmatmul.mubr.bf16.gmra.mrb[0].mxu0 %v525
        %v884 = vpop.f32.mrb[0].mxu0
        %v885 = vadd.f32 %v454, %v884
        %v886 = vpop.f32.mrb[0].mxu0
        %v887 = vadd.f32 %v458, %v886
        %v888 = vpop.f32.mrb[0].mxu0
        %v889 = vadd.f32 %v454, %v888
        %v890 = vpop.f32.mrb[0].mxu0
        %v891 = vadd.f32 %v458, %v890
        %892 = vmatprep.mubr.bf16.mxu0 0
        %893 = vmatmul.mubr.bf16.gmra.mrb[0].mxu0 %v528
        %v894 = vpop.f32.mrb[0].mxu0
        %v895 = vadd.f32 %v454, %v894
        %v896 = vpop.f32.mrb[0].mxu0
        %v897 = vadd.f32 %v458, %v896
        %v898 = vpop.f32.mrb[0].mxu0
        %v899 = vadd.f32 %v454, %v898
        %v900 = vpop.f32.mrb[0].mxu0
        %v901 = vadd.f32 %v458, %v900
        %902 = vmatprep.mubr.bf16.mxu0 0
        %903 = vmatmul.mubr.bf16.gmra.mrb[0].mxu0 %v531
        %v904 = vpop.f32.mrb[0].mxu0
        %v905 = vadd.f32 %v454, %v904
        %v906 = vpop.f32.mrb[0].mxu0
        %v907 = vadd.f32 %v458, %v906
        %v908 = vpop.f32.mrb[0].mxu0
        %v909 = vadd.f32 %v454, %v908
        %v910 = vpop.f32.mrb[0].mxu0
        %v911 = vadd.f32 %v458, %v910
        %912 = vmatprep.mubr.bf16.mxu0 0
        %913 = vmatmul.mubr.bf16.gmra.mrb[0].mxu0 %v534
        %v914 = vpop.f32.mrb[0].mxu0
        %v915 = vadd.f32 %v454, %v914
        %v916 = vpop.f32.mrb[0].mxu0
        %v917 = vadd.f32 %v458, %v916
        %v918 = vpop.f32.mrb[0].mxu0
        %v919 = vadd.f32 %v454, %v918
        %v920 = vpop.f32.mrb[0].mxu0
        %v921 = vadd.f32 %v458, %v920
        %922 = vmatprep.mubr.bf16.mxu0 0
        %923 = vmatmul.mubr.bf16.gmra.mrb[0].mxu0 %v537
        %v924 = vpop.f32.mrb[0].mxu0
        %v925 = vadd.f32 %v454, %v924
        %v926 = vpop.f32.mrb[0].mxu0
        %v927 = vadd.f32 %v458, %v926
        %v928 = vpop.f32.mrb[0].mxu0
        %v929 = vadd.f32 %v454, %v928
        %v930 = vpop.f32.mrb[0].mxu0
        %v931 = vadd.f32 %v458, %v930
        %932 = vmatprep.mubr.bf16.mxu0 0
        %933 = vmatmul.mubr.bf16.gmra.mrb[0].mxu0 %v540
        %v934 = vpop.f32.mrb[0].mxu0
        %v935 = vadd.f32 %v454, %v934
        %v936 = vpop.f32.mrb[0].mxu0
        %v937 = vadd.f32 %v458, %v936
        %v938 = vpop.f32.mrb[0].mxu0
        %v939 = vadd.f32 %v454, %v938
        %v940 = vpop.f32.mrb[0].mxu0
        %v941 = vadd.f32 %v458, %v940
        %942 = vmatprep.mubr.bf16.mxu0 0
        %943 = vmatmul.mubr.bf16.gmra.mrb[0].mxu0 %v543
        %v944 = vpop.f32.mrb[0].mxu0
        %v945 = vadd.f32 %v454, %v944
        %v946 = vpop.f32.mrb[0].mxu0
        %v947 = vadd.f32 %v458, %v946
        %v948 = vpop.f32.mrb[0].mxu0
        %v949 = vadd.f32 %v454, %v948
        %v950 = vpop.f32.mrb[0].mxu0
        %v951 = vadd.f32 %v458, %v950
        %952 = vdwg.mxu0
        %953 = vmatprep.subr.bf16.mxu0 %v562
        %954 = vmatpush1.bf16.msra.mxu0 %v559
        %955 = vmatprep.subr.bf16.mxu0 0
        %956 = vmatpush1.bf16.msra.mxu0 0
        %957 = vmatprep.subr.bf16.mxu0 0
        %958 = vmatpush1.bf16.msra.mxu0 0
        %959 = vmatprep.subr.bf16.mxu0 0
        %960 = vmatpush1.bf16.msra.mxu0 0
        %961 = vmatprep.subr.bf16.mxu0 0
        %962 = vmatpush1.bf16.msra.mxu0 0
        %963 = vmatprep.subr.bf16.mxu0 0
        %964 = vmatpush1.bf16.msra.mxu0 0
        %965 = vmatprep.subr.bf16.mxu0 0
        %966 = vmatpush1.bf16.msra.mxu0 0
        %967 = vmatprep.subr.bf16.mxu0 0
        %968 = vmatpush1.bf16.msra.mxu0 0
        %969 = vmatprep.subr.bf16.mxu0 0
        %970 = vmatpush1.bf16.msra.mxu0 0
        %971 = vmatprep.subr.bf16.mxu0 0
        %972 = vmatpush1.bf16.msra.mxu0 0
        %973 = vmatprep.subr.bf16.mxu0 0
        %974 = vmatpush1.bf16.msra.mxu0 0
        %975 = vmatprep.subr.bf16.mxu0 0
        %976 = vmatpush1.bf16.msra.mxu0 0
        %977 = vmatprep.subr.bf16.mxu0 0
        %978 = vmatpush1.bf16.msra.mxu0 0
        %979 = vmatprep.subr.bf16.mxu0 0
        %980 = vmatpush1.bf16.msra.mxu0 0
        %981 = vmatprep.subr.bf16.mxu0 0
        %982 = vmatpush1.bf16.msra.mxu0 0
        %983 = vmatprep.subr.bf16.mxu0 0
        %984 = vmatpush1.bf16.msra.mxu0 0
        %985 = vmatprep.mubr.bf16.mxu0 0
        %986 = vmatmul.mubr.bf16.gmra.mrb[0].mxu0 %v498
        %v987 = vpop.f32.mrb[0].mxu0
        %v988 = vadd.f32 %v462, %v987
        %v989 = vpop.f32.mrb[0].mxu0
        %v990 = vadd.f32 %v466, %v989
        %v991 = vpop.f32.mrb[0].mxu0
        %v992 = vadd.f32 %v462, %v991
        %v993 = vpop.f32.mrb[0].mxu0
        %v994 = vadd.f32 %v466, %v993
        %995 = vmatprep.mubr.bf16.mxu0 0
        %996 = vmatmul.mubr.bf16.gmra.mrb[0].mxu0 %v501
        %v997 = vpop.f32.mrb[0].mxu0
        %v998 = vadd.f32 %v462, %v997
        %v999 = vpop.f32.mrb[0].mxu0
        %v1000 = vadd.f32 %v466, %v999
        %v1001 = vpop.f32.mrb[0].mxu0
        %v1002 = vadd.f32 %v462, %v1001
        %v1003 = vpop.f32.mrb[0].mxu0
        %v1004 = vadd.f32 %v466, %v1003
        %1005 = vmatprep.mubr.bf16.mxu0 0
        %1006 = vmatmul.mubr.bf16.gmra.mrb[0].mxu0 %v504
        %v1007 = vpop.f32.mrb[0].mxu0
        %v1008 = vadd.f32 %v462, %v1007
        %v1009 = vpop.f32.mrb[0].mxu0
        %v1010 = vadd.f32 %v466, %v1009
        %v1011 = vpop.f32.mrb[0].mxu0
        %v1012 = vadd.f32 %v462, %v1011
        %v1013 = vpop.f32.mrb[0].mxu0
        %v1014 = vadd.f32 %v466, %v1013
        %1015 = vmatprep.mubr.bf16.mxu0 0
        %1016 = vmatmul.mubr.bf16.gmra.mrb[0].mxu0 %v507
        %v1017 = vpop.f32.mrb[0].mxu0
        %v1018 = vadd.f32 %v462, %v1017
        %v1019 = vpop.f32.mrb[0].mxu0
        %v1020 = vadd.f32 %v466, %v1019
        %v1021 = vpop.f32.mrb[0].mxu0
        %v1022 = vadd.f32 %v462, %v1021
        %v1023 = vpop.f32.mrb[0].mxu0
        %v1024 = vadd.f32 %v466, %v1023
        %1025 = vmatprep.mubr.bf16.mxu0 0
        %1026 = vmatmul.mubr.bf16.gmra.mrb[0].mxu0 %v510
        %v1027 = vpop.f32.mrb[0].mxu0
        %v1028 = vadd.f32 %v462, %v1027
        %v1029 = vpop.f32.mrb[0].mxu0
        %v1030 = vadd.f32 %v466, %v1029
        %v1031 = vpop.f32.mrb[0].mxu0
        %v1032 = vadd.f32 %v462, %v1031
        %v1033 = vpop.f32.mrb[0].mxu0
        %v1034 = vadd.f32 %v466, %v1033
        %1035 = vmatprep.mubr.bf16.mxu0 0
        %1036 = vmatmul.mubr.bf16.gmra.mrb[0].mxu0 %v513
        %v1037 = vpop.f32.mrb[0].mxu0
        %v1038 = vadd.f32 %v462, %v1037
        %v1039 = vpop.f32.mrb[0].mxu0
        %v1040 = vadd.f32 %v466, %v1039
        %v1041 = vpop.f32.mrb[0].mxu0
        %v1042 = vadd.f32 %v462, %v1041
        %v1043 = vpop.f32.mrb[0].mxu0
        %v1044 = vadd.f32 %v466, %v1043
        %1045 = vmatprep.mubr.bf16.mxu0 0
        %1046 = vmatmul.mubr.bf16.gmra.mrb[0].mxu0 %v516
        %v1047 = vpop.f32.mrb[0].mxu0
        %v1048 = vadd.f32 %v462, %v1047
        %v1049 = vpop.f32.mrb[0].mxu0
        %v1050 = vadd.f32 %v466, %v1049
        %v1051 = vpop.f32.mrb[0].mxu0
        %v1052 = vadd.f32 %v462, %v1051
        %v1053 = vpop.f32.mrb[0].mxu0
        %v1054 = vadd.f32 %v466, %v1053
        %1055 = vmatprep.mubr.bf16.mxu0 0
        %1056 = vmatmul.mubr.bf16.gmra.mrb[0].mxu0 %v519
        %v1057 = vpop.f32.mrb[0].mxu0
        %v1058 = vadd.f32 %v462, %v1057
        %v1059 = vpop.f32.mrb[0].mxu0
        %v1060 = vadd.f32 %v466, %v1059
        %v1061 = vpop.f32.mrb[0].mxu0
        %v1062 = vadd.f32 %v462, %v1061
        %v1063 = vpop.f32.mrb[0].mxu0
        %v1064 = vadd.f32 %v466, %v1063
        %1065 = vmatprep.mubr.bf16.mxu0 0
        %1066 = vmatmul.mubr.bf16.gmra.mrb[0].mxu0 %v522
        %v1067 = vpop.f32.mrb[0].mxu0
        %v1068 = vadd.f32 %v462, %v1067
        %v1069 = vpop.f32.mrb[0].mxu0
        %v1070 = vadd.f32 %v466, %v1069
        %v1071 = vpop.f32.mrb[0].mxu0
        %v1072 = vadd.f32 %v462, %v1071
        %v1073 = vpop.f32.mrb[0].mxu0
        %v1074 = vadd.f32 %v466, %v1073
        %1075 = vmatprep.mubr.bf16.mxu0 0
        %1076 = vmatmul.mubr.bf16.gmra.mrb[0].mxu0 %v525
        %v1077 = vpop.f32.mrb[0].mxu0
        %v1078 = vadd.f32 %v462, %v1077
        %v1079 = vpop.f32.mrb[0].mxu0
        %v1080 = vadd.f32 %v466, %v1079
        %v1081 = vpop.f32.mrb[0].mxu0
        %v1082 = vadd.f32 %v462, %v1081
        %v1083 = vpop.f32.mrb[0].mxu0
        %v1084 = vadd.f32 %v466, %v1083
        %1085 = vmatprep.mubr.bf16.mxu0 0
        %1086 = vmatmul.mubr.bf16.gmra.mrb[0].mxu0 %v528
        %v1087 = vpop.f32.mrb[0].mxu0
        %v1088 = vadd.f32 %v462, %v1087
        %v1089 = vpop.f32.mrb[0].mxu0
        %v1090 = vadd.f32 %v466, %v1089
        %v1091 = vpop.f32.mrb[0].mxu0
        %v1092 = vadd.f32 %v462, %v1091
        %v1093 = vpop.f32.mrb[0].mxu0
        %v1094 = vadd.f32 %v466, %v1093
        %1095 = vmatprep.mubr.bf16.mxu0 0
        %1096 = vmatmul.mubr.bf16.gmra.mrb[0].mxu0 %v531
        %v1097 = vpop.f32.mrb[0].mxu0
        %v1098 = vadd.f32 %v462, %v1097
        %v1099 = vpop.f32.mrb[0].mxu0
        %v1100 = vadd.f32 %v466, %v1099
        %v1101 = vpop.f32.mrb[0].mxu0
        %v1102 = vadd.f32 %v462, %v1101
        %v1103 = vpop.f32.mrb[0].mxu0
        %v1104 = vadd.f32 %v466, %v1103
        %1105 = vmatprep.mubr.bf16.mxu0 0
        %1106 = vmatmul.mubr.bf16.gmra.mrb[0].mxu0 %v534
        %v1107 = vpop.f32.mrb[0].mxu0
        %v1108 = vadd.f32 %v462, %v1107
        %v1109 = vpop.f32.mrb[0].mxu0
        %v1110 = vadd.f32 %v466, %v1109
        %v1111 = vpop.f32.mrb[0].mxu0
        %v1112 = vadd.f32 %v462, %v1111
        %v1113 = vpop.f32.mrb[0].mxu0
        %v1114 = vadd.f32 %v466, %v1113
        %1115 = vmatprep.mubr.bf16.mxu0 0
        %1116 = vmatmul.mubr.bf16.gmra.mrb[0].mxu0 %v537
        %v1117 = vpop.f32.mrb[0].mxu0
        %v1118 = vadd.f32 %v462, %v1117
        %v1119 = vpop.f32.mrb[0].mxu0
        %v1120 = vadd.f32 %v466, %v1119
        %v1121 = vpop.f32.mrb[0].mxu0
        %v1122 = vadd.f32 %v462, %v1121
        %v1123 = vpop.f32.mrb[0].mxu0
        %v1124 = vadd.f32 %v466, %v1123
        %1125 = vmatprep.mubr.bf16.mxu0 0
        %1126 = vmatmul.mubr.bf16.gmra.mrb[0].mxu0 %v540
        %v1127 = vpop.f32.mrb[0].mxu0
        %v1128 = vadd.f32 %v462, %v1127
        %v1129 = vpop.f32.mrb[0].mxu0
        %v1130 = vadd.f32 %v466, %v1129
        %v1131 = vpop.f32.mrb[0].mxu0
        %v1132 = vadd.f32 %v462, %v1131
        %v1133 = vpop.f32.mrb[0].mxu0
        %v1134 = vadd.f32 %v466, %v1133
        %1135 = vmatprep.mubr.bf16.mxu0 0
        %1136 = vmatmul.mubr.bf16.gmra.mrb[0].mxu0 %v543
        %v1137 = vpop.f32.mrb[0].mxu0
        %v1138 = vadd.f32 %v462, %v1137
        %v1139 = vpop.f32.mrb[0].mxu0
        %v1140 = vadd.f32 %v466, %v1139
        %v1141 = vpop.f32.mrb[0].mxu0
        %v1142 = vadd.f32 %v462, %v1141
        %v1143 = vpop.f32.mrb[0].mxu0
        %v1144 = vadd.f32 %v466, %v1143
        %1145 = vdwg.mxu0
        %1146 = vmatprep.subr.bf16.mxu0 0
        %1147 = vmatpush1.bf16.msra.mxu0 %v565
        %1148 = vmatprep.subr.bf16.mxu0 0
        %1149 = vmatpush1.bf16.msra.mxu0 0
        %1150 = vmatprep.subr.bf16.mxu0 0
        %1151 = vmatpush1.bf16.msra.mxu0 0
        %1152 = vmatprep.subr.bf16.mxu0 0
        %1153 = vmatpush1.bf16.msra.mxu0 0
        %1154 = vmatprep.subr.bf16.mxu0 0
        %1155 = vmatpush1.bf16.msra.mxu0 0
        %1156 = vmatprep.subr.bf16.mxu0 0
        %1157 = vmatpush1.bf16.msra.mxu0 0
        %1158 = vmatprep.subr.bf16.mxu0 0
        %1159 = vmatpush1.bf16.msra.mxu0 0
        %1160 = vmatprep.subr.bf16.mxu0 0
        %1161 = vmatpush1.bf16.msra.mxu0 0
        %1162 = vmatprep.subr.bf16.mxu0 0
        %1163 = vmatpush1.bf16.msra.mxu0 0
        %1164 = vmatprep.subr.bf16.mxu0 0
        %1165 = vmatpush1.bf16.msra.mxu0 0
        %1166 = vmatprep.subr.bf16.mxu0 0
        %1167 = vmatpush1.bf16.msra.mxu0 0
        %1168 = vmatprep.subr.bf16.mxu0 0
        %1169 = vmatpush1.bf16.msra.mxu0 0
        %1170 = vmatprep.subr.bf16.mxu0 0
        %1171 = vmatpush1.bf16.msra.mxu0 0
        %1172 = vmatprep.subr.bf16.mxu0 0
        %1173 = vmatpush1.bf16.msra.mxu0 0
        %1174 = vmatprep.subr.bf16.mxu0 0
        %1175 = vmatpush1.bf16.msra.mxu0 0
        %1176 = vmatprep.subr.bf16.mxu0 0
        %1177 = vmatpush1.bf16.msra.mxu0 0
        %1178 = vmatprep.mubr.bf16.mxu0 0
        %1179 = vmatmul.mubr.bf16.gmra.mrb[0].mxu0 %v498
        %v1180 = vpop.f32.mrb[0].mxu0
        %v1181 = vadd.f32 %v470, %v1180
        %v1182 = vpop.f32.mrb[0].mxu0
        %v1183 = vpop.f32.mrb[0].mxu0
        %v1184 = vadd.f32 %v470, %v1183
        %v1185 = vpop.f32.mrb[0].mxu0
        %1186 = vmatprep.mubr.bf16.mxu0 0
        %1187 = vmatmul.mubr.bf16.gmra.mrb[0].mxu0 %v501
        %v1188 = vpop.f32.mrb[0].mxu0
        %v1189 = vadd.f32 %v470, %v1188
        %v1190 = vpop.f32.mrb[0].mxu0
        %v1191 = vpop.f32.mrb[0].mxu0
        %v1192 = vadd.f32 %v470, %v1191
        %v1193 = vpop.f32.mrb[0].mxu0
        %1194 = vmatprep.mubr.bf16.mxu0 0
        %1195 = vmatmul.mubr.bf16.gmra.mrb[0].mxu0 %v504
        %v1196 = vpop.f32.mrb[0].mxu0
        %v1197 = vadd.f32 %v470, %v1196
        %v1198 = vpop.f32.mrb[0].mxu0
        %v1199 = vpop.f32.mrb[0].mxu0
        %v1200 = vadd.f32 %v470, %v1199
        %v1201 = vpop.f32.mrb[0].mxu0
        %1202 = vmatprep.mubr.bf16.mxu0 0
        %1203 = vmatmul.mubr.bf16.gmra.mrb[0].mxu0 %v507
        %v1204 = vpop.f32.mrb[0].mxu0
        %v1205 = vadd.f32 %v470, %v1204
        %v1206 = vpop.f32.mrb[0].mxu0
        %v1207 = vpop.f32.mrb[0].mxu0
        %v1208 = vadd.f32 %v470, %v1207
        %v1209 = vpop.f32.mrb[0].mxu0
        %1210 = vmatprep.mubr.bf16.mxu0 0
        %1211 = vmatmul.mubr.bf16.gmra.mrb[0].mxu0 %v510
        %v1212 = vpop.f32.mrb[0].mxu0
        %v1213 = vadd.f32 %v470, %v1212
        %v1214 = vpop.f32.mrb[0].mxu0
        %v1215 = vpop.f32.mrb[0].mxu0
        %v1216 = vadd.f32 %v470, %v1215
        %v1217 = vpop.f32.mrb[0].mxu0
        %1218 = vmatprep.mubr.bf16.mxu0 0
        %1219 = vmatmul.mubr.bf16.gmra.mrb[0].mxu0 %v513
        %v1220 = vpop.f32.mrb[0].mxu0
        %v1221 = vadd.f32 %v470, %v1220
        %v1222 = vpop.f32.mrb[0].mxu0
        %v1223 = vpop.f32.mrb[0].mxu0
        %v1224 = vadd.f32 %v470, %v1223
        %v1225 = vpop.f32.mrb[0].mxu0
        %1226 = vmatprep.mubr.bf16.mxu0 0
        %1227 = vmatmul.mubr.bf16.gmra.mrb[0].mxu0 %v516
        %v1228 = vpop.f32.mrb[0].mxu0
        %v1229 = vadd.f32 %v470, %v1228
        %v1230 = vpop.f32.mrb[0].mxu0
        %v1231 = vpop.f32.mrb[0].mxu0
        %v1232 = vadd.f32 %v470, %v1231
        %v1233 = vpop.f32.mrb[0].mxu0
        %1234 = vmatprep.mubr.bf16.mxu0 0
        %1235 = vmatmul.mubr.bf16.gmra.mrb[0].mxu0 %v519
        %v1236 = vpop.f32.mrb[0].mxu0
        %v1237 = vadd.f32 %v470, %v1236
        %v1238 = vpop.f32.mrb[0].mxu0
        %v1239 = vpop.f32.mrb[0].mxu0
        %v1240 = vadd.f32 %v470, %v1239
        %v1241 = vpop.f32.mrb[0].mxu0
        %1242 = vmatprep.mubr.bf16.mxu0 0
        %1243 = vmatmul.mubr.bf16.gmra.mrb[0].mxu0 %v522
        %v1244 = vpop.f32.mrb[0].mxu0
        %v1245 = vadd.f32 %v470, %v1244
        %v1246 = vpop.f32.mrb[0].mxu0
        %v1247 = vpop.f32.mrb[0].mxu0
        %v1248 = vadd.f32 %v470, %v1247
        %v1249 = vpop.f32.mrb[0].mxu0
        %1250 = vmatprep.mubr.bf16.mxu0 0
        %1251 = vmatmul.mubr.bf16.gmra.mrb[0].mxu0 %v525
        %v1252 = vpop.f32.mrb[0].mxu0
        %v1253 = vadd.f32 %v470, %v1252
        %v1254 = vpop.f32.mrb[0].mxu0
        %v1255 = vpop.f32.mrb[0].mxu0
        %v1256 = vadd.f32 %v470, %v1255
        %v1257 = vpop.f32.mrb[0].mxu0
        %1258 = vmatprep.mubr.bf16.mxu0 0
        %1259 = vmatmul.mubr.bf16.gmra.mrb[0].mxu0 %v528
        %v1260 = vpop.f32.mrb[0].mxu0
        %v1261 = vadd.f32 %v470, %v1260
        %v1262 = vpop.f32.mrb[0].mxu0
        %v1263 = vpop.f32.mrb[0].mxu0
        %v1264 = vadd.f32 %v470, %v1263
        %v1265 = vpop.f32.mrb[0].mxu0
        %1266 = vmatprep.mubr.bf16.mxu0 0
        %1267 = vmatmul.mubr.bf16.gmra.mrb[0].mxu0 %v531
        %v1268 = vpop.f32.mrb[0].mxu0
        %v1269 = vadd.f32 %v470, %v1268
        %v1270 = vpop.f32.mrb[0].mxu0
        %v1271 = vpop.f32.mrb[0].mxu0
        %v1272 = vadd.f32 %v470, %v1271
        %v1273 = vpop.f32.mrb[0].mxu0
        %1274 = vmatprep.mubr.bf16.mxu0 0
        %1275 = vmatmul.mubr.bf16.gmra.mrb[0].mxu0 %v534
        %v1276 = vpop.f32.mrb[0].mxu0
        %v1277 = vadd.f32 %v470, %v1276
        %v1278 = vpop.f32.mrb[0].mxu0
        %v1279 = vpop.f32.mrb[0].mxu0
        %v1280 = vadd.f32 %v470, %v1279
        %v1281 = vpop.f32.mrb[0].mxu0
        %1282 = vmatprep.mubr.bf16.mxu0 0
        %1283 = vmatmul.mubr.bf16.gmra.mrb[0].mxu0 %v537
        %v1284 = vpop.f32.mrb[0].mxu0
        %v1285 = vadd.f32 %v470, %v1284
        %v1286 = vpop.f32.mrb[0].mxu0
        %v1287 = vpop.f32.mrb[0].mxu0
        %v1288 = vadd.f32 %v470, %v1287
        %v1289 = vpop.f32.mrb[0].mxu0
        %1290 = vmatprep.mubr.bf16.mxu0 0
        %1291 = vmatmul.mubr.bf16.gmra.mrb[0].mxu0 %v540
        %v1292 = vpop.f32.mrb[0].mxu0
        %v1293 = vadd.f32 %v470, %v1292
        %v1294 = vpop.f32.mrb[0].mxu0
        %v1295 = vpop.f32.mrb[0].mxu0
        %v1296 = vadd.f32 %v470, %v1295
        %v1297 = vpop.f32.mrb[0].mxu0
        %1298 = vmatprep.mubr.bf16.mxu0 0
        %1299 = vmatmul.mubr.bf16.gmra.mrb[0].mxu0 %v543
        %v1300 = vpop.f32.mrb[0].mxu0
        %v1301 = vadd.f32 %v470, %v1300
        %v1302 = vpop.f32.mrb[0].mxu0
        %v1303 = vpop.f32.mrb[0].mxu0
        %v1304 = vadd.f32 %v470, %v1303
        %v1305 = vpop.f32.mrb[0].mxu0
        %1306 = vdwg.mxu0
        %v1307 = vmax.f32 %v602, 0.0
        %v1308 = vmax.f32 %v604, 0.0
        %v1309 = vmax.f32 %v795, 0.0
        %v1310 = vmax.f32 %v797, 0.0
        %v1311 = vmax.f32 %v988, 0.0
        %v1312 = vmax.f32 %v990, 0.0
        %v1313 = vmax.f32 %v1181, 0.0
        %v1314 = vmax.f32 %v606, 0.0
        %v1315 = vmax.f32 %v608, 0.0
        %v1316 = vmax.f32 %v799, 0.0
        %v1317 = vmax.f32 %v801, 0.0
        %v1318 = vmax.f32 %v992, 0.0
        %v1319 = vmax.f32 %v994, 0.0
        %v1320 = vmax.f32 %v1184, 0.0
        %v1321 = vmax.f32 %v612, 0.0
        %v1322 = vmax.f32 %v614, 0.0
        %v1323 = vmax.f32 %v805, 0.0
        %v1324 = vmax.f32 %v807, 0.0
        %v1325 = vmax.f32 %v998, 0.0
        %v1326 = vmax.f32 %v1000, 0.0
        %v1327 = vmax.f32 %v1189, 0.0
        %v1328 = vmax.f32 %v616, 0.0
        %v1329 = vmax.f32 %v618, 0.0
        %v1330 = vmax.f32 %v809, 0.0
        %v1331 = vmax.f32 %v811, 0.0
        %v1332 = vmax.f32 %v1002, 0.0
        %v1333 = vmax.f32 %v1004, 0.0
        %v1334 = vmax.f32 %v1192, 0.0
        %v1335 = vmax.f32 %v622, 0.0
        %v1336 = vmax.f32 %v624, 0.0
        %v1337 = vmax.f32 %v815, 0.0
        %v1338 = vmax.f32 %v817, 0.0
        %v1339 = vmax.f32 %v1008, 0.0
        %v1340 = vmax.f32 %v1010, 0.0
        %v1341 = vmax.f32 %v1197, 0.0
        %v1342 = vmax.f32 %v626, 0.0
        %v1343 = vmax.f32 %v628, 0.0
        %v1344 = vmax.f32 %v819, 0.0
        %v1345 = vmax.f32 %v821, 0.0
        %v1346 = vmax.f32 %v1012, 0.0
        %v1347 = vmax.f32 %v1014, 0.0
        %v1348 = vmax.f32 %v1200, 0.0
        %v1349 = vmax.f32 %v632, 0.0
        %v1350 = vmax.f32 %v634, 0.0
        %v1351 = vmax.f32 %v825, 0.0
        %v1352 = vmax.f32 %v827, 0.0
        %v1353 = vmax.f32 %v1018, 0.0
        %v1354 = vmax.f32 %v1020, 0.0
        %v1355 = vmax.f32 %v1205, 0.0
        %v1356 = vmax.f32 %v636, 0.0
        %v1357 = vmax.f32 %v638, 0.0
        %v1358 = vmax.f32 %v829, 0.0
        %v1359 = vmax.f32 %v831, 0.0
        %v1360 = vmax.f32 %v1022, 0.0
        %v1361 = vmax.f32 %v1024, 0.0
        %v1362 = vmax.f32 %v1208, 0.0
        %v1363 = vmax.f32 %v642, 0.0
        %v1364 = vmax.f32 %v644, 0.0
        %v1365 = vmax.f32 %v835, 0.0
        %v1366 = vmax.f32 %v837, 0.0
        %v1367 = vmax.f32 %v1028, 0.0
        %v1368 = vmax.f32 %v1030, 0.0
        %v1369 = vmax.f32 %v1213, 0.0
        %v1370 = vmax.f32 %v646, 0.0
        %v1371 = vmax.f32 %v648, 0.0
        %v1372 = vmax.f32 %v839, 0.0
        %v1373 = vmax.f32 %v841, 0.0
        %v1374 = vmax.f32 %v1032, 0.0
        %v1375 = vmax.f32 %v1034, 0.0
        %v1376 = vmax.f32 %v1216, 0.0
        %v1377 = vmax.f32 %v652, 0.0
        %v1378 = vmax.f32 %v654, 0.0
        %v1379 = vmax.f32 %v845, 0.0
        %v1380 = vmax.f32 %v847, 0.0
        %v1381 = vmax.f32 %v1038, 0.0
        %v1382 = vmax.f32 %v1040, 0.0
        %v1383 = vmax.f32 %v1221, 0.0
        %v1384 = vmax.f32 %v656, 0.0
        %v1385 = vmax.f32 %v658, 0.0
        %v1386 = vmax.f32 %v849, 0.0
        %v1387 = vmax.f32 %v851, 0.0
        %v1388 = vmax.f32 %v1042, 0.0
        %v1389 = vmax.f32 %v1044, 0.0
        %v1390 = vmax.f32 %v1224, 0.0
        %v1391 = vmax.f32 %v662, 0.0
        %v1392 = vmax.f32 %v664, 0.0
        %v1393 = vmax.f32 %v855, 0.0
        %v1394 = vmax.f32 %v857, 0.0
        %v1395 = vmax.f32 %v1048, 0.0
        %v1396 = vmax.f32 %v1050, 0.0
        %v1397 = vmax.f32 %v1229, 0.0
        %v1398 = vmax.f32 %v666, 0.0
        %v1399 = vmax.f32 %v668, 0.0
        %v1400 = vmax.f32 %v859, 0.0
        %v1401 = vmax.f32 %v861, 0.0
        %v1402 = vmax.f32 %v1052, 0.0
        %v1403 = vmax.f32 %v1054, 0.0
        %v1404 = vmax.f32 %v1232, 0.0
        %v1405 = vmax.f32 %v672, 0.0
        %v1406 = vmax.f32 %v674, 0.0
        %v1407 = vmax.f32 %v865, 0.0
        %v1408 = vmax.f32 %v867, 0.0
        %v1409 = vmax.f32 %v1058, 0.0
        %v1410 = vmax.f32 %v1060, 0.0
        %v1411 = vmax.f32 %v1237, 0.0
        %v1412 = vmax.f32 %v676, 0.0
        %v1413 = vmax.f32 %v678, 0.0
        %v1414 = vmax.f32 %v869, 0.0
        %v1415 = vmax.f32 %v871, 0.0
        %v1416 = vmax.f32 %v1062, 0.0
        %v1417 = vmax.f32 %v1064, 0.0
        %v1418 = vmax.f32 %v1240, 0.0
        %v1419 = vmax.f32 %v682, 0.0
        %v1420 = vmax.f32 %v684, 0.0
        %v1421 = vmax.f32 %v875, 0.0
        %v1422 = vmax.f32 %v877, 0.0
        %v1423 = vmax.f32 %v1068, 0.0
        %v1424 = vmax.f32 %v1070, 0.0
        %v1425 = vmax.f32 %v1245, 0.0
        %v1426 = vmax.f32 %v686, 0.0
        %v1427 = vmax.f32 %v688, 0.0
        %v1428 = vmax.f32 %v879, 0.0
        %v1429 = vmax.f32 %v881, 0.0
        %v1430 = vmax.f32 %v1072, 0.0
        %v1431 = vmax.f32 %v1074, 0.0
        %v1432 = vmax.f32 %v1248, 0.0
        %v1433 = vmax.f32 %v692, 0.0
        %v1434 = vmax.f32 %v694, 0.0
        %v1435 = vmax.f32 %v885, 0.0
        %v1436 = vmax.f32 %v887, 0.0
        %v1437 = vmax.f32 %v1078, 0.0
        %v1438 = vmax.f32 %v1080, 0.0
        %v1439 = vmax.f32 %v1253, 0.0
        %v1440 = vmax.f32 %v696, 0.0
        %v1441 = vmax.f32 %v698, 0.0
        %v1442 = vmax.f32 %v889, 0.0
        %v1443 = vmax.f32 %v891, 0.0
        %v1444 = vmax.f32 %v1082, 0.0
        %v1445 = vmax.f32 %v1084, 0.0
        %v1446 = vmax.f32 %v1256, 0.0
        %v1447 = vmax.f32 %v702, 0.0
        %v1448 = vmax.f32 %v704, 0.0
        %v1449 = vmax.f32 %v895, 0.0
        %v1450 = vmax.f32 %v897, 0.0
        %v1451 = vmax.f32 %v1088, 0.0
        %v1452 = vmax.f32 %v1090, 0.0
        %v1453 = vmax.f32 %v1261, 0.0
        %v1454 = vmax.f32 %v706, 0.0
        %v1455 = vmax.f32 %v708, 0.0
        %v1456 = vmax.f32 %v899, 0.0
        %v1457 = vmax.f32 %v901, 0.0
        %v1458 = vmax.f32 %v1092, 0.0
        %v1459 = vmax.f32 %v1094, 0.0
        %v1460 = vmax.f32 %v1264, 0.0
        %v1461 = vmax.f32 %v712, 0.0
        %v1462 = vmax.f32 %v714, 0.0
        %v1463 = vmax.f32 %v905, 0.0
        %v1464 = vmax.f32 %v907, 0.0
        %v1465 = vmax.f32 %v1098, 0.0
        %v1466 = vmax.f32 %v1100, 0.0
        %v1467 = vmax.f32 %v1269, 0.0
        %v1468 = vmax.f32 %v716, 0.0
        %v1469 = vmax.f32 %v718, 0.0
        %v1470 = vmax.f32 %v909, 0.0
        %v1471 = vmax.f32 %v911, 0.0
        %v1472 = vmax.f32 %v1102, 0.0
        %v1473 = vmax.f32 %v1104, 0.0
        %v1474 = vmax.f32 %v1272, 0.0
        %v1475 = vmax.f32 %v722, 0.0
        %v1476 = vmax.f32 %v724, 0.0
        %v1477 = vmax.f32 %v915, 0.0
        %v1478 = vmax.f32 %v917, 0.0
        %v1479 = vmax.f32 %v1108, 0.0
        %v1480 = vmax.f32 %v1110, 0.0
        %v1481 = vmax.f32 %v1277, 0.0
        %v1482 = vmax.f32 %v726, 0.0
        %v1483 = vmax.f32 %v728, 0.0
        %v1484 = vmax.f32 %v919, 0.0
        %v1485 = vmax.f32 %v921, 0.0
        %v1486 = vmax.f32 %v1112, 0.0
        %v1487 = vmax.f32 %v1114, 0.0
        %v1488 = vmax.f32 %v1280, 0.0
        %v1489 = vmax.f32 %v732, 0.0
        %v1490 = vmax.f32 %v734, 0.0
        %v1491 = vmax.f32 %v925, 0.0
        %v1492 = vmax.f32 %v927, 0.0
        %v1493 = vmax.f32 %v1118, 0.0
        %v1494 = vmax.f32 %v1120, 0.0
        %v1495 = vmax.f32 %v1285, 0.0
        %v1496 = vmax.f32 %v736, 0.0
        %v1497 = vmax.f32 %v738, 0.0
        %v1498 = vmax.f32 %v929, 0.0
        %v1499 = vmax.f32 %v931, 0.0
        %v1500 = vmax.f32 %v1122, 0.0
        %v1501 = vmax.f32 %v1124, 0.0
        %v1502 = vmax.f32 %v1288, 0.0
        %v1503 = vmax.f32 %v742, 0.0
        %v1504 = vmax.f32 %v744, 0.0
        %v1505 = vmax.f32 %v935, 0.0
        %v1506 = vmax.f32 %v937, 0.0
        %v1507 = vmax.f32 %v1128, 0.0
        %v1508 = vmax.f32 %v1130, 0.0
        %v1509 = vmax.f32 %v1293, 0.0
        %v1510 = vmax.f32 %v746, 0.0
        %v1511 = vmax.f32 %v748, 0.0
        %v1512 = vmax.f32 %v939, 0.0
        %v1513 = vmax.f32 %v941, 0.0
        %v1514 = vmax.f32 %v1132, 0.0
        %v1515 = vmax.f32 %v1134, 0.0
        %v1516 = vmax.f32 %v1296, 0.0
        %v1517 = vmax.f32 %v752, 0.0
        %v1518 = vmax.f32 %v754, 0.0
        %v1519 = vmax.f32 %v945, 0.0
        %v1520 = vmax.f32 %v947, 0.0
        %v1521 = vmax.f32 %v1138, 0.0
        %v1522 = vmax.f32 %v1140, 0.0
        %v1523 = vmax.f32 %v1301, 0.0
        %v1524 = vmax.f32 %v756, 0.0
        %v1525 = vmax.f32 %v758, 0.0
        %v1526 = vmax.f32 %v949, 0.0
        %v1527 = vmax.f32 %v951, 0.0
        %v1528 = vmax.f32 %v1142, 0.0
        %v1529 = vmax.f32 %v1144, 0.0
        %v1530 = vmax.f32 %v1304, 0.0
        %v1531 = vpack.c.bf16 %v1314, %v1307
        %v1532 = vpack.c.bf16 %v1315, %v1308
        %v1533 = vpack.c.bf16 %v1316, %v1309
        %v1534 = vpack.c.bf16 %v1317, %v1310
        %v1535 = vpack.c.bf16 %v1318, %v1311
        %v1536 = vpack.c.bf16 %v1319, %v1312
        %v1537 = vpack.c.bf16 %v1320, %v1313
        %v1538 = vpack.c.bf16 %v1328, %v1321
        %v1539 = vpack.c.bf16 %v1329, %v1322
        %v1540 = vpack.c.bf16 %v1330, %v1323
        %v1541 = vpack.c.bf16 %v1331, %v1324
        %v1542 = vpack.c.bf16 %v1332, %v1325
        %v1543 = vpack.c.bf16 %v1333, %v1326
        %v1544 = vpack.c.bf16 %v1334, %v1327
        %v1545 = vpack.c.bf16 %v1342, %v1335
        %v1546 = vpack.c.bf16 %v1343, %v1336
        %v1547 = vpack.c.bf16 %v1344, %v1337
        %v1548 = vpack.c.bf16 %v1345, %v1338
        %v1549 = vpack.c.bf16 %v1346, %v1339
        %v1550 = vpack.c.bf16 %v1347, %v1340
        %v1551 = vpack.c.bf16 %v1348, %v1341
        %v1552 = vpack.c.bf16 %v1356, %v1349
        %v1553 = vpack.c.bf16 %v1357, %v1350
        %v1554 = vpack.c.bf16 %v1358, %v1351
        %v1555 = vpack.c.bf16 %v1359, %v1352
        %v1556 = vpack.c.bf16 %v1360, %v1353
        %v1557 = vpack.c.bf16 %v1361, %v1354
        %v1558 = vpack.c.bf16 %v1362, %v1355
        %v1559 = vpack.c.bf16 %v1370, %v1363
        %v1560 = vpack.c.bf16 %v1371, %v1364
        %v1561 = vpack.c.bf16 %v1372, %v1365
        %v1562 = vpack.c.bf16 %v1373, %v1366
        %v1563 = vpack.c.bf16 %v1374, %v1367
        %v1564 = vpack.c.bf16 %v1375, %v1368
        %v1565 = vpack.c.bf16 %v1376, %v1369
        %v1566 = vpack.c.bf16 %v1384, %v1377
        %v1567 = vpack.c.bf16 %v1385, %v1378
        %v1568 = vpack.c.bf16 %v1386, %v1379
        %v1569 = vpack.c.bf16 %v1387, %v1380
        %v1570 = vpack.c.bf16 %v1388, %v1381
        %v1571 = vpack.c.bf16 %v1389, %v1382
        %v1572 = vpack.c.bf16 %v1390, %v1383
        %v1573 = vpack.c.bf16 %v1398, %v1391
        %v1574 = vpack.c.bf16 %v1399, %v1392
        %v1575 = vpack.c.bf16 %v1400, %v1393
        %v1576 = vpack.c.bf16 %v1401, %v1394
        %v1577 = vpack.c.bf16 %v1402, %v1395
        %v1578 = vpack.c.bf16 %v1403, %v1396
        %v1579 = vpack.c.bf16 %v1404, %v1397
        %v1580 = vpack.c.bf16 %v1412, %v1405
        %v1581 = vpack.c.bf16 %v1413, %v1406
        %v1582 = vpack.c.bf16 %v1414, %v1407
        %v1583 = vpack.c.bf16 %v1415, %v1408
        %v1584 = vpack.c.bf16 %v1416, %v1409
        %v1585 = vpack.c.bf16 %v1417, %v1410
        %v1586 = vpack.c.bf16 %v1418, %v1411
        %v1587 = vpack.c.bf16 %v1426, %v1419
        %v1588 = vpack.c.bf16 %v1427, %v1420
        %v1589 = vpack.c.bf16 %v1428, %v1421
        %v1590 = vpack.c.bf16 %v1429, %v1422
        %v1591 = vpack.c.bf16 %v1430, %v1423
        %v1592 = vpack.c.bf16 %v1431, %v1424
        %v1593 = vpack.c.bf16 %v1432, %v1425
        %v1594 = vpack.c.bf16 %v1440, %v1433
        %v1595 = vpack.c.bf16 %v1441, %v1434
        %v1596 = vpack.c.bf16 %v1442, %v1435
        %v1597 = vpack.c.bf16 %v1443, %v1436
        %v1598 = vpack.c.bf16 %v1444, %v1437
        %v1599 = vpack.c.bf16 %v1445, %v1438
        %v1600 = vpack.c.bf16 %v1446, %v1439
        %v1601 = vpack.c.bf16 %v1454, %v1447
        %v1602 = vpack.c.bf16 %v1455, %v1448
        %v1603 = vpack.c.bf16 %v1456, %v1449
        %v1604 = vpack.c.bf16 %v1457, %v1450
        %v1605 = vpack.c.bf16 %v1458, %v1451
        %v1606 = vpack.c.bf16 %v1459, %v1452
        %v1607 = vpack.c.bf16 %v1460, %v1453
        %v1608 = vpack.c.bf16 %v1468, %v1461
        %v1609 = vpack.c.bf16 %v1469, %v1462
        %v1610 = vpack.c.bf16 %v1470, %v1463
        %v1611 = vpack.c.bf16 %v1471, %v1464
        %v1612 = vpack.c.bf16 %v1472, %v1465
        %v1613 = vpack.c.bf16 %v1473, %v1466
        %v1614 = vpack.c.bf16 %v1474, %v1467
        %v1615 = vpack.c.bf16 %v1482, %v1475
        %v1616 = vpack.c.bf16 %v1483, %v1476
        %v1617 = vpack.c.bf16 %v1484, %v1477
        %v1618 = vpack.c.bf16 %v1485, %v1478
        %v1619 = vpack.c.bf16 %v1486, %v1479
        %v1620 = vpack.c.bf16 %v1487, %v1480
        %v1621 = vpack.c.bf16 %v1488, %v1481
        %v1622 = vpack.c.bf16 %v1496, %v1489
        %v1623 = vpack.c.bf16 %v1497, %v1490
        %v1624 = vpack.c.bf16 %v1498, %v1491
        %v1625 = vpack.c.bf16 %v1499, %v1492
        %v1626 = vpack.c.bf16 %v1500, %v1493
        %v1627 = vpack.c.bf16 %v1501, %v1494
        %v1628 = vpack.c.bf16 %v1502, %v1495
        %v1629 = vpack.c.bf16 %v1510, %v1503
        %v1630 = vpack.c.bf16 %v1511, %v1504
        %v1631 = vpack.c.bf16 %v1512, %v1505
        %v1632 = vpack.c.bf16 %v1513, %v1506
        %v1633 = vpack.c.bf16 %v1514, %v1507
        %v1634 = vpack.c.bf16 %v1515, %v1508
        %v1635 = vpack.c.bf16 %v1516, %v1509
        %v1636 = vpack.c.bf16 %v1524, %v1517
        %v1637 = vpack.c.bf16 %v1525, %v1518
        %v1638 = vpack.c.bf16 %v1526, %v1519
        %v1639 = vpack.c.bf16 %v1527, %v1520
        %v1640 = vpack.c.bf16 %v1528, %v1521
        %v1641 = vpack.c.bf16 %v1529, %v1522
        %v1642 = vpack.c.bf16 %v1530, %v1523
        %v1643 = vld [vmem:[%s3] sm:$0xf]
        %v1644 = vld [vmem:[%s3 + $0x4] sm:$0xf]
        %v1645 = vld [vmem:[%s3 + $0x8] sm:$0xf]
        %v1646 = vld [vmem:[%s3 + $0xc] sm:$0xf]
        %v1647 = vld [vmem:[%s3 + $0x10] sm:$0xf]
        %v1648 = vld [vmem:[%s3 + $0x14] sm:$0xf]
        %v1649 = vld [vmem:[%s3 + $0x18] sm:$0xf]
        %v1650 = vld [vmem:[%s3 + $0x1c] sm:$0xf]
        %v1651 = vld [vmem:[%s3 + $0x20] sm:$0xf]
        %v1652 = vld [vmem:[%s3 + $0x24] sm:$0xf]
        %v1653 = vld [vmem:[%s3 + $0x28] sm:$0xf]
        %v1654 = vld [vmem:[%s3 + $0x2c] sm:$0xf]
        %v1655 = vld [vmem:[%s3 + $0x30] sm:$0xf]
        %v1656 = vld [vmem:[%s3 + $0x34] sm:$0xf]
        %v1657 = vld [vmem:[%s3 + $0x38] sm:$0xf]
        %v1658 = vld [vmem:[%s3 + $0x3c] sm:$0xf]
        %v1659 = vld [vmem:[%s3 + $0x40] sm:$0xf]
        %v1660 = vld [vmem:[%s3 + $0x44] sm:$0xf]
        %v1661 = vld [vmem:[%s3 + $0x48] sm:$0xf]
        %v1662 = vld [vmem:[%s3 + $0x4c] sm:$0xf]
        %v1663 = vld [vmem:[%s3 + $0x50] sm:$0xf]
        %v1664 = vld [vmem:[%s3 + $0x54] sm:$0xf]
        %v1665 = vld [vmem:[%s3 + $0x58] sm:$0xf]
        %v1666 = vld [vmem:[%s3 + $0x5c] sm:$0xf]
        %v1667 = vld [vmem:[%s3 + $0x60] sm:$0xf]
        %v1668 = vld [vmem:[%s3 + $0x64] sm:$0xf]
        %v1669 = vld [vmem:[%s3 + $0x68] sm:$0xf]
        %v1670 = vld [vmem:[%s3 + $0x6c] sm:$0xf]
        %v1671 = vld [vmem:[%s3 + $0x70] sm:$0xf]
        %v1672 = vld [vmem:[%s3 + $0x74] sm:$0xf]
        %v1673 = vld [vmem:[%s3 + $0x78] sm:$0xf]
        %v1674 = vld [vmem:[%s3 + $0x7c] sm:$0xf]
        %v1675 = vld [vmem:[%s3 + $0x80] sm:$0xf]
        %v1676 = vld [vmem:[%s3 + $0x84] sm:$0xf]
        %v1677 = vld [vmem:[%s3 + $0x88] sm:$0xf]
        %v1678 = vld [vmem:[%s3 + $0x8c] sm:$0xf]
        %v1679 = vld [vmem:[%s3 + $0x90] sm:$0xf]
        %v1680 = vld [vmem:[%s3 + $0x94] sm:$0xf]
        %v1681 = vld [vmem:[%s3 + $0x98] sm:$0xf]
        %v1682 = vld [vmem:[%s3 + $0x9c] sm:$0xf]
        %v1683 = vld [vmem:[%s3 + $0xa0] sm:$0xf]
        %v1684 = vld [vmem:[%s3 + $0xa4] sm:$0xf]
        %v1685 = vld [vmem:[%s3 + $0xa8] sm:$0xf]
        %v1686 = vld [vmem:[%s3 + $0xac] sm:$0xf]
        %v1687 = vld [vmem:[%s3 + $0xb0] sm:$0xf]
        %v1688 = vld [vmem:[%s3 + $0xb4] sm:$0xf]
        %v1689 = vld [vmem:[%s3 + $0xb8] sm:$0xf]
        %v1690 = vld [vmem:[%s3 + $0xbc] sm:$0xf]
        %v1691 = vld [vmem:[%s3 + $0xc0] sm:$0xf]
        %v1692 = vld [vmem:[%s3 + $0xc4] sm:$0xf]
        %v1693 = vld [vmem:[%s3 + $0xc8] sm:$0xf]
        %v1694 = vld [vmem:[%s3 + $0xcc] sm:$0xf]
        %v1695 = vld [vmem:[%s3 + $0xd0] sm:$0xf]
        %v1696 = vld [vmem:[%s3 + $0xd4] sm:$0xf]
        %v1697 = vld [vmem:[%s3 + $0xd8] sm:$0xf]
        %v1698 = vld [vmem:[%s3 + $0xdc] sm:$0xf]
        %v1699 = vld [vmem:[%s3 + $0xe0] sm:$0xf]
        %v1700 = vld [vmem:[%s3 + $0xe4] sm:$0xf]
        %v1701 = vld [vmem:[%s3 + $0xe8] sm:$0xf]
        %v1702 = vld [vmem:[%s3 + $0xec] sm:$0xf]
        %v1703 = vld [vmem:[%s3 + $0xf0] sm:$0xf]
        %v1704 = vld [vmem:[%s3 + $0xf4] sm:$0xf]
        %v1705 = vld [vmem:[%s3 + $0xf8] sm:$0xf]
        %v1706 = vld [vmem:[%s3 + $0xfc] sm:$0xf]
        %v1707 = vld [vmem:[%s3 + $0x100] sm:$0xf]
        %v1708 = vld [vmem:[%s3 + $0x104] sm:$0xf]
        %v1709 = vld [vmem:[%s3 + $0x108] sm:$0xf]
        %v1710 = vld [vmem:[%s3 + $0x10c] sm:$0xf]
        %v1711 = vld [vmem:[%s3 + $0x110] sm:$0xf]
        %v1712 = vld [vmem:[%s3 + $0x114] sm:$0xf]
        %v1713 = vld [vmem:[%s3 + $0x118] sm:$0xf]
        %v1714 = vld [vmem:[%s3 + $0x11c] sm:$0xf]
        %v1715 = vld [vmem:[%s3 + $0x120] sm:$0xf]
        %v1716 = vld [vmem:[%s3 + $0x124] sm:$0xf]
        %v1717 = vld [vmem:[%s3 + $0x128] sm:$0xf]
        %v1718 = vld [vmem:[%s3 + $0x12c] sm:$0xf]
        %v1719 = vld [vmem:[%s3 + $0x130] sm:$0xf]
        %v1720 = vld [vmem:[%s3 + $0x134] sm:$0xf]
        %v1721 = vld [vmem:[%s3 + $0x138] sm:$0xf]
        %v1722 = vld [vmem:[%s3 + $0x13c] sm:$0xf]
        %v1723 = vld [vmem:[%s3 + $0x140] sm:$0xf]
        %v1724 = vld [vmem:[%s3 + $0x144] sm:$0xf]
        %v1725 = vld [vmem:[%s3 + $0x148] sm:$0xf]
        %v1726 = vld [vmem:[%s3 + $0x14c] sm:$0xf]
        %v1727 = vld [vmem:[%s3 + $0x150] sm:$0xf]
        %v1728 = vld [vmem:[%s3 + $0x154] sm:$0xf]
        %v1729 = vld [vmem:[%s3 + $0x158] sm:$0xf]
        %v1730 = vld [vmem:[%s3 + $0x15c] sm:$0xf]
        %v1731 = vld [vmem:[%s3 + $0x160] sm:$0xf]
        %v1732 = vld [vmem:[%s3 + $0x164] sm:$0xf]
        %v1733 = vld [vmem:[%s3 + $0x168] sm:$0xf]
        %v1734 = vld [vmem:[%s3 + $0x16c] sm:$0xf]
        %v1735 = vld [vmem:[%s3 + $0x170] sm:$0xf]
        %v1736 = vld [vmem:[%s3 + $0x174] sm:$0xf]
        %v1737 = vld [vmem:[%s3 + $0x178] sm:$0xf]
        %v1738 = vld [vmem:[%s3 + $0x17c] sm:$0xf]
        %v1739 = vld [vmem:[%s3 + $0x180] sm:$0xf]
        %v1740 = vld [vmem:[%s3 + $0x184] sm:$0xf]
        %v1741 = vld [vmem:[%s3 + $0x188] sm:$0xf]
        %v1742 = vld [vmem:[%s3 + $0x18c] sm:$0xf]
        %v1743 = vld [vmem:[%s3 + $0x190] sm:$0xf]
        %v1744 = vld [vmem:[%s3 + $0x194] sm:$0xf]
        %v1745 = vld [vmem:[%s3 + $0x198] sm:$0xf]
        %v1746 = vld [vmem:[%s3 + $0x19c] sm:$0xf]
        %v1747 = vld [vmem:[%s3 + $0x1a0] sm:$0xf]
        %v1748 = vld [vmem:[%s3 + $0x1a4] sm:$0xf]
        %v1749 = vld [vmem:[%s3 + $0x1a8] sm:$0xf]
        %v1750 = vld [vmem:[%s3 + $0x1ac] sm:$0xf]
        %v1751 = vld [vmem:[%s3 + $0x1b0] sm:$0xf]
        %v1752 = vld [vmem:[%s3 + $0x1b4] sm:$0xf]
        %v1753 = vld [vmem:[%s3 + $0x1b8] sm:$0xf]
        %v1754 = vld [vmem:[%s3 + $0x1bc] sm:$0xf]
        %v1755 = vld [vmem:[%s4] sm:$0x1]
        %v1757 = vlaneseq
        %v1758 = vshrl.u32 %v1757, 7
        %v1759 = vsub.s32 0, %v1758
        %v1760 = vrot.slane %v1755, %v1759
        %v1874 = vunpack.c.l.b16 %v1643
        %v1875 = vunpack.c.l.b16 %v1644
        %v1876 = vunpack.c.l.b16 %v1645
        %v1877 = vunpack.c.l.b16 %v1646
        %v1878 = vunpack.c.l.b16 %v1647
        %v1879 = vunpack.c.l.b16 %v1648
        %v1880 = vunpack.c.l.b16 %v1649
        %v1881 = vunpack.c.l.b16 %v1650
        %v1882 = vunpack.c.l.b16 %v1651
        %v1883 = vunpack.c.l.b16 %v1652
        %v1884 = vunpack.c.l.b16 %v1653
        %v1885 = vunpack.c.l.b16 %v1654
        %v1886 = vunpack.c.l.b16 %v1655
        %v1887 = vunpack.c.l.b16 %v1656
        %v1888 = vunpack.c.l.b16 %v1657
        %v1889 = vunpack.c.l.b16 %v1658
        %v1890 = vunpack.c.l.b16 %v1659
        %v1891 = vunpack.c.l.b16 %v1660
        %v1892 = vunpack.c.l.b16 %v1661
        %v1893 = vunpack.c.l.b16 %v1662
        %v1894 = vunpack.c.l.b16 %v1663
        %v1895 = vunpack.c.l.b16 %v1664
        %v1896 = vunpack.c.l.b16 %v1665
        %v1897 = vunpack.c.l.b16 %v1666
        %v1898 = vunpack.c.l.b16 %v1667
        %v1899 = vunpack.c.l.b16 %v1668
        %v1900 = vunpack.c.l.b16 %v1669
        %v1901 = vunpack.c.l.b16 %v1670
        %v1902 = vunpack.c.l.b16 %v1671
        %v1903 = vunpack.c.l.b16 %v1672
        %v1904 = vunpack.c.l.b16 %v1673
        %v1905 = vunpack.c.l.b16 %v1674
        %v1906 = vunpack.c.l.b16 %v1675
        %v1907 = vunpack.c.l.b16 %v1676
        %v1908 = vunpack.c.l.b16 %v1677
        %v1909 = vunpack.c.l.b16 %v1678
        %v1910 = vunpack.c.l.b16 %v1679
        %v1911 = vunpack.c.l.b16 %v1680
        %v1912 = vunpack.c.l.b16 %v1681
        %v1913 = vunpack.c.l.b16 %v1682
        %v1914 = vunpack.c.l.b16 %v1683
        %v1915 = vunpack.c.l.b16 %v1684
        %v1916 = vunpack.c.l.b16 %v1685
        %v1917 = vunpack.c.l.b16 %v1686
        %v1918 = vunpack.c.l.b16 %v1687
        %v1919 = vunpack.c.l.b16 %v1688
        %v1920 = vunpack.c.l.b16 %v1689
        %v1921 = vunpack.c.l.b16 %v1690
        %v1922 = vunpack.c.l.b16 %v1691
        %v1923 = vunpack.c.l.b16 %v1692
        %v1924 = vunpack.c.l.b16 %v1693
        %v1925 = vunpack.c.l.b16 %v1694
        %v1926 = vunpack.c.l.b16 %v1695
        %v1927 = vunpack.c.l.b16 %v1696
        %v1928 = vunpack.c.l.b16 %v1697
        %v1929 = vunpack.c.l.b16 %v1698
        %v1930 = vunpack.c.l.b16 %v1699
        %v1931 = vunpack.c.l.b16 %v1700
        %v1932 = vunpack.c.l.b16 %v1701
        %v1933 = vunpack.c.l.b16 %v1702
        %v1934 = vunpack.c.l.b16 %v1703
        %v1935 = vunpack.c.l.b16 %v1704
        %v1936 = vunpack.c.l.b16 %v1705
        %v1937 = vunpack.c.l.b16 %v1706
        %v1938 = vunpack.c.l.b16 %v1707
        %v1939 = vunpack.c.l.b16 %v1708
        %v1940 = vunpack.c.l.b16 %v1709
        %v1941 = vunpack.c.l.b16 %v1710
        %v1942 = vunpack.c.l.b16 %v1711
        %v1943 = vunpack.c.l.b16 %v1712
        %v1944 = vunpack.c.l.b16 %v1713
        %v1945 = vunpack.c.l.b16 %v1714
        %v1946 = vunpack.c.l.b16 %v1715
        %v1947 = vunpack.c.l.b16 %v1716
        %v1948 = vunpack.c.l.b16 %v1717
        %v1949 = vunpack.c.l.b16 %v1718
        %v1950 = vunpack.c.l.b16 %v1719
        %v1951 = vunpack.c.l.b16 %v1720
        %v1952 = vunpack.c.l.b16 %v1721
        %v1953 = vunpack.c.l.b16 %v1722
        %v1954 = vunpack.c.l.b16 %v1723
        %v1955 = vunpack.c.l.b16 %v1724
        %v1956 = vunpack.c.l.b16 %v1725
        %v1957 = vunpack.c.l.b16 %v1726
        %v1958 = vunpack.c.l.b16 %v1727
        %v1959 = vunpack.c.l.b16 %v1728
        %v1960 = vunpack.c.l.b16 %v1729
        %v1961 = vunpack.c.l.b16 %v1730
        %v1962 = vunpack.c.l.b16 %v1731
        %v1963 = vunpack.c.l.b16 %v1732
        %v1964 = vunpack.c.l.b16 %v1733
        %v1965 = vunpack.c.l.b16 %v1734
        %v1966 = vunpack.c.l.b16 %v1735
        %v1967 = vunpack.c.l.b16 %v1736
        %v1968 = vunpack.c.l.b16 %v1737
        %v1969 = vunpack.c.l.b16 %v1738
        %v1970 = vunpack.c.l.b16 %v1739
        %v1971 = vunpack.c.l.b16 %v1740
        %v1972 = vunpack.c.l.b16 %v1741
        %v1973 = vunpack.c.l.b16 %v1742
        %v1974 = vunpack.c.l.b16 %v1743
        %v1975 = vunpack.c.l.b16 %v1744
        %v1976 = vunpack.c.l.b16 %v1745
        %v1977 = vunpack.c.l.b16 %v1746
        %v1978 = vunpack.c.l.b16 %v1747
        %v1979 = vunpack.c.l.b16 %v1748
        %v1980 = vunpack.c.l.b16 %v1749
        %v1981 = vunpack.c.l.b16 %v1750
        %v1982 = vunpack.c.l.b16 %v1751
        %v1983 = vunpack.c.l.b16 %v1752
        %v1984 = vunpack.c.l.b16 %v1753
        %v1985 = vunpack.c.l.b16 %v1754
        %v1986 = vpack.c.b16 %v1875, %v1874
        %v1987 = vpack.c.b16 %v1877, %v1876
        %v1988 = vpack.c.b16 %v1879, %v1878
        %v1989 = vpack.c.b16 %v1881, %v1880
        %v1990 = vpack.c.b16 %v1883, %v1882
        %v1991 = vpack.c.b16 %v1885, %v1884
        %v1992 = vpack.c.b16 %v1887, %v1886
        %v1993 = vpack.c.b16 %v1889, %v1888
        %v1994 = vpack.c.b16 %v1891, %v1890
        %v1995 = vpack.c.b16 %v1893, %v1892
        %v1996 = vpack.c.b16 %v1895, %v1894
        %v1997 = vpack.c.b16 %v1897, %v1896
        %v1998 = vpack.c.b16 %v1899, %v1898
        %v1999 = vpack.c.b16 %v1901, %v1900
        %v2000 = vpack.c.b16 %v1903, %v1902
        %v2001 = vpack.c.b16 %v1905, %v1904
        %v2002 = vpack.c.b16 %v1907, %v1906
        %v2003 = vpack.c.b16 %v1909, %v1908
        %v2004 = vpack.c.b16 %v1911, %v1910
        %v2005 = vpack.c.b16 %v1913, %v1912
        %v2006 = vpack.c.b16 %v1915, %v1914
        %v2007 = vpack.c.b16 %v1917, %v1916
        %v2008 = vpack.c.b16 %v1919, %v1918
        %v2009 = vpack.c.b16 %v1921, %v1920
        %v2010 = vpack.c.b16 %v1923, %v1922
        %v2011 = vpack.c.b16 %v1925, %v1924
        %v2012 = vpack.c.b16 %v1927, %v1926
        %v2013 = vpack.c.b16 %v1929, %v1928
        %v2014 = vpack.c.b16 %v1931, %v1930
        %v2015 = vpack.c.b16 %v1933, %v1932
        %v2016 = vpack.c.b16 %v1935, %v1934
        %v2017 = vpack.c.b16 %v1937, %v1936
        %v2018 = vpack.c.b16 %v1939, %v1938
        %v2019 = vpack.c.b16 %v1941, %v1940
        %v2020 = vpack.c.b16 %v1943, %v1942
        %v2021 = vpack.c.b16 %v1945, %v1944
        %v2022 = vpack.c.b16 %v1947, %v1946
        %v2023 = vpack.c.b16 %v1949, %v1948
        %v2024 = vpack.c.b16 %v1951, %v1950
        %v2025 = vpack.c.b16 %v1953, %v1952
        %v2026 = vpack.c.b16 %v1955, %v1954
        %v2027 = vpack.c.b16 %v1957, %v1956
        %v2028 = vpack.c.b16 %v1959, %v1958
        %v2029 = vpack.c.b16 %v1961, %v1960
        %v2030 = vpack.c.b16 %v1963, %v1962
        %v2031 = vpack.c.b16 %v1965, %v1964
        %v2032 = vpack.c.b16 %v1967, %v1966
        %v2033 = vpack.c.b16 %v1969, %v1968
        %v2034 = vpack.c.b16 %v1971, %v1970
        %v2035 = vpack.c.b16 %v1973, %v1972
        %v2036 = vpack.c.b16 %v1975, %v1974
        %v2037 = vpack.c.b16 %v1977, %v1976
        %v2038 = vpack.c.b16 %v1979, %v1978
        %v2039 = vpack.c.b16 %v1981, %v1980
        %v2040 = vpack.c.b16 %v1983, %v1982
        %v2041 = vpack.c.b16 %v1985, %v1984
        %2098 = vmatprep.subr.bf16.mxu0 0
        %2099 = vmatpush1.bf16.msra.mxu0 %v1986
        %2100 = vmatprep.subr.bf16.mxu0 0
        %2101 = vmatpush1.bf16.msra.mxu0 %v1987
        %2102 = vmatprep.subr.bf16.mxu0 0
        %2103 = vmatpush1.bf16.msra.mxu0 %v1988
        %2104 = vmatprep.subr.bf16.mxu0 0
        %2105 = vmatpush1.bf16.msra.mxu0 %v1989
        %2106 = vmatprep.subr.bf16.mxu0 0
        %2107 = vmatpush1.bf16.msra.mxu0 %v1990
        %2108 = vmatprep.subr.bf16.mxu0 0
        %2109 = vmatpush1.bf16.msra.mxu0 %v1991
        %2110 = vmatprep.subr.bf16.mxu0 0
        %2111 = vmatpush1.bf16.msra.mxu0 %v1992
        %2112 = vmatprep.subr.bf16.mxu0 0
        %2113 = vmatpush1.bf16.msra.mxu0 %v1993
        %2114 = vmatprep.subr.bf16.mxu0 0
        %2115 = vmatpush1.bf16.msra.mxu0 %v1994
        %2116 = vmatprep.subr.bf16.mxu0 0
        %2117 = vmatpush1.bf16.msra.mxu0 %v1995
        %2118 = vmatprep.subr.bf16.mxu0 0
        %2119 = vmatpush1.bf16.msra.mxu0 %v1996
        %2120 = vmatprep.subr.bf16.mxu0 0
        %2121 = vmatpush1.bf16.msra.mxu0 %v1997
        %2122 = vmatprep.subr.bf16.mxu0 0
        %2123 = vmatpush1.bf16.msra.mxu0 %v1998
        %2124 = vmatprep.subr.bf16.mxu0 0
        %2125 = vmatpush1.bf16.msra.mxu0 %v1999
        %2126 = vmatprep.subr.bf16.mxu0 0
        %2127 = vmatpush1.bf16.msra.mxu0 %v2000
        %2128 = vmatprep.subr.bf16.mxu0 0
        %2129 = vmatpush1.bf16.msra.mxu0 %v2001
        %2130 = vmatprep.mubr.bf16.mxu0 %v1532
        %2131 = vmatmul.mubr.bf16.gmra.mrb[0].mxu0 %v1531
        %v2132 = vpop.f32.mrb[0].mxu0
        %v2133 = vadd.f32 %v1760, %v2132
        %v2134 = vpop.f32.mrb[0].mxu0
        %v2135 = vpop.f32.mrb[0].mxu0
        %v2136 = vadd.f32 %v1760, %v2135
        %v2137 = vpop.f32.mrb[0].mxu0
        %2138 = vmatprep.mubr.bf16.mxu0 %v1539
        %2139 = vmatmul.mubr.bf16.gmra.mrb[0].mxu0 %v1538
        %v2140 = vpop.f32.mrb[0].mxu0
        %v2141 = vadd.f32 %v1760, %v2140
        %v2142 = vpop.f32.mrb[0].mxu0
        %v2143 = vpop.f32.mrb[0].mxu0
        %v2144 = vadd.f32 %v1760, %v2143
        %v2145 = vpop.f32.mrb[0].mxu0
        %2146 = vmatprep.mubr.bf16.mxu0 %v1546
        %2147 = vmatmul.mubr.bf16.gmra.mrb[0].mxu0 %v1545
        %v2148 = vpop.f32.mrb[0].mxu0
        %v2149 = vadd.f32 %v1760, %v2148
        %v2150 = vpop.f32.mrb[0].mxu0
        %v2151 = vpop.f32.mrb[0].mxu0
        %v2152 = vadd.f32 %v1760, %v2151
        %v2153 = vpop.f32.mrb[0].mxu0
        %2154 = vmatprep.mubr.bf16.mxu0 %v1553
        %2155 = vmatmul.mubr.bf16.gmra.mrb[0].mxu0 %v1552
        %v2156 = vpop.f32.mrb[0].mxu0
        %v2157 = vadd.f32 %v1760, %v2156
        %v2158 = vpop.f32.mrb[0].mxu0
        %v2159 = vpop.f32.mrb[0].mxu0
        %v2160 = vadd.f32 %v1760, %v2159
        %v2161 = vpop.f32.mrb[0].mxu0
        %2162 = vmatprep.mubr.bf16.mxu0 %v1560
        %2163 = vmatmul.mubr.bf16.gmra.mrb[0].mxu0 %v1559
        %v2164 = vpop.f32.mrb[0].mxu0
        %v2165 = vadd.f32 %v1760, %v2164
        %v2166 = vpop.f32.mrb[0].mxu0
        %v2167 = vpop.f32.mrb[0].mxu0
        %v2168 = vadd.f32 %v1760, %v2167
        %v2169 = vpop.f32.mrb[0].mxu0
        %2170 = vmatprep.mubr.bf16.mxu0 %v1567
        %2171 = vmatmul.mubr.bf16.gmra.mrb[0].mxu0 %v1566
        %v2172 = vpop.f32.mrb[0].mxu0
        %v2173 = vadd.f32 %v1760, %v2172
        %v2174 = vpop.f32.mrb[0].mxu0
        %v2175 = vpop.f32.mrb[0].mxu0
        %v2176 = vadd.f32 %v1760, %v2175
        %v2177 = vpop.f32.mrb[0].mxu0
        %2178 = vmatprep.mubr.bf16.mxu0 %v1574
        %2179 = vmatmul.mubr.bf16.gmra.mrb[0].mxu0 %v1573
        %v2180 = vpop.f32.mrb[0].mxu0
        %v2181 = vadd.f32 %v1760, %v2180
        %v2182 = vpop.f32.mrb[0].mxu0
        %v2183 = vpop.f32.mrb[0].mxu0
        %v2184 = vadd.f32 %v1760, %v2183
        %v2185 = vpop.f32.mrb[0].mxu0
        %2186 = vmatprep.mubr.bf16.mxu0 %v1581
        %2187 = vmatmul.mubr.bf16.gmra.mrb[0].mxu0 %v1580
        %v2188 = vpop.f32.mrb[0].mxu0
        %v2189 = vadd.f32 %v1760, %v2188
        %v2190 = vpop.f32.mrb[0].mxu0
        %v2191 = vpop.f32.mrb[0].mxu0
        %v2192 = vadd.f32 %v1760, %v2191
        %v2193 = vpop.f32.mrb[0].mxu0
        %2194 = vmatprep.mubr.bf16.mxu0 %v1588
        %2195 = vmatmul.mubr.bf16.gmra.mrb[0].mxu0 %v1587
        %v2196 = vpop.f32.mrb[0].mxu0
        %v2197 = vadd.f32 %v1760, %v2196
        %v2198 = vpop.f32.mrb[0].mxu0
        %v2199 = vpop.f32.mrb[0].mxu0
        %v2200 = vadd.f32 %v1760, %v2199
        %v2201 = vpop.f32.mrb[0].mxu0
        %2202 = vmatprep.mubr.bf16.mxu0 %v1595
        %2203 = vmatmul.mubr.bf16.gmra.mrb[0].mxu0 %v1594
        %v2204 = vpop.f32.mrb[0].mxu0
        %v2205 = vadd.f32 %v1760, %v2204
        %v2206 = vpop.f32.mrb[0].mxu0
        %v2207 = vpop.f32.mrb[0].mxu0
        %v2208 = vadd.f32 %v1760, %v2207
        %v2209 = vpop.f32.mrb[0].mxu0
        %2210 = vmatprep.mubr.bf16.mxu0 %v1602
        %2211 = vmatmul.mubr.bf16.gmra.mrb[0].mxu0 %v1601
        %v2212 = vpop.f32.mrb[0].mxu0
        %v2213 = vadd.f32 %v1760, %v2212
        %v2214 = vpop.f32.mrb[0].mxu0
        %v2215 = vpop.f32.mrb[0].mxu0
        %v2216 = vadd.f32 %v1760, %v2215
        %v2217 = vpop.f32.mrb[0].mxu0
        %2218 = vmatprep.mubr.bf16.mxu0 %v1609
        %2219 = vmatmul.mubr.bf16.gmra.mrb[0].mxu0 %v1608
        %v2220 = vpop.f32.mrb[0].mxu0
        %v2221 = vadd.f32 %v1760, %v2220
        %v2222 = vpop.f32.mrb[0].mxu0
        %v2223 = vpop.f32.mrb[0].mxu0
        %v2224 = vadd.f32 %v1760, %v2223
        %v2225 = vpop.f32.mrb[0].mxu0
        %2226 = vmatprep.mubr.bf16.mxu0 %v1616
        %2227 = vmatmul.mubr.bf16.gmra.mrb[0].mxu0 %v1615
        %v2228 = vpop.f32.mrb[0].mxu0
        %v2229 = vadd.f32 %v1760, %v2228
        %v2230 = vpop.f32.mrb[0].mxu0
        %v2231 = vpop.f32.mrb[0].mxu0
        %v2232 = vadd.f32 %v1760, %v2231
        %v2233 = vpop.f32.mrb[0].mxu0
        %2234 = vmatprep.mubr.bf16.mxu0 %v1623
        %2235 = vmatmul.mubr.bf16.gmra.mrb[0].mxu0 %v1622
        %v2236 = vpop.f32.mrb[0].mxu0
        %v2237 = vadd.f32 %v1760, %v2236
        %v2238 = vpop.f32.mrb[0].mxu0
        %v2239 = vpop.f32.mrb[0].mxu0
        %v2240 = vadd.f32 %v1760, %v2239
        %v2241 = vpop.f32.mrb[0].mxu0
        %2242 = vmatprep.mubr.bf16.mxu0 %v1630
        %2243 = vmatmul.mubr.bf16.gmra.mrb[0].mxu0 %v1629
        %v2244 = vpop.f32.mrb[0].mxu0
        %v2245 = vadd.f32 %v1760, %v2244
        %v2246 = vpop.f32.mrb[0].mxu0
        %v2247 = vpop.f32.mrb[0].mxu0
        %v2248 = vadd.f32 %v1760, %v2247
        %v2249 = vpop.f32.mrb[0].mxu0
        %2250 = vmatprep.mubr.bf16.mxu0 %v1637
        %2251 = vmatmul.mubr.bf16.gmra.mrb[0].mxu0 %v1636
        %v2252 = vpop.f32.mrb[0].mxu0
        %v2253 = vadd.f32 %v1760, %v2252
        %v2254 = vpop.f32.mrb[0].mxu0
        %v2255 = vpop.f32.mrb[0].mxu0
        %v2256 = vadd.f32 %v1760, %v2255
        %v2257 = vpop.f32.mrb[0].mxu0
        %2258 = vdwg.mxu0
        %2259 = vmatprep.subr.bf16.mxu0 0
        %2260 = vmatpush1.bf16.msra.mxu0 %v2002
        %2261 = vmatprep.subr.bf16.mxu0 0
        %2262 = vmatpush1.bf16.msra.mxu0 %v2003
        %2263 = vmatprep.subr.bf16.mxu0 0
        %2264 = vmatpush1.bf16.msra.mxu0 %v2004
        %2265 = vmatprep.subr.bf16.mxu0 0
        %2266 = vmatpush1.bf16.msra.mxu0 %v2005
        %2267 = vmatprep.subr.bf16.mxu0 0
        %2268 = vmatpush1.bf16.msra.mxu0 %v2006
        %2269 = vmatprep.subr.bf16.mxu0 0
        %2270 = vmatpush1.bf16.msra.mxu0 %v2007
        %2271 = vmatprep.subr.bf16.mxu0 0
        %2272 = vmatpush1.bf16.msra.mxu0 %v2008
        %2273 = vmatprep.subr.bf16.mxu0 0
        %2274 = vmatpush1.bf16.msra.mxu0 %v2009
        %2275 = vmatprep.subr.bf16.mxu0 0
        %2276 = vmatpush1.bf16.msra.mxu0 %v2010
        %2277 = vmatprep.subr.bf16.mxu0 0
        %2278 = vmatpush1.bf16.msra.mxu0 %v2011
        %2279 = vmatprep.subr.bf16.mxu0 0
        %2280 = vmatpush1.bf16.msra.mxu0 %v2012
        %2281 = vmatprep.subr.bf16.mxu0 0
        %2282 = vmatpush1.bf16.msra.mxu0 %v2013
        %2283 = vmatprep.subr.bf16.mxu0 0
        %2284 = vmatpush1.bf16.msra.mxu0 %v2014
        %2285 = vmatprep.subr.bf16.mxu0 0
        %2286 = vmatpush1.bf16.msra.mxu0 %v2015
        %2287 = vmatprep.subr.bf16.mxu0 0
        %2288 = vmatpush1.bf16.msra.mxu0 %v2016
        %2289 = vmatprep.subr.bf16.mxu0 0
        %2290 = vmatpush1.bf16.msra.mxu0 %v2017
        %2291 = vmatprep.mubr.bf16.mxu0 %v1534
        %2292 = vmatmul.mubr.bf16.gmra.mrb[0].mxu0 %v1533
        %v2293 = vpop.f32.mrb[0].mxu0
        %v2294 = vadd.f32 %v2133, %v2293
        %v2295 = vpop.f32.mrb[0].mxu0
        %v2296 = vpop.f32.mrb[0].mxu0
        %v2297 = vadd.f32 %v2136, %v2296
        %v2298 = vpop.f32.mrb[0].mxu0
        %2299 = vmatprep.mubr.bf16.mxu0 %v1541
        %2300 = vmatmul.mubr.bf16.gmra.mrb[0].mxu0 %v1540
        %v2301 = vpop.f32.mrb[0].mxu0
        %v2302 = vadd.f32 %v2141, %v2301
        %v2303 = vpop.f32.mrb[0].mxu0
        %v2304 = vpop.f32.mrb[0].mxu0
        %v2305 = vadd.f32 %v2144, %v2304
        %v2306 = vpop.f32.mrb[0].mxu0
        %2307 = vmatprep.mubr.bf16.mxu0 %v1548
        %2308 = vmatmul.mubr.bf16.gmra.mrb[0].mxu0 %v1547
        %v2309 = vpop.f32.mrb[0].mxu0
        %v2310 = vadd.f32 %v2149, %v2309
        %v2311 = vpop.f32.mrb[0].mxu0
        %v2312 = vpop.f32.mrb[0].mxu0
        %v2313 = vadd.f32 %v2152, %v2312
        %v2314 = vpop.f32.mrb[0].mxu0
        %2315 = vmatprep.mubr.bf16.mxu0 %v1555
        %2316 = vmatmul.mubr.bf16.gmra.mrb[0].mxu0 %v1554
        %v2317 = vpop.f32.mrb[0].mxu0
        %v2318 = vadd.f32 %v2157, %v2317
        %v2319 = vpop.f32.mrb[0].mxu0
        %v2320 = vpop.f32.mrb[0].mxu0
        %v2321 = vadd.f32 %v2160, %v2320
        %v2322 = vpop.f32.mrb[0].mxu0
        %2323 = vmatprep.mubr.bf16.mxu0 %v1562
        %2324 = vmatmul.mubr.bf16.gmra.mrb[0].mxu0 %v1561
        %v2325 = vpop.f32.mrb[0].mxu0
        %v2326 = vadd.f32 %v2165, %v2325
        %v2327 = vpop.f32.mrb[0].mxu0
        %v2328 = vpop.f32.mrb[0].mxu0
        %v2329 = vadd.f32 %v2168, %v2328
        %v2330 = vpop.f32.mrb[0].mxu0
        %2331 = vmatprep.mubr.bf16.mxu0 %v1569
        %2332 = vmatmul.mubr.bf16.gmra.mrb[0].mxu0 %v1568
        %v2333 = vpop.f32.mrb[0].mxu0
        %v2334 = vadd.f32 %v2173, %v2333
        %v2335 = vpop.f32.mrb[0].mxu0
        %v2336 = vpop.f32.mrb[0].mxu0
        %v2337 = vadd.f32 %v2176, %v2336
        %v2338 = vpop.f32.mrb[0].mxu0
        %2339 = vmatprep.mubr.bf16.mxu0 %v1576
        %2340 = vmatmul.mubr.bf16.gmra.mrb[0].mxu0 %v1575
        %v2341 = vpop.f32.mrb[0].mxu0
        %v2342 = vadd.f32 %v2181, %v2341
        %v2343 = vpop.f32.mrb[0].mxu0
        %v2344 = vpop.f32.mrb[0].mxu0
        %v2345 = vadd.f32 %v2184, %v2344
        %v2346 = vpop.f32.mrb[0].mxu0
        %2347 = vmatprep.mubr.bf16.mxu0 %v1583
        %2348 = vmatmul.mubr.bf16.gmra.mrb[0].mxu0 %v1582
        %v2349 = vpop.f32.mrb[0].mxu0
        %v2350 = vadd.f32 %v2189, %v2349
        %v2351 = vpop.f32.mrb[0].mxu0
        %v2352 = vpop.f32.mrb[0].mxu0
        %v2353 = vadd.f32 %v2192, %v2352
        %v2354 = vpop.f32.mrb[0].mxu0
        %2355 = vmatprep.mubr.bf16.mxu0 %v1590
        %2356 = vmatmul.mubr.bf16.gmra.mrb[0].mxu0 %v1589
        %v2357 = vpop.f32.mrb[0].mxu0
        %v2358 = vadd.f32 %v2197, %v2357
        %v2359 = vpop.f32.mrb[0].mxu0
        %v2360 = vpop.f32.mrb[0].mxu0
        %v2361 = vadd.f32 %v2200, %v2360
        %v2362 = vpop.f32.mrb[0].mxu0
        %2363 = vmatprep.mubr.bf16.mxu0 %v1597
        %2364 = vmatmul.mubr.bf16.gmra.mrb[0].mxu0 %v1596
        %v2365 = vpop.f32.mrb[0].mxu0
        %v2366 = vadd.f32 %v2205, %v2365
        %v2367 = vpop.f32.mrb[0].mxu0
        %v2368 = vpop.f32.mrb[0].mxu0
        %v2369 = vadd.f32 %v2208, %v2368
        %v2370 = vpop.f32.mrb[0].mxu0
        %2371 = vmatprep.mubr.bf16.mxu0 %v1604
        %2372 = vmatmul.mubr.bf16.gmra.mrb[0].mxu0 %v1603
        %v2373 = vpop.f32.mrb[0].mxu0
        %v2374 = vadd.f32 %v2213, %v2373
        %v2375 = vpop.f32.mrb[0].mxu0
        %v2376 = vpop.f32.mrb[0].mxu0
        %v2377 = vadd.f32 %v2216, %v2376
        %v2378 = vpop.f32.mrb[0].mxu0
        %2379 = vmatprep.mubr.bf16.mxu0 %v1611
        %2380 = vmatmul.mubr.bf16.gmra.mrb[0].mxu0 %v1610
        %v2381 = vpop.f32.mrb[0].mxu0
        %v2382 = vadd.f32 %v2221, %v2381
        %v2383 = vpop.f32.mrb[0].mxu0
        %v2384 = vpop.f32.mrb[0].mxu0
        %v2385 = vadd.f32 %v2224, %v2384
        %v2386 = vpop.f32.mrb[0].mxu0
        %2387 = vmatprep.mubr.bf16.mxu0 %v1618
        %2388 = vmatmul.mubr.bf16.gmra.mrb[0].mxu0 %v1617
        %v2389 = vpop.f32.mrb[0].mxu0
        %v2390 = vadd.f32 %v2229, %v2389
        %v2391 = vpop.f32.mrb[0].mxu0
        %v2392 = vpop.f32.mrb[0].mxu0
        %v2393 = vadd.f32 %v2232, %v2392
        %v2394 = vpop.f32.mrb[0].mxu0
        %2395 = vmatprep.mubr.bf16.mxu0 %v1625
        %2396 = vmatmul.mubr.bf16.gmra.mrb[0].mxu0 %v1624
        %v2397 = vpop.f32.mrb[0].mxu0
        %v2398 = vadd.f32 %v2237, %v2397
        %v2399 = vpop.f32.mrb[0].mxu0
        %v2400 = vpop.f32.mrb[0].mxu0
        %v2401 = vadd.f32 %v2240, %v2400
        %v2402 = vpop.f32.mrb[0].mxu0
        %2403 = vmatprep.mubr.bf16.mxu0 %v1632
        %2404 = vmatmul.mubr.bf16.gmra.mrb[0].mxu0 %v1631
        %v2405 = vpop.f32.mrb[0].mxu0
        %v2406 = vadd.f32 %v2245, %v2405
        %v2407 = vpop.f32.mrb[0].mxu0
        %v2408 = vpop.f32.mrb[0].mxu0
        %v2409 = vadd.f32 %v2248, %v2408
        %v2410 = vpop.f32.mrb[0].mxu0
        %2411 = vmatprep.mubr.bf16.mxu0 %v1639
        %2412 = vmatmul.mubr.bf16.gmra.mrb[0].mxu0 %v1638
        %v2413 = vpop.f32.mrb[0].mxu0
        %v2414 = vadd.f32 %v2253, %v2413
        %v2415 = vpop.f32.mrb[0].mxu0
        %v2416 = vpop.f32.mrb[0].mxu0
        %v2417 = vadd.f32 %v2256, %v2416
        %v2418 = vpop.f32.mrb[0].mxu0
        %2419 = vdwg.mxu0
        %2420 = vmatprep.subr.bf16.mxu0 0
        %2421 = vmatpush1.bf16.msra.mxu0 %v2018
        %2422 = vmatprep.subr.bf16.mxu0 0
        %2423 = vmatpush1.bf16.msra.mxu0 %v2019
        %2424 = vmatprep.subr.bf16.mxu0 0
        %2425 = vmatpush1.bf16.msra.mxu0 %v2020
        %2426 = vmatprep.subr.bf16.mxu0 0
        %2427 = vmatpush1.bf16.msra.mxu0 %v2021
        %2428 = vmatprep.subr.bf16.mxu0 0
        %2429 = vmatpush1.bf16.msra.mxu0 %v2022
        %2430 = vmatprep.subr.bf16.mxu0 0
        %2431 = vmatpush1.bf16.msra.mxu0 %v2023
        %2432 = vmatprep.subr.bf16.mxu0 0
        %2433 = vmatpush1.bf16.msra.mxu0 %v2024
        %2434 = vmatprep.subr.bf16.mxu0 0
        %2435 = vmatpush1.bf16.msra.mxu0 %v2025
        %2436 = vmatprep.subr.bf16.mxu0 0
        %2437 = vmatpush1.bf16.msra.mxu0 %v2026
        %2438 = vmatprep.subr.bf16.mxu0 0
        %2439 = vmatpush1.bf16.msra.mxu0 %v2027
        %2440 = vmatprep.subr.bf16.mxu0 0
        %2441 = vmatpush1.bf16.msra.mxu0 %v2028
        %2442 = vmatprep.subr.bf16.mxu0 0
        %2443 = vmatpush1.bf16.msra.mxu0 %v2029
        %2444 = vmatprep.subr.bf16.mxu0 0
        %2445 = vmatpush1.bf16.msra.mxu0 %v2030
        %2446 = vmatprep.subr.bf16.mxu0 0
        %2447 = vmatpush1.bf16.msra.mxu0 %v2031
        %2448 = vmatprep.subr.bf16.mxu0 0
        %2449 = vmatpush1.bf16.msra.mxu0 %v2032
        %2450 = vmatprep.subr.bf16.mxu0 0
        %2451 = vmatpush1.bf16.msra.mxu0 %v2033
        %2452 = vmatprep.mubr.bf16.mxu0 %v1536
        %2453 = vmatmul.mubr.bf16.gmra.mrb[0].mxu0 %v1535
        %v2454 = vpop.f32.mrb[0].mxu0
        %v2455 = vadd.f32 %v2294, %v2454
        %v2456 = vpop.f32.mrb[0].mxu0
        %v2457 = vpop.f32.mrb[0].mxu0
        %v2458 = vadd.f32 %v2297, %v2457
        %v2459 = vpop.f32.mrb[0].mxu0
        %2460 = vmatprep.mubr.bf16.mxu0 %v1543
        %2461 = vmatmul.mubr.bf16.gmra.mrb[0].mxu0 %v1542
        %v2462 = vpop.f32.mrb[0].mxu0
        %v2463 = vadd.f32 %v2302, %v2462
        %v2464 = vpop.f32.mrb[0].mxu0
        %v2465 = vpop.f32.mrb[0].mxu0
        %v2466 = vadd.f32 %v2305, %v2465
        %v2467 = vpop.f32.mrb[0].mxu0
        %2468 = vmatprep.mubr.bf16.mxu0 %v1550
        %2469 = vmatmul.mubr.bf16.gmra.mrb[0].mxu0 %v1549
        %v2470 = vpop.f32.mrb[0].mxu0
        %v2471 = vadd.f32 %v2310, %v2470
        %v2472 = vpop.f32.mrb[0].mxu0
        %v2473 = vpop.f32.mrb[0].mxu0
        %v2474 = vadd.f32 %v2313, %v2473
        %v2475 = vpop.f32.mrb[0].mxu0
        %2476 = vmatprep.mubr.bf16.mxu0 %v1557
        %2477 = vmatmul.mubr.bf16.gmra.mrb[0].mxu0 %v1556
        %v2478 = vpop.f32.mrb[0].mxu0
        %v2479 = vadd.f32 %v2318, %v2478
        %v2480 = vpop.f32.mrb[0].mxu0
        %v2481 = vpop.f32.mrb[0].mxu0
        %v2482 = vadd.f32 %v2321, %v2481
        %v2483 = vpop.f32.mrb[0].mxu0
        %2484 = vmatprep.mubr.bf16.mxu0 %v1564
        %2485 = vmatmul.mubr.bf16.gmra.mrb[0].mxu0 %v1563
        %v2486 = vpop.f32.mrb[0].mxu0
        %v2487 = vadd.f32 %v2326, %v2486
        %v2488 = vpop.f32.mrb[0].mxu0
        %v2489 = vpop.f32.mrb[0].mxu0
        %v2490 = vadd.f32 %v2329, %v2489
        %v2491 = vpop.f32.mrb[0].mxu0
        %2492 = vmatprep.mubr.bf16.mxu0 %v1571
        %2493 = vmatmul.mubr.bf16.gmra.mrb[0].mxu0 %v1570
        %v2494 = vpop.f32.mrb[0].mxu0
        %v2495 = vadd.f32 %v2334, %v2494
        %v2496 = vpop.f32.mrb[0].mxu0
        %v2497 = vpop.f32.mrb[0].mxu0
        %v2498 = vadd.f32 %v2337, %v2497
        %v2499 = vpop.f32.mrb[0].mxu0
        %2500 = vmatprep.mubr.bf16.mxu0 %v1578
        %2501 = vmatmul.mubr.bf16.gmra.mrb[0].mxu0 %v1577
        %v2502 = vpop.f32.mrb[0].mxu0
        %v2503 = vadd.f32 %v2342, %v2502
        %v2504 = vpop.f32.mrb[0].mxu0
        %v2505 = vpop.f32.mrb[0].mxu0
        %v2506 = vadd.f32 %v2345, %v2505
        %v2507 = vpop.f32.mrb[0].mxu0
        %2508 = vmatprep.mubr.bf16.mxu0 %v1585
        %2509 = vmatmul.mubr.bf16.gmra.mrb[0].mxu0 %v1584
        %v2510 = vpop.f32.mrb[0].mxu0
        %v2511 = vadd.f32 %v2350, %v2510
        %v2512 = vpop.f32.mrb[0].mxu0
        %v2513 = vpop.f32.mrb[0].mxu0
        %v2514 = vadd.f32 %v2353, %v2513
        %v2515 = vpop.f32.mrb[0].mxu0
        %2516 = vmatprep.mubr.bf16.mxu0 %v1592
        %2517 = vmatmul.mubr.bf16.gmra.mrb[0].mxu0 %v1591
        %v2518 = vpop.f32.mrb[0].mxu0
        %v2519 = vadd.f32 %v2358, %v2518
        %v2520 = vpop.f32.mrb[0].mxu0
        %v2521 = vpop.f32.mrb[0].mxu0
        %v2522 = vadd.f32 %v2361, %v2521
        %v2523 = vpop.f32.mrb[0].mxu0
        %2524 = vmatprep.mubr.bf16.mxu0 %v1599
        %2525 = vmatmul.mubr.bf16.gmra.mrb[0].mxu0 %v1598
        %v2526 = vpop.f32.mrb[0].mxu0
        %v2527 = vadd.f32 %v2366, %v2526
        %v2528 = vpop.f32.mrb[0].mxu0
        %v2529 = vpop.f32.mrb[0].mxu0
        %v2530 = vadd.f32 %v2369, %v2529
        %v2531 = vpop.f32.mrb[0].mxu0
        %2532 = vmatprep.mubr.bf16.mxu0 %v1606
        %2533 = vmatmul.mubr.bf16.gmra.mrb[0].mxu0 %v1605
        %v2534 = vpop.f32.mrb[0].mxu0
        %v2535 = vadd.f32 %v2374, %v2534
        %v2536 = vpop.f32.mrb[0].mxu0
        %v2537 = vpop.f32.mrb[0].mxu0
        %v2538 = vadd.f32 %v2377, %v2537
        %v2539 = vpop.f32.mrb[0].mxu0
        %2540 = vmatprep.mubr.bf16.mxu0 %v1613
        %2541 = vmatmul.mubr.bf16.gmra.mrb[0].mxu0 %v1612
        %v2542 = vpop.f32.mrb[0].mxu0
        %v2543 = vadd.f32 %v2382, %v2542
        %v2544 = vpop.f32.mrb[0].mxu0
        %v2545 = vpop.f32.mrb[0].mxu0
        %v2546 = vadd.f32 %v2385, %v2545
        %v2547 = vpop.f32.mrb[0].mxu0
        %2548 = vmatprep.mubr.bf16.mxu0 %v1620
        %2549 = vmatmul.mubr.bf16.gmra.mrb[0].mxu0 %v1619
        %v2550 = vpop.f32.mrb[0].mxu0
        %v2551 = vadd.f32 %v2390, %v2550
        %v2552 = vpop.f32.mrb[0].mxu0
        %v2553 = vpop.f32.mrb[0].mxu0
        %v2554 = vadd.f32 %v2393, %v2553
        %v2555 = vpop.f32.mrb[0].mxu0
        %2556 = vmatprep.mubr.bf16.mxu0 %v1627
        %2557 = vmatmul.mubr.bf16.gmra.mrb[0].mxu0 %v1626
        %v2558 = vpop.f32.mrb[0].mxu0
        %v2559 = vadd.f32 %v2398, %v2558
        %v2560 = vpop.f32.mrb[0].mxu0
        %v2561 = vpop.f32.mrb[0].mxu0
        %v2562 = vadd.f32 %v2401, %v2561
        %v2563 = vpop.f32.mrb[0].mxu0
        %2564 = vmatprep.mubr.bf16.mxu0 %v1634
        %2565 = vmatmul.mubr.bf16.gmra.mrb[0].mxu0 %v1633
        %v2566 = vpop.f32.mrb[0].mxu0
        %v2567 = vadd.f32 %v2406, %v2566
        %v2568 = vpop.f32.mrb[0].mxu0
        %v2569 = vpop.f32.mrb[0].mxu0
        %v2570 = vadd.f32 %v2409, %v2569
        %v2571 = vpop.f32.mrb[0].mxu0
        %2572 = vmatprep.mubr.bf16.mxu0 %v1641
        %2573 = vmatmul.mubr.bf16.gmra.mrb[0].mxu0 %v1640
        %v2574 = vpop.f32.mrb[0].mxu0
        %v2575 = vadd.f32 %v2414, %v2574
        %v2576 = vpop.f32.mrb[0].mxu0
        %v2577 = vpop.f32.mrb[0].mxu0
        %v2578 = vadd.f32 %v2417, %v2577
        %v2579 = vpop.f32.mrb[0].mxu0
        %2580 = vdwg.mxu0
        %2581 = vmatprep.subr.bf16.mxu0 0
        %2582 = vmatpush1.bf16.msra.mxu0 %v2034
        %2583 = vmatprep.subr.bf16.mxu0 0
        %2584 = vmatpush1.bf16.msra.mxu0 %v2035
        %2585 = vmatprep.subr.bf16.mxu0 0
        %2586 = vmatpush1.bf16.msra.mxu0 %v2036
        %2587 = vmatprep.subr.bf16.mxu0 0
        %2588 = vmatpush1.bf16.msra.mxu0 %v2037
        %2589 = vmatprep.subr.bf16.mxu0 0
        %2590 = vmatpush1.bf16.msra.mxu0 %v2038
        %2591 = vmatprep.subr.bf16.mxu0 0
        %2592 = vmatpush1.bf16.msra.mxu0 %v2039
        %2593 = vmatprep.subr.bf16.mxu0 0
        %2594 = vmatpush1.bf16.msra.mxu0 %v2040
        %2595 = vmatprep.subr.bf16.mxu0 0
        %2596 = vmatpush1.bf16.msra.mxu0 %v2041
        %2597 = vmatprep.subr.bf16.mxu0 0
        %2598 = vmatpush1.bf16.msra.mxu0 0
        %2599 = vmatprep.subr.bf16.mxu0 0
        %2600 = vmatpush1.bf16.msra.mxu0 0
        %2601 = vmatprep.subr.bf16.mxu0 0
        %2602 = vmatpush1.bf16.msra.mxu0 0
        %2603 = vmatprep.subr.bf16.mxu0 0
        %2604 = vmatpush1.bf16.msra.mxu0 0
        %2605 = vmatprep.subr.bf16.mxu0 0
        %2606 = vmatpush1.bf16.msra.mxu0 0
        %2607 = vmatprep.subr.bf16.mxu0 0
        %2608 = vmatpush1.bf16.msra.mxu0 0
        %2609 = vmatprep.subr.bf16.mxu0 0
        %2610 = vmatpush1.bf16.msra.mxu0 0
        %2611 = vmatprep.subr.bf16.mxu0 0
        %2612 = vmatpush1.bf16.msra.mxu0 0
        %2613 = vmatprep.mubr.bf16.mxu0 0
        %2614 = vmatmul.mubr.bf16.gmra.mrb[0].mxu0 %v1537
        %v2615 = vpop.f32.mrb[0].mxu0
        %v2616 = vadd.f32 %v2455, %v2615
        %v2617 = vpop.f32.mrb[0].mxu0
        %v2618 = vpop.f32.mrb[0].mxu0
        %v2619 = vadd.f32 %v2458, %v2618
        %v2620 = vpop.f32.mrb[0].mxu0
        %2621 = vmatprep.mubr.bf16.mxu0 0
        %2622 = vmatmul.mubr.bf16.gmra.mrb[0].mxu0 %v1544
        %v2623 = vpop.f32.mrb[0].mxu0
        %v2624 = vadd.f32 %v2463, %v2623
        %v2625 = vpop.f32.mrb[0].mxu0
        %v2626 = vpop.f32.mrb[0].mxu0
        %v2627 = vadd.f32 %v2466, %v2626
        %v2628 = vpop.f32.mrb[0].mxu0
        %2629 = vmatprep.mubr.bf16.mxu0 0
        %2630 = vmatmul.mubr.bf16.gmra.mrb[0].mxu0 %v1551
        %v2631 = vpop.f32.mrb[0].mxu0
        %v2632 = vadd.f32 %v2471, %v2631
        %v2633 = vpop.f32.mrb[0].mxu0
        %v2634 = vpop.f32.mrb[0].mxu0
        %v2635 = vadd.f32 %v2474, %v2634
        %v2636 = vpop.f32.mrb[0].mxu0
        %2637 = vmatprep.mubr.bf16.mxu0 0
        %2638 = vmatmul.mubr.bf16.gmra.mrb[0].mxu0 %v1558
        %v2639 = vpop.f32.mrb[0].mxu0
        %v2640 = vadd.f32 %v2479, %v2639
        %v2641 = vpop.f32.mrb[0].mxu0
        %v2642 = vpop.f32.mrb[0].mxu0
        %v2643 = vadd.f32 %v2482, %v2642
        %v2644 = vpop.f32.mrb[0].mxu0
        %2645 = vmatprep.mubr.bf16.mxu0 0
        %2646 = vmatmul.mubr.bf16.gmra.mrb[0].mxu0 %v1565
        %v2647 = vpop.f32.mrb[0].mxu0
        %v2648 = vadd.f32 %v2487, %v2647
        %v2649 = vpop.f32.mrb[0].mxu0
        %v2650 = vpop.f32.mrb[0].mxu0
        %v2651 = vadd.f32 %v2490, %v2650
        %v2652 = vpop.f32.mrb[0].mxu0
        %2653 = vmatprep.mubr.bf16.mxu0 0
        %2654 = vmatmul.mubr.bf16.gmra.mrb[0].mxu0 %v1572
        %v2655 = vpop.f32.mrb[0].mxu0
        %v2656 = vadd.f32 %v2495, %v2655
        %v2657 = vpop.f32.mrb[0].mxu0
        %v2658 = vpop.f32.mrb[0].mxu0
        %v2659 = vadd.f32 %v2498, %v2658
        %v2660 = vpop.f32.mrb[0].mxu0
        %2661 = vmatprep.mubr.bf16.mxu0 0
        %2662 = vmatmul.mubr.bf16.gmra.mrb[0].mxu0 %v1579
        %v2663 = vpop.f32.mrb[0].mxu0
        %v2664 = vadd.f32 %v2503, %v2663
        %v2665 = vpop.f32.mrb[0].mxu0
        %v2666 = vpop.f32.mrb[0].mxu0
        %v2667 = vadd.f32 %v2506, %v2666
        %v2668 = vpop.f32.mrb[0].mxu0
        %2669 = vmatprep.mubr.bf16.mxu0 0
        %2670 = vmatmul.mubr.bf16.gmra.mrb[0].mxu0 %v1586
        %v2671 = vpop.f32.mrb[0].mxu0
        %v2672 = vadd.f32 %v2511, %v2671
        %v2673 = vpop.f32.mrb[0].mxu0
        %v2674 = vpop.f32.mrb[0].mxu0
        %v2675 = vadd.f32 %v2514, %v2674
        %v2676 = vpop.f32.mrb[0].mxu0
        %2677 = vmatprep.mubr.bf16.mxu0 0
        %2678 = vmatmul.mubr.bf16.gmra.mrb[0].mxu0 %v1593
        %v2679 = vpop.f32.mrb[0].mxu0
        %v2680 = vadd.f32 %v2519, %v2679
        %v2681 = vpop.f32.mrb[0].mxu0
        %v2682 = vpop.f32.mrb[0].mxu0
        %v2683 = vadd.f32 %v2522, %v2682
        %v2684 = vpop.f32.mrb[0].mxu0
        %2685 = vmatprep.mubr.bf16.mxu0 0
        %2686 = vmatmul.mubr.bf16.gmra.mrb[0].mxu0 %v1600
        %v2687 = vpop.f32.mrb[0].mxu0
        %v2688 = vadd.f32 %v2527, %v2687
        %v2689 = vpop.f32.mrb[0].mxu0
        %v2690 = vpop.f32.mrb[0].mxu0
        %v2691 = vadd.f32 %v2530, %v2690
        %v2692 = vpop.f32.mrb[0].mxu0
        %2693 = vmatprep.mubr.bf16.mxu0 0
        %2694 = vmatmul.mubr.bf16.gmra.mrb[0].mxu0 %v1607
        %v2695 = vpop.f32.mrb[0].mxu0
        %v2696 = vadd.f32 %v2535, %v2695
        %v2697 = vpop.f32.mrb[0].mxu0
        %v2698 = vpop.f32.mrb[0].mxu0
        %v2699 = vadd.f32 %v2538, %v2698
        %v2700 = vpop.f32.mrb[0].mxu0
        %2701 = vmatprep.mubr.bf16.mxu0 0
        %2702 = vmatmul.mubr.bf16.gmra.mrb[0].mxu0 %v1614
        %v2703 = vpop.f32.mrb[0].mxu0
        %v2704 = vadd.f32 %v2543, %v2703
        %v2705 = vpop.f32.mrb[0].mxu0
        %v2706 = vpop.f32.mrb[0].mxu0
        %v2707 = vadd.f32 %v2546, %v2706
        %v2708 = vpop.f32.mrb[0].mxu0
        %2709 = vmatprep.mubr.bf16.mxu0 0
        %2710 = vmatmul.mubr.bf16.gmra.mrb[0].mxu0 %v1621
        %v2711 = vpop.f32.mrb[0].mxu0
        %v2712 = vadd.f32 %v2551, %v2711
        %v2713 = vpop.f32.mrb[0].mxu0
        %v2714 = vpop.f32.mrb[0].mxu0
        %v2715 = vadd.f32 %v2554, %v2714
        %v2716 = vpop.f32.mrb[0].mxu0
        %2717 = vmatprep.mubr.bf16.mxu0 0
        %2718 = vmatmul.mubr.bf16.gmra.mrb[0].mxu0 %v1628
        %v2719 = vpop.f32.mrb[0].mxu0
        %v2720 = vadd.f32 %v2559, %v2719
        %v2721 = vpop.f32.mrb[0].mxu0
        %v2722 = vpop.f32.mrb[0].mxu0
        %v2723 = vadd.f32 %v2562, %v2722
        %v2724 = vpop.f32.mrb[0].mxu0
        %2725 = vmatprep.mubr.bf16.mxu0 0
        %2726 = vmatmul.mubr.bf16.gmra.mrb[0].mxu0 %v1635
        %v2727 = vpop.f32.mrb[0].mxu0
        %v2728 = vadd.f32 %v2567, %v2727
        %v2729 = vpop.f32.mrb[0].mxu0
        %v2730 = vpop.f32.mrb[0].mxu0
        %v2731 = vadd.f32 %v2570, %v2730
        %v2732 = vpop.f32.mrb[0].mxu0
        %2733 = vmatprep.mubr.bf16.mxu0 0
        %2734 = vmatmul.mubr.bf16.gmra.mrb[0].mxu0 %v1642
        %v2735 = vpop.f32.mrb[0].mxu0
        %v2736 = vadd.f32 %v2575, %v2735
        %v2737 = vpop.f32.mrb[0].mxu0
        %v2738 = vpop.f32.mrb[0].mxu0
        %v2739 = vadd.f32 %v2578, %v2738
        %v2740 = vpop.f32.mrb[0].mxu0
        %2741 = vdwg.mxu0
        %v2742 = vmax.f32 %v2616, 0.0
        %v2743 = vmax.f32 %v2619, 0.0
        %v2744 = vmax.f32 %v2624, 0.0
        %v2745 = vmax.f32 %v2627, 0.0
        %v2746 = vmax.f32 %v2632, 0.0
        %v2747 = vmax.f32 %v2635, 0.0
        %v2748 = vmax.f32 %v2640, 0.0
        %v2749 = vmax.f32 %v2643, 0.0
        %v2750 = vmax.f32 %v2648, 0.0
        %v2751 = vmax.f32 %v2651, 0.0
        %v2752 = vmax.f32 %v2656, 0.0
        %v2753 = vmax.f32 %v2659, 0.0
        %v2754 = vmax.f32 %v2664, 0.0
        %v2755 = vmax.f32 %v2667, 0.0
        %v2756 = vmax.f32 %v2672, 0.0
        %v2757 = vmax.f32 %v2675, 0.0
        %v2758 = vmax.f32 %v2680, 0.0
        %v2759 = vmax.f32 %v2683, 0.0
        %v2760 = vmax.f32 %v2688, 0.0
        %v2761 = vmax.f32 %v2691, 0.0
        %v2762 = vmax.f32 %v2696, 0.0
        %v2763 = vmax.f32 %v2699, 0.0
        %v2764 = vmax.f32 %v2704, 0.0
        %v2765 = vmax.f32 %v2707, 0.0
        %v2766 = vmax.f32 %v2712, 0.0
        %v2767 = vmax.f32 %v2715, 0.0
        %v2768 = vmax.f32 %v2720, 0.0
        %v2769 = vmax.f32 %v2723, 0.0
        %v2770 = vmax.f32 %v2728, 0.0
        %v2771 = vmax.f32 %v2731, 0.0
        %v2772 = vmax.f32 %v2736, 0.0
        %v2773 = vmax.f32 %v2739, 0.0
        %v2774 = vpack.c.bf16 %v2743, %v2742
        %v2775 = vpack.c.bf16 %v2745, %v2744
        %v2776 = vpack.c.bf16 %v2747, %v2746
        %v2777 = vpack.c.bf16 %v2749, %v2748
        %v2778 = vpack.c.bf16 %v2751, %v2750
        %v2779 = vpack.c.bf16 %v2753, %v2752
        %v2780 = vpack.c.bf16 %v2755, %v2754
        %v2781 = vpack.c.bf16 %v2757, %v2756
        %v2782 = vpack.c.bf16 %v2759, %v2758
        %v2783 = vpack.c.bf16 %v2761, %v2760
        %v2784 = vpack.c.bf16 %v2763, %v2762
        %v2785 = vpack.c.bf16 %v2765, %v2764
        %v2786 = vpack.c.bf16 %v2767, %v2766
        %v2787 = vpack.c.bf16 %v2769, %v2768
        %v2788 = vpack.c.bf16 %v2771, %v2770
        %v2789 = vpack.c.bf16 %v2773, %v2772
        %v2790 = vld [vmem:[%s5] sm:$0xff]
        %v2791 = vld [vmem:[%s5 + $0x8] sm:$0xff]
        %v2792 = vld [vmem:[%s5 + $0x10] sm:$0xff]
        %v2793 = vld [vmem:[%s5 + $0x18] sm:$0xf]
        %v2794 = vld [vmem:[%s5 + $0x1c] sm:$0xff]
        %v2795 = vld [vmem:[%s5 + $0x24] sm:$0xff]
        %v2796 = vld [vmem:[%s5 + $0x2c] sm:$0xff]
        %v2797 = vld [vmem:[%s5 + $0x34] sm:$0xf]
        %v2798 = vld [vmem:[%s5 + $0x38] sm:$0xff]
        %v2799 = vld [vmem:[%s5 + $0x40] sm:$0xff]
        %v2800 = vld [vmem:[%s5 + $0x48] sm:$0xff]
        %v2801 = vld [vmem:[%s5 + $0x50] sm:$0xf]
        %v2802 = vld [vmem:[%s5 + $0x54] sm:$0xff]
        %v2803 = vld [vmem:[%s5 + $0x5c] sm:$0xff]
        %v2804 = vld [vmem:[%s5 + $0x64] sm:$0xff]
        %v2805 = vld [vmem:[%s5 + $0x6c] sm:$0xf]
        %v2806 = vld [vmem:[%s5 + $0x70] sm:$0xff]
        %v2807 = vld [vmem:[%s5 + $0x78] sm:$0xff]
        %v2808 = vld [vmem:[%s5 + $0x80] sm:$0xff]
        %v2809 = vld [vmem:[%s5 + $0x88] sm:$0xf]
        %v2810 = vld [vmem:[%s5 + $0x8c] sm:$0xff]
        %v2811 = vld [vmem:[%s5 + $0x94] sm:$0xff]
        %v2812 = vld [vmem:[%s5 + $0x9c] sm:$0xff]
        %v2813 = vld [vmem:[%s5 + $0xa4] sm:$0xf]
        %v2814 = vld [vmem:[%s5 + $0xa8] sm:$0xff]
        %v2815 = vld [vmem:[%s5 + $0xb0] sm:$0xff]
        %v2816 = vld [vmem:[%s5 + $0xb8] sm:$0xff]
        %v2817 = vld [vmem:[%s5 + $0xc0] sm:$0xf]
        %v2818 = vld [vmem:[%s5 + $0xc4] sm:$0xff]
        %v2819 = vld [vmem:[%s5 + $0xcc] sm:$0xff]
        %v2820 = vld [vmem:[%s5 + $0xd4] sm:$0xff]
        %v2821 = vld [vmem:[%s5 + $0xdc] sm:$0xf]
        %v2822 = vld [vmem:[%s5 + $0xe0] sm:$0xff]
        %v2823 = vld [vmem:[%s5 + $0xe8] sm:$0xff]
        %v2824 = vld [vmem:[%s5 + $0xf0] sm:$0xff]
        %v2825 = vld [vmem:[%s5 + $0xf8] sm:$0xf]
        %v2826 = vld [vmem:[%s5 + $0xfc] sm:$0xff]
        %v2827 = vld [vmem:[%s5 + $0x104] sm:$0xff]
        %v2828 = vld [vmem:[%s5 + $0x10c] sm:$0xff]
        %v2829 = vld [vmem:[%s5 + $0x114] sm:$0xf]
        %v2830 = vld [vmem:[%s5 + $0x118] sm:$0xff]
        %v2831 = vld [vmem:[%s5 + $0x120] sm:$0xff]
        %v2832 = vld [vmem:[%s5 + $0x128] sm:$0xff]
        %v2833 = vld [vmem:[%s5 + $0x130] sm:$0xf]
        %v2834 = vld [vmem:[%s5 + $0x134] sm:$0xff]
        %v2835 = vld [vmem:[%s5 + $0x13c] sm:$0xff]
        %v2836 = vld [vmem:[%s5 + $0x144] sm:$0xff]
        %v2837 = vld [vmem:[%s5 + $0x14c] sm:$0xf]
        %v2838 = vld [vmem:[%s5 + $0x150] sm:$0xff]
        %v2839 = vld [vmem:[%s5 + $0x158] sm:$0xff]
        %v2840 = vld [vmem:[%s5 + $0x160] sm:$0xff]
        %v2841 = vld [vmem:[%s5 + $0x168] sm:$0xf]
        %v2842 = vld [vmem:[%s5 + $0x16c] sm:$0xff]
        %v2843 = vld [vmem:[%s5 + $0x174] sm:$0xff]
        %v2844 = vld [vmem:[%s5 + $0x17c] sm:$0xff]
        %v2845 = vld [vmem:[%s5 + $0x184] sm:$0xf]
        %v2846 = vld [vmem:[%s5 + $0x188] sm:$0xff]
        %v2847 = vld [vmem:[%s5 + $0x190] sm:$0xff]
        %v2848 = vld [vmem:[%s5 + $0x198] sm:$0xff]
        %v2849 = vld [vmem:[%s5 + $0x1a0] sm:$0xf]
        %v2850 = vld [vmem:[%s5 + $0x1a4] sm:$0xff]
        %v2851 = vld [vmem:[%s5 + $0x1ac] sm:$0xff]
        %v2852 = vld [vmem:[%s5 + $0x1b4] sm:$0xff]
        %v2853 = vld [vmem:[%s5 + $0x1bc] sm:$0xf]
        %v2854 = vld [vmem:[%s6] sm:$0xff]
        %v2856 = vlaneseq
        %v2857 = vshrl.u32 %v2856, 7
        %v2858 = vsub.s32 0, %v2857
        %v2859 = vrot.slane %v2854, %v2858
        %v2860 = vlaneseq
        %v2861 = vshrl.u32 %v2860, 7
        %v2862 = vsub.s32 1, %v2861
        %v2863 = vrot.slane %v2854, %v2862
        %v2864 = vlaneseq
        %v2865 = vshrl.u32 %v2864, 7
        %v2866 = vsub.s32 2, %v2865
        %v2867 = vrot.slane %v2854, %v2866
        %v2868 = vlaneseq
        %v2869 = vshrl.u32 %v2868, 7
        %v2870 = vsub.s32 3, %v2869
        %v2871 = vrot.slane %v2854, %v2870
        %v2872 = vlaneseq
        %v2873 = vshrl.u32 %v2872, 7
        %v2874 = vsub.s32 4, %v2873
        %v2875 = vrot.slane %v2854, %v2874
        %v2876 = vlaneseq
        %v2877 = vshrl.u32 %v2876, 7
        %v2878 = vsub.s32 5, %v2877
        %v2879 = vrot.slane %v2854, %v2878
        %v2880 = vlaneseq
        %v2881 = vshrl.u32 %v2880, 7
        %v2882 = vsub.s32 6, %v2881
        %v2883 = vrot.slane %v2854, %v2882
        %v2955 = vunpack.c.l.b16 %v2790
        %v2956 = vunpack.c.h.b16 %v2790
        %v2957 = vunpack.c.l.b16 %v2791
        %v2958 = vunpack.c.h.b16 %v2791
        %v2959 = vunpack.c.l.b16 %v2792
        %v2960 = vunpack.c.h.b16 %v2792
        %v2961 = vunpack.c.l.b16 %v2793
        %v2962 = vunpack.c.l.b16 %v2794
        %v2963 = vunpack.c.h.b16 %v2794
        %v2964 = vunpack.c.l.b16 %v2795
        %v2965 = vunpack.c.h.b16 %v2795
        %v2966 = vunpack.c.l.b16 %v2796
        %v2967 = vunpack.c.h.b16 %v2796
        %v2968 = vunpack.c.l.b16 %v2797
        %v2969 = vunpack.c.l.b16 %v2798
        %v2970 = vunpack.c.h.b16 %v2798
        %v2971 = vunpack.c.l.b16 %v2799
        %v2972 = vunpack.c.h.b16 %v2799
        %v2973 = vunpack.c.l.b16 %v2800
        %v2974 = vunpack.c.h.b16 %v2800
        %v2975 = vunpack.c.l.b16 %v2801
        %v2976 = vunpack.c.l.b16 %v2802
        %v2977 = vunpack.c.h.b16 %v2802
        %v2978 = vunpack.c.l.b16 %v2803
        %v2979 = vunpack.c.h.b16 %v2803
        %v2980 = vunpack.c.l.b16 %v2804
        %v2981 = vunpack.c.h.b16 %v2804
        %v2982 = vunpack.c.l.b16 %v2805
        %v2983 = vunpack.c.l.b16 %v2806
        %v2984 = vunpack.c.h.b16 %v2806
        %v2985 = vunpack.c.l.b16 %v2807
        %v2986 = vunpack.c.h.b16 %v2807
        %v2987 = vunpack.c.l.b16 %v2808
        %v2988 = vunpack.c.h.b16 %v2808
        %v2989 = vunpack.c.l.b16 %v2809
        %v2990 = vunpack.c.l.b16 %v2810
        %v2991 = vunpack.c.h.b16 %v2810
        %v2992 = vunpack.c.l.b16 %v2811
        %v2993 = vunpack.c.h.b16 %v2811
        %v2994 = vunpack.c.l.b16 %v2812
        %v2995 = vunpack.c.h.b16 %v2812
        %v2996 = vunpack.c.l.b16 %v2813
        %v2997 = vunpack.c.l.b16 %v2814
        %v2998 = vunpack.c.h.b16 %v2814
        %v2999 = vunpack.c.l.b16 %v2815
        %v3000 = vunpack.c.h.b16 %v2815
        %v3001 = vunpack.c.l.b16 %v2816
        %v3002 = vunpack.c.h.b16 %v2816
        %v3003 = vunpack.c.l.b16 %v2817
        %v3004 = vunpack.c.l.b16 %v2818
        %v3005 = vunpack.c.h.b16 %v2818
        %v3006 = vunpack.c.l.b16 %v2819
        %v3007 = vunpack.c.h.b16 %v2819
        %v3008 = vunpack.c.l.b16 %v2820
        %v3009 = vunpack.c.h.b16 %v2820
        %v3010 = vunpack.c.l.b16 %v2821
        %v3011 = vunpack.c.l.b16 %v2822
        %v3012 = vunpack.c.h.b16 %v2822
        %v3013 = vunpack.c.l.b16 %v2823
        %v3014 = vunpack.c.h.b16 %v2823
        %v3015 = vunpack.c.l.b16 %v2824
        %v3016 = vunpack.c.h.b16 %v2824
        %v3017 = vunpack.c.l.b16 %v2825
        %v3018 = vunpack.c.l.b16 %v2826
        %v3019 = vunpack.c.h.b16 %v2826
        %v3020 = vunpack.c.l.b16 %v2827
        %v3021 = vunpack.c.h.b16 %v2827
        %v3022 = vunpack.c.l.b16 %v2828
        %v3023 = vunpack.c.h.b16 %v2828
        %v3024 = vunpack.c.l.b16 %v2829
        %v3025 = vunpack.c.l.b16 %v2830
        %v3026 = vunpack.c.h.b16 %v2830
        %v3027 = vunpack.c.l.b16 %v2831
        %v3028 = vunpack.c.h.b16 %v2831
        %v3029 = vunpack.c.l.b16 %v2832
        %v3030 = vunpack.c.h.b16 %v2832
        %v3031 = vunpack.c.l.b16 %v2833
        %v3032 = vunpack.c.l.b16 %v2834
        %v3033 = vunpack.c.h.b16 %v2834
        %v3034 = vunpack.c.l.b16 %v2835
        %v3035 = vunpack.c.h.b16 %v2835
        %v3036 = vunpack.c.l.b16 %v2836
        %v3037 = vunpack.c.h.b16 %v2836
        %v3038 = vunpack.c.l.b16 %v2837
        %v3039 = vunpack.c.l.b16 %v2838
        %v3040 = vunpack.c.h.b16 %v2838
        %v3041 = vunpack.c.l.b16 %v2839
        %v3042 = vunpack.c.h.b16 %v2839
        %v3043 = vunpack.c.l.b16 %v2840
        %v3044 = vunpack.c.h.b16 %v2840
        %v3045 = vunpack.c.l.b16 %v2841
        %v3046 = vunpack.c.l.b16 %v2842
        %v3047 = vunpack.c.h.b16 %v2842
        %v3048 = vunpack.c.l.b16 %v2843
        %v3049 = vunpack.c.h.b16 %v2843
        %v3050 = vunpack.c.l.b16 %v2844
        %v3051 = vunpack.c.h.b16 %v2844
        %v3052 = vunpack.c.l.b16 %v2845
        %v3053 = vunpack.c.l.b16 %v2846
        %v3054 = vunpack.c.h.b16 %v2846
        %v3055 = vunpack.c.l.b16 %v2847
        %v3056 = vunpack.c.h.b16 %v2847
        %v3057 = vunpack.c.l.b16 %v2848
        %v3058 = vunpack.c.h.b16 %v2848
        %v3059 = vunpack.c.l.b16 %v2849
        %v3060 = vunpack.c.l.b16 %v2850
        %v3061 = vunpack.c.h.b16 %v2850
        %v3062 = vunpack.c.l.b16 %v2851
        %v3063 = vunpack.c.h.b16 %v2851
        %v3064 = vunpack.c.l.b16 %v2852
        %v3065 = vunpack.c.h.b16 %v2852
        %v3066 = vunpack.c.l.b16 %v2853
        %v3067 = vpack.c.b16 %v2962, %v2955
        %v3068 = vpack.c.b16 %v2963, %v2956
        %v3069 = vpack.c.b16 %v2964, %v2957
        %v3070 = vpack.c.b16 %v2965, %v2958
        %v3071 = vpack.c.b16 %v2966, %v2959
        %v3072 = vpack.c.b16 %v2967, %v2960
        %v3073 = vpack.c.b16 %v2968, %v2961
        %v3074 = vpack.c.b16 %v2976, %v2969
        %v3075 = vpack.c.b16 %v2977, %v2970
        %v3076 = vpack.c.b16 %v2978, %v2971
        %v3077 = vpack.c.b16 %v2979, %v2972
        %v3078 = vpack.c.b16 %v2980, %v2973
        %v3079 = vpack.c.b16 %v2981, %v2974
        %v3080 = vpack.c.b16 %v2982, %v2975
        %v3081 = vpack.c.b16 %v2990, %v2983
        %v3082 = vpack.c.b16 %v2991, %v2984
        %v3083 = vpack.c.b16 %v2992, %v2985
        %v3084 = vpack.c.b16 %v2993, %v2986
        %v3085 = vpack.c.b16 %v2994, %v2987
        %v3086 = vpack.c.b16 %v2995, %v2988
        %v3087 = vpack.c.b16 %v2996, %v2989
        %v3088 = vpack.c.b16 %v3004, %v2997
        %v3089 = vpack.c.b16 %v3005, %v2998
        %v3090 = vpack.c.b16 %v3006, %v2999
        %v3091 = vpack.c.b16 %v3007, %v3000
        %v3092 = vpack.c.b16 %v3008, %v3001
        %v3093 = vpack.c.b16 %v3009, %v3002
        %v3094 = vpack.c.b16 %v3010, %v3003
        %v3095 = vpack.c.b16 %v3018, %v3011
        %v3096 = vpack.c.b16 %v3019, %v3012
        %v3097 = vpack.c.b16 %v3020, %v3013
        %v3098 = vpack.c.b16 %v3021, %v3014
        %v3099 = vpack.c.b16 %v3022, %v3015
        %v3100 = vpack.c.b16 %v3023, %v3016
        %v3101 = vpack.c.b16 %v3024, %v3017
        %v3102 = vpack.c.b16 %v3032, %v3025
        %v3103 = vpack.c.b16 %v3033, %v3026
        %v3104 = vpack.c.b16 %v3034, %v3027
        %v3105 = vpack.c.b16 %v3035, %v3028
        %v3106 = vpack.c.b16 %v3036, %v3029
        %v3107 = vpack.c.b16 %v3037, %v3030
        %v3108 = vpack.c.b16 %v3038, %v3031
        %v3109 = vpack.c.b16 %v3046, %v3039
        %v3110 = vpack.c.b16 %v3047, %v3040
        %v3111 = vpack.c.b16 %v3048, %v3041
        %v3112 = vpack.c.b16 %v3049, %v3042
        %v3113 = vpack.c.b16 %v3050, %v3043
        %v3114 = vpack.c.b16 %v3051, %v3044
        %v3115 = vpack.c.b16 %v3052, %v3045
        %v3116 = vpack.c.b16 %v3060, %v3053
        %v3117 = vpack.c.b16 %v3061, %v3054
        %v3118 = vpack.c.b16 %v3062, %v3055
        %v3119 = vpack.c.b16 %v3063, %v3056
        %v3120 = vpack.c.b16 %v3064, %v3057
        %v3121 = vpack.c.b16 %v3065, %v3058
        %v3122 = vpack.c.b16 %v3066, %v3059
        %3179 = vmatprep.subr.bf16.mxu0 %v3068
        %3180 = vmatpush1.bf16.msra.mxu0 %v3067
        %3181 = vmatprep.subr.bf16.mxu0 %v3075
        %3182 = vmatpush1.bf16.msra.mxu0 %v3074
        %3183 = vmatprep.subr.bf16.mxu0 %v3082
        %3184 = vmatpush1.bf16.msra.mxu0 %v3081
        %3185 = vmatprep.subr.bf16.mxu0 %v3089
        %3186 = vmatpush1.bf16.msra.mxu0 %v3088
        %3187 = vmatprep.subr.bf16.mxu0 %v3096
        %3188 = vmatpush1.bf16.msra.mxu0 %v3095
        %3189 = vmatprep.subr.bf16.mxu0 %v3103
        %3190 = vmatpush1.bf16.msra.mxu0 %v3102
        %3191 = vmatprep.subr.bf16.mxu0 %v3110
        %3192 = vmatpush1.bf16.msra.mxu0 %v3109
        %3193 = vmatprep.subr.bf16.mxu0 %v3117
        %3194 = vmatpush1.bf16.msra.mxu0 %v3116
        %3195 = vmatprep.subr.bf16.mxu0 0
        %3196 = vmatpush1.bf16.msra.mxu0 0
        %3197 = vmatprep.subr.bf16.mxu0 0
        %3198 = vmatpush1.bf16.msra.mxu0 0
        %3199 = vmatprep.subr.bf16.mxu0 0
        %3200 = vmatpush1.bf16.msra.mxu0 0
        %3201 = vmatprep.subr.bf16.mxu0 0
        %3202 = vmatpush1.bf16.msra.mxu0 0
        %3203 = vmatprep.subr.bf16.mxu0 0
        %3204 = vmatpush1.bf16.msra.mxu0 0
        %3205 = vmatprep.subr.bf16.mxu0 0
        %3206 = vmatpush1.bf16.msra.mxu0 0
        %3207 = vmatprep.subr.bf16.mxu0 0
        %3208 = vmatpush1.bf16.msra.mxu0 0
        %3209 = vmatprep.subr.bf16.mxu0 0
        %3210 = vmatpush1.bf16.msra.mxu0 0
        %3211 = vmatprep.mubr.bf16.mxu0 0
        %3212 = vmatmul.mubr.bf16.gmra.mrb[0].mxu0 %v2774
        %v3213 = vpop.f32.mrb[0].mxu0
        %v3214 = vadd.f32 %v2859, %v3213
        %v3215 = vpop.f32.mrb[0].mxu0
        %v3216 = vadd.f32 %v2863, %v3215
        %v3217 = vpop.f32.mrb[0].mxu0
        %v3218 = vadd.f32 %v2859, %v3217
        %v3219 = vpop.f32.mrb[0].mxu0
        %v3220 = vadd.f32 %v2863, %v3219
        %3221 = vmatprep.mubr.bf16.mxu0 0
        %3222 = vmatmul.mubr.bf16.gmra.mrb[0].mxu0 %v2775
        %v3223 = vpop.f32.mrb[0].mxu0
        %v3224 = vadd.f32 %v2859, %v3223
        %v3225 = vpop.f32.mrb[0].mxu0
        %v3226 = vadd.f32 %v2863, %v3225
        %v3227 = vpop.f32.mrb[0].mxu0
        %v3228 = vadd.f32 %v2859, %v3227
        %v3229 = vpop.f32.mrb[0].mxu0
        %v3230 = vadd.f32 %v2863, %v3229
        %3231 = vmatprep.mubr.bf16.mxu0 0
        %3232 = vmatmul.mubr.bf16.gmra.mrb[0].mxu0 %v2776
        %v3233 = vpop.f32.mrb[0].mxu0
        %v3234 = vadd.f32 %v2859, %v3233
        %v3235 = vpop.f32.mrb[0].mxu0
        %v3236 = vadd.f32 %v2863, %v3235
        %v3237 = vpop.f32.mrb[0].mxu0
        %v3238 = vadd.f32 %v2859, %v3237
        %v3239 = vpop.f32.mrb[0].mxu0
        %v3240 = vadd.f32 %v2863, %v3239
        %3241 = vmatprep.mubr.bf16.mxu0 0
        %3242 = vmatmul.mubr.bf16.gmra.mrb[0].mxu0 %v2777
        %v3243 = vpop.f32.mrb[0].mxu0
        %v3244 = vadd.f32 %v2859, %v3243
        %v3245 = vpop.f32.mrb[0].mxu0
        %v3246 = vadd.f32 %v2863, %v3245
        %v3247 = vpop.f32.mrb[0].mxu0
        %v3248 = vadd.f32 %v2859, %v3247
        %v3249 = vpop.f32.mrb[0].mxu0
        %v3250 = vadd.f32 %v2863, %v3249
        %3251 = vmatprep.mubr.bf16.mxu0 0
        %3252 = vmatmul.mubr.bf16.gmra.mrb[0].mxu0 %v2778
        %v3253 = vpop.f32.mrb[0].mxu0
        %v3254 = vadd.f32 %v2859, %v3253
        %v3255 = vpop.f32.mrb[0].mxu0
        %v3256 = vadd.f32 %v2863, %v3255
        %v3257 = vpop.f32.mrb[0].mxu0
        %v3258 = vadd.f32 %v2859, %v3257
        %v3259 = vpop.f32.mrb[0].mxu0
        %v3260 = vadd.f32 %v2863, %v3259
        %3261 = vmatprep.mubr.bf16.mxu0 0
        %3262 = vmatmul.mubr.bf16.gmra.mrb[0].mxu0 %v2779
        %v3263 = vpop.f32.mrb[0].mxu0
        %v3264 = vadd.f32 %v2859, %v3263
        %v3265 = vpop.f32.mrb[0].mxu0
        %v3266 = vadd.f32 %v2863, %v3265
        %v3267 = vpop.f32.mrb[0].mxu0
        %v3268 = vadd.f32 %v2859, %v3267
        %v3269 = vpop.f32.mrb[0].mxu0
        %v3270 = vadd.f32 %v2863, %v3269
        %3271 = vmatprep.mubr.bf16.mxu0 0
        %3272 = vmatmul.mubr.bf16.gmra.mrb[0].mxu0 %v2780
        %v3273 = vpop.f32.mrb[0].mxu0
        %v3274 = vadd.f32 %v2859, %v3273
        %v3275 = vpop.f32.mrb[0].mxu0
        %v3276 = vadd.f32 %v2863, %v3275
        %v3277 = vpop.f32.mrb[0].mxu0
        %v3278 = vadd.f32 %v2859, %v3277
        %v3279 = vpop.f32.mrb[0].mxu0
        %v3280 = vadd.f32 %v2863, %v3279
        %3281 = vmatprep.mubr.bf16.mxu0 0
        %3282 = vmatmul.mubr.bf16.gmra.mrb[0].mxu0 %v2781
        %v3283 = vpop.f32.mrb[0].mxu0
        %v3284 = vadd.f32 %v2859, %v3283
        %v3285 = vpop.f32.mrb[0].mxu0
        %v3286 = vadd.f32 %v2863, %v3285
        %v3287 = vpop.f32.mrb[0].mxu0
        %v3288 = vadd.f32 %v2859, %v3287
        %v3289 = vpop.f32.mrb[0].mxu0
        %v3290 = vadd.f32 %v2863, %v3289
        %3291 = vmatprep.mubr.bf16.mxu0 0
        %3292 = vmatmul.mubr.bf16.gmra.mrb[0].mxu0 %v2782
        %v3293 = vpop.f32.mrb[0].mxu0
        %v3294 = vadd.f32 %v2859, %v3293
        %v3295 = vpop.f32.mrb[0].mxu0
        %v3296 = vadd.f32 %v2863, %v3295
        %v3297 = vpop.f32.mrb[0].mxu0
        %v3298 = vadd.f32 %v2859, %v3297
        %v3299 = vpop.f32.mrb[0].mxu0
        %v3300 = vadd.f32 %v2863, %v3299
        %3301 = vmatprep.mubr.bf16.mxu0 0
        %3302 = vmatmul.mubr.bf16.gmra.mrb[0].mxu0 %v2783
        %v3303 = vpop.f32.mrb[0].mxu0
        %v3304 = vadd.f32 %v2859, %v3303
        %v3305 = vpop.f32.mrb[0].mxu0
        %v3306 = vadd.f32 %v2863, %v3305
        %v3307 = vpop.f32.mrb[0].mxu0
        %v3308 = vadd.f32 %v2859, %v3307
        %v3309 = vpop.f32.mrb[0].mxu0
        %v3310 = vadd.f32 %v2863, %v3309
        %3311 = vmatprep.mubr.bf16.mxu0 0
        %3312 = vmatmul.mubr.bf16.gmra.mrb[0].mxu0 %v2784
        %v3313 = vpop.f32.mrb[0].mxu0
        %v3314 = vadd.f32 %v2859, %v3313
        %v3315 = vpop.f32.mrb[0].mxu0
        %v3316 = vadd.f32 %v2863, %v3315
        %v3317 = vpop.f32.mrb[0].mxu0
        %v3318 = vadd.f32 %v2859, %v3317
        %v3319 = vpop.f32.mrb[0].mxu0
        %v3320 = vadd.f32 %v2863, %v3319
        %3321 = vmatprep.mubr.bf16.mxu0 0
        %3322 = vmatmul.mubr.bf16.gmra.mrb[0].mxu0 %v2785
        %v3323 = vpop.f32.mrb[0].mxu0
        %v3324 = vadd.f32 %v2859, %v3323
        %v3325 = vpop.f32.mrb[0].mxu0
        %v3326 = vadd.f32 %v2863, %v3325
        %v3327 = vpop.f32.mrb[0].mxu0
        %v3328 = vadd.f32 %v2859, %v3327
        %v3329 = vpop.f32.mrb[0].mxu0
        %v3330 = vadd.f32 %v2863, %v3329
        %3331 = vmatprep.mubr.bf16.mxu0 0
        %3332 = vmatmul.mubr.bf16.gmra.mrb[0].mxu0 %v2786
        %v3333 = vpop.f32.mrb[0].mxu0
        %v3334 = vadd.f32 %v2859, %v3333
        %v3335 = vpop.f32.mrb[0].mxu0
        %v3336 = vadd.f32 %v2863, %v3335
        %v3337 = vpop.f32.mrb[0].mxu0
        %v3338 = vadd.f32 %v2859, %v3337
        %v3339 = vpop.f32.mrb[0].mxu0
        %v3340 = vadd.f32 %v2863, %v3339
        %3341 = vmatprep.mubr.bf16.mxu0 0
        %3342 = vmatmul.mubr.bf16.gmra.mrb[0].mxu0 %v2787
        %v3343 = vpop.f32.mrb[0].mxu0
        %v3344 = vadd.f32 %v2859, %v3343
        %v3345 = vpop.f32.mrb[0].mxu0
        %v3346 = vadd.f32 %v2863, %v3345
        %v3347 = vpop.f32.mrb[0].mxu0
        %v3348 = vadd.f32 %v2859, %v3347
        %v3349 = vpop.f32.mrb[0].mxu0
        %v3350 = vadd.f32 %v2863, %v3349
        %3351 = vmatprep.mubr.bf16.mxu0 0
        %3352 = vmatmul.mubr.bf16.gmra.mrb[0].mxu0 %v2788
        %v3353 = vpop.f32.mrb[0].mxu0
        %v3354 = vadd.f32 %v2859, %v3353
        %v3355 = vpop.f32.mrb[0].mxu0
        %v3356 = vadd.f32 %v2863, %v3355
        %v3357 = vpop.f32.mrb[0].mxu0
        %v3358 = vadd.f32 %v2859, %v3357
        %v3359 = vpop.f32.mrb[0].mxu0
        %v3360 = vadd.f32 %v2863, %v3359
        %3361 = vmatprep.mubr.bf16.mxu0 0
        %3362 = vmatmul.mubr.bf16.gmra.mrb[0].mxu0 %v2789
        %v3363 = vpop.f32.mrb[0].mxu0
        %v3364 = vadd.f32 %v2859, %v3363
        %v3365 = vpop.f32.mrb[0].mxu0
        %v3366 = vadd.f32 %v2863, %v3365
        %v3367 = vpop.f32.mrb[0].mxu0
        %v3368 = vadd.f32 %v2859, %v3367
        %v3369 = vpop.f32.mrb[0].mxu0
        %v3370 = vadd.f32 %v2863, %v3369
        %3371 = vdwg.mxu0
        %3372 = vmatprep.subr.bf16.mxu0 %v3070
        %3373 = vmatpush1.bf16.msra.mxu0 %v3069
        %3374 = vmatprep.subr.bf16.mxu0 %v3077
        %3375 = vmatpush1.bf16.msra.mxu0 %v3076
        %3376 = vmatprep.subr.bf16.mxu0 %v3084
        %3377 = vmatpush1.bf16.msra.mxu0 %v3083
        %3378 = vmatprep.subr.bf16.mxu0 %v3091
        %3379 = vmatpush1.bf16.msra.mxu0 %v3090
        %3380 = vmatprep.subr.bf16.mxu0 %v3098
        %3381 = vmatpush1.bf16.msra.mxu0 %v3097
        %3382 = vmatprep.subr.bf16.mxu0 %v3105
        %3383 = vmatpush1.bf16.msra.mxu0 %v3104
        %3384 = vmatprep.subr.bf16.mxu0 %v3112
        %3385 = vmatpush1.bf16.msra.mxu0 %v3111
        %3386 = vmatprep.subr.bf16.mxu0 %v3119
        %3387 = vmatpush1.bf16.msra.mxu0 %v3118
        %3388 = vmatprep.subr.bf16.mxu0 0
        %3389 = vmatpush1.bf16.msra.mxu0 0
        %3390 = vmatprep.subr.bf16.mxu0 0
        %3391 = vmatpush1.bf16.msra.mxu0 0
        %3392 = vmatprep.subr.bf16.mxu0 0
        %3393 = vmatpush1.bf16.msra.mxu0 0
        %3394 = vmatprep.subr.bf16.mxu0 0
        %3395 = vmatpush1.bf16.msra.mxu0 0
        %3396 = vmatprep.subr.bf16.mxu0 0
        %3397 = vmatpush1.bf16.msra.mxu0 0
        %3398 = vmatprep.subr.bf16.mxu0 0
        %3399 = vmatpush1.bf16.msra.mxu0 0
        %3400 = vmatprep.subr.bf16.mxu0 0
        %3401 = vmatpush1.bf16.msra.mxu0 0
        %3402 = vmatprep.subr.bf16.mxu0 0
        %3403 = vmatpush1.bf16.msra.mxu0 0
        %3404 = vmatprep.mubr.bf16.mxu0 0
        %3405 = vmatmul.mubr.bf16.gmra.mrb[0].mxu0 %v2774
        %v3406 = vpop.f32.mrb[0].mxu0
        %v3407 = vadd.f32 %v2867, %v3406
        %v3408 = vpop.f32.mrb[0].mxu0
        %v3409 = vadd.f32 %v2871, %v3408
        %v3410 = vpop.f32.mrb[0].mxu0
        %v3411 = vadd.f32 %v2867, %v3410
        %v3412 = vpop.f32.mrb[0].mxu0
        %v3413 = vadd.f32 %v2871, %v3412
        %3414 = vmatprep.mubr.bf16.mxu0 0
        %3415 = vmatmul.mubr.bf16.gmra.mrb[0].mxu0 %v2775
        %v3416 = vpop.f32.mrb[0].mxu0
        %v3417 = vadd.f32 %v2867, %v3416
        %v3418 = vpop.f32.mrb[0].mxu0
        %v3419 = vadd.f32 %v2871, %v3418
        %v3420 = vpop.f32.mrb[0].mxu0
        %v3421 = vadd.f32 %v2867, %v3420
        %v3422 = vpop.f32.mrb[0].mxu0
        %v3423 = vadd.f32 %v2871, %v3422
        %3424 = vmatprep.mubr.bf16.mxu0 0
        %3425 = vmatmul.mubr.bf16.gmra.mrb[0].mxu0 %v2776
        %v3426 = vpop.f32.mrb[0].mxu0
        %v3427 = vadd.f32 %v2867, %v3426
        %v3428 = vpop.f32.mrb[0].mxu0
        %v3429 = vadd.f32 %v2871, %v3428
        %v3430 = vpop.f32.mrb[0].mxu0
        %v3431 = vadd.f32 %v2867, %v3430
        %v3432 = vpop.f32.mrb[0].mxu0
        %v3433 = vadd.f32 %v2871, %v3432
        %3434 = vmatprep.mubr.bf16.mxu0 0
        %3435 = vmatmul.mubr.bf16.gmra.mrb[0].mxu0 %v2777
        %v3436 = vpop.f32.mrb[0].mxu0
        %v3437 = vadd.f32 %v2867, %v3436
        %v3438 = vpop.f32.mrb[0].mxu0
        %v3439 = vadd.f32 %v2871, %v3438
        %v3440 = vpop.f32.mrb[0].mxu0
        %v3441 = vadd.f32 %v2867, %v3440
        %v3442 = vpop.f32.mrb[0].mxu0
        %v3443 = vadd.f32 %v2871, %v3442
        %3444 = vmatprep.mubr.bf16.mxu0 0
        %3445 = vmatmul.mubr.bf16.gmra.mrb[0].mxu0 %v2778
        %v3446 = vpop.f32.mrb[0].mxu0
        %v3447 = vadd.f32 %v2867, %v3446
        %v3448 = vpop.f32.mrb[0].mxu0
        %v3449 = vadd.f32 %v2871, %v3448
        %v3450 = vpop.f32.mrb[0].mxu0
        %v3451 = vadd.f32 %v2867, %v3450
        %v3452 = vpop.f32.mrb[0].mxu0
        %v3453 = vadd.f32 %v2871, %v3452
        %3454 = vmatprep.mubr.bf16.mxu0 0
        %3455 = vmatmul.mubr.bf16.gmra.mrb[0].mxu0 %v2779
        %v3456 = vpop.f32.mrb[0].mxu0
        %v3457 = vadd.f32 %v2867, %v3456
        %v3458 = vpop.f32.mrb[0].mxu0
        %v3459 = vadd.f32 %v2871, %v3458
        %v3460 = vpop.f32.mrb[0].mxu0
        %v3461 = vadd.f32 %v2867, %v3460
        %v3462 = vpop.f32.mrb[0].mxu0
        %v3463 = vadd.f32 %v2871, %v3462
        %3464 = vmatprep.mubr.bf16.mxu0 0
        %3465 = vmatmul.mubr.bf16.gmra.mrb[0].mxu0 %v2780
        %v3466 = vpop.f32.mrb[0].mxu0
        %v3467 = vadd.f32 %v2867, %v3466
        %v3468 = vpop.f32.mrb[0].mxu0
        %v3469 = vadd.f32 %v2871, %v3468
        %v3470 = vpop.f32.mrb[0].mxu0
        %v3471 = vadd.f32 %v2867, %v3470
        %v3472 = vpop.f32.mrb[0].mxu0
        %v3473 = vadd.f32 %v2871, %v3472
        %3474 = vmatprep.mubr.bf16.mxu0 0
        %3475 = vmatmul.mubr.bf16.gmra.mrb[0].mxu0 %v2781
        %v3476 = vpop.f32.mrb[0].mxu0
        %v3477 = vadd.f32 %v2867, %v3476
        %v3478 = vpop.f32.mrb[0].mxu0
        %v3479 = vadd.f32 %v2871, %v3478
        %v3480 = vpop.f32.mrb[0].mxu0
        %v3481 = vadd.f32 %v2867, %v3480
        %v3482 = vpop.f32.mrb[0].mxu0
        %v3483 = vadd.f32 %v2871, %v3482
        %3484 = vmatprep.mubr.bf16.mxu0 0
        %3485 = vmatmul.mubr.bf16.gmra.mrb[0].mxu0 %v2782
        %v3486 = vpop.f32.mrb[0].mxu0
        %v3487 = vadd.f32 %v2867, %v3486
        %v3488 = vpop.f32.mrb[0].mxu0
        %v3489 = vadd.f32 %v2871, %v3488
        %v3490 = vpop.f32.mrb[0].mxu0
        %v3491 = vadd.f32 %v2867, %v3490
        %v3492 = vpop.f32.mrb[0].mxu0
        %v3493 = vadd.f32 %v2871, %v3492
        %3494 = vmatprep.mubr.bf16.mxu0 0
        %3495 = vmatmul.mubr.bf16.gmra.mrb[0].mxu0 %v2783
        %v3496 = vpop.f32.mrb[0].mxu0
        %v3497 = vadd.f32 %v2867, %v3496
        %v3498 = vpop.f32.mrb[0].mxu0
        %v3499 = vadd.f32 %v2871, %v3498
        %v3500 = vpop.f32.mrb[0].mxu0
        %v3501 = vadd.f32 %v2867, %v3500
        %v3502 = vpop.f32.mrb[0].mxu0
        %v3503 = vadd.f32 %v2871, %v3502
        %3504 = vmatprep.mubr.bf16.mxu0 0
        %3505 = vmatmul.mubr.bf16.gmra.mrb[0].mxu0 %v2784
        %v3506 = vpop.f32.mrb[0].mxu0
        %v3507 = vadd.f32 %v2867, %v3506
        %v3508 = vpop.f32.mrb[0].mxu0
        %v3509 = vadd.f32 %v2871, %v3508
        %v3510 = vpop.f32.mrb[0].mxu0
        %v3511 = vadd.f32 %v2867, %v3510
        %v3512 = vpop.f32.mrb[0].mxu0
        %v3513 = vadd.f32 %v2871, %v3512
        %3514 = vmatprep.mubr.bf16.mxu0 0
        %3515 = vmatmul.mubr.bf16.gmra.mrb[0].mxu0 %v2785
        %v3516 = vpop.f32.mrb[0].mxu0
        %v3517 = vadd.f32 %v2867, %v3516
        %v3518 = vpop.f32.mrb[0].mxu0
        %v3519 = vadd.f32 %v2871, %v3518
        %v3520 = vpop.f32.mrb[0].mxu0
        %v3521 = vadd.f32 %v2867, %v3520
        %v3522 = vpop.f32.mrb[0].mxu0
        %v3523 = vadd.f32 %v2871, %v3522
        %3524 = vmatprep.mubr.bf16.mxu0 0
        %3525 = vmatmul.mubr.bf16.gmra.mrb[0].mxu0 %v2786
        %v3526 = vpop.f32.mrb[0].mxu0
        %v3527 = vadd.f32 %v2867, %v3526
        %v3528 = vpop.f32.mrb[0].mxu0
        %v3529 = vadd.f32 %v2871, %v3528
        %v3530 = vpop.f32.mrb[0].mxu0
        %v3531 = vadd.f32 %v2867, %v3530
        %v3532 = vpop.f32.mrb[0].mxu0
        %v3533 = vadd.f32 %v2871, %v3532
        %3534 = vmatprep.mubr.bf16.mxu0 0
        %3535 = vmatmul.mubr.bf16.gmra.mrb[0].mxu0 %v2787
        %v3536 = vpop.f32.mrb[0].mxu0
        %v3537 = vadd.f32 %v2867, %v3536
        %v3538 = vpop.f32.mrb[0].mxu0
        %v3539 = vadd.f32 %v2871, %v3538
        %v3540 = vpop.f32.mrb[0].mxu0
        %v3541 = vadd.f32 %v2867, %v3540
        %v3542 = vpop.f32.mrb[0].mxu0
        %v3543 = vadd.f32 %v2871, %v3542
        %3544 = vmatprep.mubr.bf16.mxu0 0
        %3545 = vmatmul.mubr.bf16.gmra.mrb[0].mxu0 %v2788
        %v3546 = vpop.f32.mrb[0].mxu0
        %v3547 = vadd.f32 %v2867, %v3546
        %v3548 = vpop.f32.mrb[0].mxu0
        %v3549 = vadd.f32 %v2871, %v3548
        %v3550 = vpop.f32.mrb[0].mxu0
        %v3551 = vadd.f32 %v2867, %v3550
        %v3552 = vpop.f32.mrb[0].mxu0
        %v3553 = vadd.f32 %v2871, %v3552
        %3554 = vmatprep.mubr.bf16.mxu0 0
        %3555 = vmatmul.mubr.bf16.gmra.mrb[0].mxu0 %v2789
        %v3556 = vpop.f32.mrb[0].mxu0
        %v3557 = vadd.f32 %v2867, %v3556
        %v3558 = vpop.f32.mrb[0].mxu0
        %v3559 = vadd.f32 %v2871, %v3558
        %v3560 = vpop.f32.mrb[0].mxu0
        %v3561 = vadd.f32 %v2867, %v3560
        %v3562 = vpop.f32.mrb[0].mxu0
        %v3563 = vadd.f32 %v2871, %v3562
        %3564 = vdwg.mxu0
        %3565 = vmatprep.subr.bf16.mxu0 %v3072
        %3566 = vmatpush1.bf16.msra.mxu0 %v3071
        %3567 = vmatprep.subr.bf16.mxu0 %v3079
        %3568 = vmatpush1.bf16.msra.mxu0 %v3078
        %3569 = vmatprep.subr.bf16.mxu0 %v3086
        %3570 = vmatpush1.bf16.msra.mxu0 %v3085
        %3571 = vmatprep.subr.bf16.mxu0 %v3093
        %3572 = vmatpush1.bf16.msra.mxu0 %v3092
        %3573 = vmatprep.subr.bf16.mxu0 %v3100
        %3574 = vmatpush1.bf16.msra.mxu0 %v3099
        %3575 = vmatprep.subr.bf16.mxu0 %v3107
        %3576 = vmatpush1.bf16.msra.mxu0 %v3106
        %3577 = vmatprep.subr.bf16.mxu0 %v3114
        %3578 = vmatpush1.bf16.msra.mxu0 %v3113
        %3579 = vmatprep.subr.bf16.mxu0 %v3121
        %3580 = vmatpush1.bf16.msra.mxu0 %v3120
        %3581 = vmatprep.subr.bf16.mxu0 0
        %3582 = vmatpush1.bf16.msra.mxu0 0
        %3583 = vmatprep.subr.bf16.mxu0 0
        %3584 = vmatpush1.bf16.msra.mxu0 0
        %3585 = vmatprep.subr.bf16.mxu0 0
        %3586 = vmatpush1.bf16.msra.mxu0 0
        %3587 = vmatprep.subr.bf16.mxu0 0
        %3588 = vmatpush1.bf16.msra.mxu0 0
        %3589 = vmatprep.subr.bf16.mxu0 0
        %3590 = vmatpush1.bf16.msra.mxu0 0
        %3591 = vmatprep.subr.bf16.mxu0 0
        %3592 = vmatpush1.bf16.msra.mxu0 0
        %3593 = vmatprep.subr.bf16.mxu0 0
        %3594 = vmatpush1.bf16.msra.mxu0 0
        %3595 = vmatprep.subr.bf16.mxu0 0
        %3596 = vmatpush1.bf16.msra.mxu0 0
        %3597 = vmatprep.mubr.bf16.mxu0 0
        %3598 = vmatmul.mubr.bf16.gmra.mrb[0].mxu0 %v2774
        %v3599 = vpop.f32.mrb[0].mxu0
        %v3600 = vadd.f32 %v2875, %v3599
        %v3601 = vpop.f32.mrb[0].mxu0
        %v3602 = vadd.f32 %v2879, %v3601
        %v3603 = vpop.f32.mrb[0].mxu0
        %v3604 = vadd.f32 %v2875, %v3603
        %v3605 = vpop.f32.mrb[0].mxu0
        %v3606 = vadd.f32 %v2879, %v3605
        %3607 = vmatprep.mubr.bf16.mxu0 0
        %3608 = vmatmul.mubr.bf16.gmra.mrb[0].mxu0 %v2775
        %v3609 = vpop.f32.mrb[0].mxu0
        %v3610 = vadd.f32 %v2875, %v3609
        %v3611 = vpop.f32.mrb[0].mxu0
        %v3612 = vadd.f32 %v2879, %v3611
        %v3613 = vpop.f32.mrb[0].mxu0
        %v3614 = vadd.f32 %v2875, %v3613
        %v3615 = vpop.f32.mrb[0].mxu0
        %v3616 = vadd.f32 %v2879, %v3615
        %3617 = vmatprep.mubr.bf16.mxu0 0
        %3618 = vmatmul.mubr.bf16.gmra.mrb[0].mxu0 %v2776
        %v3619 = vpop.f32.mrb[0].mxu0
        %v3620 = vadd.f32 %v2875, %v3619
        %v3621 = vpop.f32.mrb[0].mxu0
        %v3622 = vadd.f32 %v2879, %v3621
        %v3623 = vpop.f32.mrb[0].mxu0
        %v3624 = vadd.f32 %v2875, %v3623
        %v3625 = vpop.f32.mrb[0].mxu0
        %v3626 = vadd.f32 %v2879, %v3625
        %3627 = vmatprep.mubr.bf16.mxu0 0
        %3628 = vmatmul.mubr.bf16.gmra.mrb[0].mxu0 %v2777
        %v3629 = vpop.f32.mrb[0].mxu0
        %v3630 = vadd.f32 %v2875, %v3629
        %v3631 = vpop.f32.mrb[0].mxu0
        %v3632 = vadd.f32 %v2879, %v3631
        %v3633 = vpop.f32.mrb[0].mxu0
        %v3634 = vadd.f32 %v2875, %v3633
        %v3635 = vpop.f32.mrb[0].mxu0
        %v3636 = vadd.f32 %v2879, %v3635
        %3637 = vmatprep.mubr.bf16.mxu0 0
        %3638 = vmatmul.mubr.bf16.gmra.mrb[0].mxu0 %v2778
        %v3639 = vpop.f32.mrb[0].mxu0
        %v3640 = vadd.f32 %v2875, %v3639
        %v3641 = vpop.f32.mrb[0].mxu0
        %v3642 = vadd.f32 %v2879, %v3641
        %v3643 = vpop.f32.mrb[0].mxu0
        %v3644 = vadd.f32 %v2875, %v3643
        %v3645 = vpop.f32.mrb[0].mxu0
        %v3646 = vadd.f32 %v2879, %v3645
        %3647 = vmatprep.mubr.bf16.mxu0 0
        %3648 = vmatmul.mubr.bf16.gmra.mrb[0].mxu0 %v2779
        %v3649 = vpop.f32.mrb[0].mxu0
        %v3650 = vadd.f32 %v2875, %v3649
        %v3651 = vpop.f32.mrb[0].mxu0
        %v3652 = vadd.f32 %v2879, %v3651
        %v3653 = vpop.f32.mrb[0].mxu0
        %v3654 = vadd.f32 %v2875, %v3653
        %v3655 = vpop.f32.mrb[0].mxu0
        %v3656 = vadd.f32 %v2879, %v3655
        %3657 = vmatprep.mubr.bf16.mxu0 0
        %3658 = vmatmul.mubr.bf16.gmra.mrb[0].mxu0 %v2780
        %v3659 = vpop.f32.mrb[0].mxu0
        %v3660 = vadd.f32 %v2875, %v3659
        %v3661 = vpop.f32.mrb[0].mxu0
        %v3662 = vadd.f32 %v2879, %v3661
        %v3663 = vpop.f32.mrb[0].mxu0
        %v3664 = vadd.f32 %v2875, %v3663
        %v3665 = vpop.f32.mrb[0].mxu0
        %v3666 = vadd.f32 %v2879, %v3665
        %3667 = vmatprep.mubr.bf16.mxu0 0
        %3668 = vmatmul.mubr.bf16.gmra.mrb[0].mxu0 %v2781
        %v3669 = vpop.f32.mrb[0].mxu0
        %v3670 = vadd.f32 %v2875, %v3669
        %v3671 = vpop.f32.mrb[0].mxu0
        %v3672 = vadd.f32 %v2879, %v3671
        %v3673 = vpop.f32.mrb[0].mxu0
        %v3674 = vadd.f32 %v2875, %v3673
        %v3675 = vpop.f32.mrb[0].mxu0
        %v3676 = vadd.f32 %v2879, %v3675
        %3677 = vmatprep.mubr.bf16.mxu0 0
        %3678 = vmatmul.mubr.bf16.gmra.mrb[0].mxu0 %v2782
        %v3679 = vpop.f32.mrb[0].mxu0
        %v3680 = vadd.f32 %v2875, %v3679
        %v3681 = vpop.f32.mrb[0].mxu0
        %v3682 = vadd.f32 %v2879, %v3681
        %v3683 = vpop.f32.mrb[0].mxu0
        %v3684 = vadd.f32 %v2875, %v3683
        %v3685 = vpop.f32.mrb[0].mxu0
        %v3686 = vadd.f32 %v2879, %v3685
        %3687 = vmatprep.mubr.bf16.mxu0 0
        %3688 = vmatmul.mubr.bf16.gmra.mrb[0].mxu0 %v2783
        %v3689 = vpop.f32.mrb[0].mxu0
        %v3690 = vadd.f32 %v2875, %v3689
        %v3691 = vpop.f32.mrb[0].mxu0
        %v3692 = vadd.f32 %v2879, %v3691
        %v3693 = vpop.f32.mrb[0].mxu0
        %v3694 = vadd.f32 %v2875, %v3693
        %v3695 = vpop.f32.mrb[0].mxu0
        %v3696 = vadd.f32 %v2879, %v3695
        %3697 = vmatprep.mubr.bf16.mxu0 0
        %3698 = vmatmul.mubr.bf16.gmra.mrb[0].mxu0 %v2784
        %v3699 = vpop.f32.mrb[0].mxu0
        %v3700 = vadd.f32 %v2875, %v3699
        %v3701 = vpop.f32.mrb[0].mxu0
        %v3702 = vadd.f32 %v2879, %v3701
        %v3703 = vpop.f32.mrb[0].mxu0
        %v3704 = vadd.f32 %v2875, %v3703
        %v3705 = vpop.f32.mrb[0].mxu0
        %v3706 = vadd.f32 %v2879, %v3705
        %3707 = vmatprep.mubr.bf16.mxu0 0
        %3708 = vmatmul.mubr.bf16.gmra.mrb[0].mxu0 %v2785
        %v3709 = vpop.f32.mrb[0].mxu0
        %v3710 = vadd.f32 %v2875, %v3709
        %v3711 = vpop.f32.mrb[0].mxu0
        %v3712 = vadd.f32 %v2879, %v3711
        %v3713 = vpop.f32.mrb[0].mxu0
        %v3714 = vadd.f32 %v2875, %v3713
        %v3715 = vpop.f32.mrb[0].mxu0
        %v3716 = vadd.f32 %v2879, %v3715
        %3717 = vmatprep.mubr.bf16.mxu0 0
        %3718 = vmatmul.mubr.bf16.gmra.mrb[0].mxu0 %v2786
        %v3719 = vpop.f32.mrb[0].mxu0
        %v3720 = vadd.f32 %v2875, %v3719
        %v3721 = vpop.f32.mrb[0].mxu0
        %v3722 = vadd.f32 %v2879, %v3721
        %v3723 = vpop.f32.mrb[0].mxu0
        %v3724 = vadd.f32 %v2875, %v3723
        %v3725 = vpop.f32.mrb[0].mxu0
        %v3726 = vadd.f32 %v2879, %v3725
        %3727 = vmatprep.mubr.bf16.mxu0 0
        %3728 = vmatmul.mubr.bf16.gmra.mrb[0].mxu0 %v2787
        %v3729 = vpop.f32.mrb[0].mxu0
        %v3730 = vadd.f32 %v2875, %v3729
        %v3731 = vpop.f32.mrb[0].mxu0
        %v3732 = vadd.f32 %v2879, %v3731
        %v3733 = vpop.f32.mrb[0].mxu0
        %v3734 = vadd.f32 %v2875, %v3733
        %v3735 = vpop.f32.mrb[0].mxu0
        %v3736 = vadd.f32 %v2879, %v3735
        %3737 = vmatprep.mubr.bf16.mxu0 0
        %3738 = vmatmul.mubr.bf16.gmra.mrb[0].mxu0 %v2788
        %v3739 = vpop.f32.mrb[0].mxu0
        %v3740 = vadd.f32 %v2875, %v3739
        %v3741 = vpop.f32.mrb[0].mxu0
        %v3742 = vadd.f32 %v2879, %v3741
        %v3743 = vpop.f32.mrb[0].mxu0
        %v3744 = vadd.f32 %v2875, %v3743
        %v3745 = vpop.f32.mrb[0].mxu0
        %v3746 = vadd.f32 %v2879, %v3745
        %3747 = vmatprep.mubr.bf16.mxu0 0
        %3748 = vmatmul.mubr.bf16.gmra.mrb[0].mxu0 %v2789
        %v3749 = vpop.f32.mrb[0].mxu0
        %v3750 = vadd.f32 %v2875, %v3749
        %v3751 = vpop.f32.mrb[0].mxu0
        %v3752 = vadd.f32 %v2879, %v3751
        %v3753 = vpop.f32.mrb[0].mxu0
        %v3754 = vadd.f32 %v2875, %v3753
        %v3755 = vpop.f32.mrb[0].mxu0
        %v3756 = vadd.f32 %v2879, %v3755
        %3757 = vdwg.mxu0
        %3758 = vmatprep.subr.bf16.mxu0 0
        %3759 = vmatpush1.bf16.msra.mxu0 %v3073
        %3760 = vmatprep.subr.bf16.mxu0 0
        %3761 = vmatpush1.bf16.msra.mxu0 %v3080
        %3762 = vmatprep.subr.bf16.mxu0 0
        %3763 = vmatpush1.bf16.msra.mxu0 %v3087
        %3764 = vmatprep.subr.bf16.mxu0 0
        %3765 = vmatpush1.bf16.msra.mxu0 %v3094
        %3766 = vmatprep.subr.bf16.mxu0 0
        %3767 = vmatpush1.bf16.msra.mxu0 %v3101
        %3768 = vmatprep.subr.bf16.mxu0 0
        %3769 = vmatpush1.bf16.msra.mxu0 %v3108
        %3770 = vmatprep.subr.bf16.mxu0 0
        %3771 = vmatpush1.bf16.msra.mxu0 %v3115
        %3772 = vmatprep.subr.bf16.mxu0 0
        %3773 = vmatpush1.bf16.msra.mxu0 %v3122
        %3774 = vmatprep.subr.bf16.mxu0 0
        %3775 = vmatpush1.bf16.msra.mxu0 0
        %3776 = vmatprep.subr.bf16.mxu0 0
        %3777 = vmatpush1.bf16.msra.mxu0 0
        %3778 = vmatprep.subr.bf16.mxu0 0
        %3779 = vmatpush1.bf16.msra.mxu0 0
        %3780 = vmatprep.subr.bf16.mxu0 0
        %3781 = vmatpush1.bf16.msra.mxu0 0
        %3782 = vmatprep.subr.bf16.mxu0 0
        %3783 = vmatpush1.bf16.msra.mxu0 0
        %3784 = vmatprep.subr.bf16.mxu0 0
        %3785 = vmatpush1.bf16.msra.mxu0 0
        %3786 = vmatprep.subr.bf16.mxu0 0
        %3787 = vmatpush1.bf16.msra.mxu0 0
        %3788 = vmatprep.subr.bf16.mxu0 0
        %3789 = vmatpush1.bf16.msra.mxu0 0
        %3790 = vmatprep.mubr.bf16.mxu0 0
        %3791 = vmatmul.mubr.bf16.gmra.mrb[0].mxu0 %v2774
        %v3792 = vpop.f32.mrb[0].mxu0
        %v3793 = vadd.f32 %v2883, %v3792
        %v3794 = vpop.f32.mrb[0].mxu0
        %v3795 = vpop.f32.mrb[0].mxu0
        %v3796 = vadd.f32 %v2883, %v3795
        %v3797 = vpop.f32.mrb[0].mxu0
        %3798 = vmatprep.mubr.bf16.mxu0 0
        %3799 = vmatmul.mubr.bf16.gmra.mrb[0].mxu0 %v2775
        %v3800 = vpop.f32.mrb[0].mxu0
        %v3801 = vadd.f32 %v2883, %v3800
        %v3802 = vpop.f32.mrb[0].mxu0
        %v3803 = vpop.f32.mrb[0].mxu0
        %v3804 = vadd.f32 %v2883, %v3803
        %v3805 = vpop.f32.mrb[0].mxu0
        %3806 = vmatprep.mubr.bf16.mxu0 0
        %3807 = vmatmul.mubr.bf16.gmra.mrb[0].mxu0 %v2776
        %v3808 = vpop.f32.mrb[0].mxu0
        %v3809 = vadd.f32 %v2883, %v3808
        %v3810 = vpop.f32.mrb[0].mxu0
        %v3811 = vpop.f32.mrb[0].mxu0
        %v3812 = vadd.f32 %v2883, %v3811
        %v3813 = vpop.f32.mrb[0].mxu0
        %3814 = vmatprep.mubr.bf16.mxu0 0
        %3815 = vmatmul.mubr.bf16.gmra.mrb[0].mxu0 %v2777
        %v3816 = vpop.f32.mrb[0].mxu0
        %v3817 = vadd.f32 %v2883, %v3816
        %v3818 = vpop.f32.mrb[0].mxu0
        %v3819 = vpop.f32.mrb[0].mxu0
        %v3820 = vadd.f32 %v2883, %v3819
        %v3821 = vpop.f32.mrb[0].mxu0
        %3822 = vmatprep.mubr.bf16.mxu0 0
        %3823 = vmatmul.mubr.bf16.gmra.mrb[0].mxu0 %v2778
        %v3824 = vpop.f32.mrb[0].mxu0
        %v3825 = vadd.f32 %v2883, %v3824
        %v3826 = vpop.f32.mrb[0].mxu0
        %v3827 = vpop.f32.mrb[0].mxu0
        %v3828 = vadd.f32 %v2883, %v3827
        %v3829 = vpop.f32.mrb[0].mxu0
        %3830 = vmatprep.mubr.bf16.mxu0 0
        %3831 = vmatmul.mubr.bf16.gmra.mrb[0].mxu0 %v2779
        %v3832 = vpop.f32.mrb[0].mxu0
        %v3833 = vadd.f32 %v2883, %v3832
        %v3834 = vpop.f32.mrb[0].mxu0
        %v3835 = vpop.f32.mrb[0].mxu0
        %v3836 = vadd.f32 %v2883, %v3835
        %v3837 = vpop.f32.mrb[0].mxu0
        %3838 = vmatprep.mubr.bf16.mxu0 0
        %3839 = vmatmul.mubr.bf16.gmra.mrb[0].mxu0 %v2780
        %v3840 = vpop.f32.mrb[0].mxu0
        %v3841 = vadd.f32 %v2883, %v3840
        %v3842 = vpop.f32.mrb[0].mxu0
        %v3843 = vpop.f32.mrb[0].mxu0
        %v3844 = vadd.f32 %v2883, %v3843
        %v3845 = vpop.f32.mrb[0].mxu0
        %3846 = vmatprep.mubr.bf16.mxu0 0
        %3847 = vmatmul.mubr.bf16.gmra.mrb[0].mxu0 %v2781
        %v3848 = vpop.f32.mrb[0].mxu0
        %v3849 = vadd.f32 %v2883, %v3848
        %v3850 = vpop.f32.mrb[0].mxu0
        %v3851 = vpop.f32.mrb[0].mxu0
        %v3852 = vadd.f32 %v2883, %v3851
        %v3853 = vpop.f32.mrb[0].mxu0
        %3854 = vmatprep.mubr.bf16.mxu0 0
        %3855 = vmatmul.mubr.bf16.gmra.mrb[0].mxu0 %v2782
        %v3856 = vpop.f32.mrb[0].mxu0
        %v3857 = vadd.f32 %v2883, %v3856
        %v3858 = vpop.f32.mrb[0].mxu0
        %v3859 = vpop.f32.mrb[0].mxu0
        %v3860 = vadd.f32 %v2883, %v3859
        %v3861 = vpop.f32.mrb[0].mxu0
        %3862 = vmatprep.mubr.bf16.mxu0 0
        %3863 = vmatmul.mubr.bf16.gmra.mrb[0].mxu0 %v2783
        %v3864 = vpop.f32.mrb[0].mxu0
        %v3865 = vadd.f32 %v2883, %v3864
        %v3866 = vpop.f32.mrb[0].mxu0
        %v3867 = vpop.f32.mrb[0].mxu0
        %v3868 = vadd.f32 %v2883, %v3867
        %v3869 = vpop.f32.mrb[0].mxu0
        %3870 = vmatprep.mubr.bf16.mxu0 0
        %3871 = vmatmul.mubr.bf16.gmra.mrb[0].mxu0 %v2784
        %v3872 = vpop.f32.mrb[0].mxu0
        %v3873 = vadd.f32 %v2883, %v3872
        %v3874 = vpop.f32.mrb[0].mxu0
        %v3875 = vpop.f32.mrb[0].mxu0
        %v3876 = vadd.f32 %v2883, %v3875
        %v3877 = vpop.f32.mrb[0].mxu0
        %3878 = vmatprep.mubr.bf16.mxu0 0
        %3879 = vmatmul.mubr.bf16.gmra.mrb[0].mxu0 %v2785
        %v3880 = vpop.f32.mrb[0].mxu0
        %v3881 = vadd.f32 %v2883, %v3880
        %v3882 = vpop.f32.mrb[0].mxu0
        %v3883 = vpop.f32.mrb[0].mxu0
        %v3884 = vadd.f32 %v2883, %v3883
        %v3885 = vpop.f32.mrb[0].mxu0
        %3886 = vmatprep.mubr.bf16.mxu0 0
        %3887 = vmatmul.mubr.bf16.gmra.mrb[0].mxu0 %v2786
        %v3888 = vpop.f32.mrb[0].mxu0
        %v3889 = vadd.f32 %v2883, %v3888
        %v3890 = vpop.f32.mrb[0].mxu0
        %v3891 = vpop.f32.mrb[0].mxu0
        %v3892 = vadd.f32 %v2883, %v3891
        %v3893 = vpop.f32.mrb[0].mxu0
        %3894 = vmatprep.mubr.bf16.mxu0 0
        %3895 = vmatmul.mubr.bf16.gmra.mrb[0].mxu0 %v2787
        %v3896 = vpop.f32.mrb[0].mxu0
        %v3897 = vadd.f32 %v2883, %v3896
        %v3898 = vpop.f32.mrb[0].mxu0
        %v3899 = vpop.f32.mrb[0].mxu0
        %v3900 = vadd.f32 %v2883, %v3899
        %v3901 = vpop.f32.mrb[0].mxu0
        %3902 = vmatprep.mubr.bf16.mxu0 0
        %3903 = vmatmul.mubr.bf16.gmra.mrb[0].mxu0 %v2788
        %v3904 = vpop.f32.mrb[0].mxu0
        %v3905 = vadd.f32 %v2883, %v3904
        %v3906 = vpop.f32.mrb[0].mxu0
        %v3907 = vpop.f32.mrb[0].mxu0
        %v3908 = vadd.f32 %v2883, %v3907
        %v3909 = vpop.f32.mrb[0].mxu0
        %3910 = vmatprep.mubr.bf16.mxu0 0
        %3911 = vmatmul.mubr.bf16.gmra.mrb[0].mxu0 %v2789
        %v3912 = vpop.f32.mrb[0].mxu0
        %v3913 = vadd.f32 %v2883, %v3912
        %v3914 = vpop.f32.mrb[0].mxu0
        %v3915 = vpop.f32.mrb[0].mxu0
        %v3916 = vadd.f32 %v2883, %v3915
        %v3917 = vpop.f32.mrb[0].mxu0
        %3918 = vdwg.mxu0
        %v3919 = vmax.f32 %v3214, 0.0
        %v3920 = vmax.f32 %v3216, 0.0
        %v3921 = vmax.f32 %v3407, 0.0
        %v3922 = vmax.f32 %v3409, 0.0
        %v3923 = vmax.f32 %v3600, 0.0
        %v3924 = vmax.f32 %v3602, 0.0
        %v3925 = vmax.f32 %v3793, 0.0
        %v3926 = vmax.f32 %v3218, 0.0
        %v3927 = vmax.f32 %v3220, 0.0
        %v3928 = vmax.f32 %v3411, 0.0
        %v3929 = vmax.f32 %v3413, 0.0
        %v3930 = vmax.f32 %v3604, 0.0
        %v3931 = vmax.f32 %v3606, 0.0
        %v3932 = vmax.f32 %v3796, 0.0
        %v3933 = vmax.f32 %v3224, 0.0
        %v3934 = vmax.f32 %v3226, 0.0
        %v3935 = vmax.f32 %v3417, 0.0
        %v3936 = vmax.f32 %v3419, 0.0
        %v3937 = vmax.f32 %v3610, 0.0
        %v3938 = vmax.f32 %v3612, 0.0
        %v3939 = vmax.f32 %v3801, 0.0
        %v3940 = vmax.f32 %v3228, 0.0
        %v3941 = vmax.f32 %v3230, 0.0
        %v3942 = vmax.f32 %v3421, 0.0
        %v3943 = vmax.f32 %v3423, 0.0
        %v3944 = vmax.f32 %v3614, 0.0
        %v3945 = vmax.f32 %v3616, 0.0
        %v3946 = vmax.f32 %v3804, 0.0
        %v3947 = vmax.f32 %v3234, 0.0
        %v3948 = vmax.f32 %v3236, 0.0
        %v3949 = vmax.f32 %v3427, 0.0
        %v3950 = vmax.f32 %v3429, 0.0
        %v3951 = vmax.f32 %v3620, 0.0
        %v3952 = vmax.f32 %v3622, 0.0
        %v3953 = vmax.f32 %v3809, 0.0
        %v3954 = vmax.f32 %v3238, 0.0
        %v3955 = vmax.f32 %v3240, 0.0
        %v3956 = vmax.f32 %v3431, 0.0
        %v3957 = vmax.f32 %v3433, 0.0
        %v3958 = vmax.f32 %v3624, 0.0
        %v3959 = vmax.f32 %v3626, 0.0
        %v3960 = vmax.f32 %v3812, 0.0
        %v3961 = vmax.f32 %v3244, 0.0
        %v3962 = vmax.f32 %v3246, 0.0
        %v3963 = vmax.f32 %v3437, 0.0
        %v3964 = vmax.f32 %v3439, 0.0
        %v3965 = vmax.f32 %v3630, 0.0
        %v3966 = vmax.f32 %v3632, 0.0
        %v3967 = vmax.f32 %v3817, 0.0
        %v3968 = vmax.f32 %v3248, 0.0
        %v3969 = vmax.f32 %v3250, 0.0
        %v3970 = vmax.f32 %v3441, 0.0
        %v3971 = vmax.f32 %v3443, 0.0
        %v3972 = vmax.f32 %v3634, 0.0
        %v3973 = vmax.f32 %v3636, 0.0
        %v3974 = vmax.f32 %v3820, 0.0
        %v3975 = vmax.f32 %v3254, 0.0
        %v3976 = vmax.f32 %v3256, 0.0
        %v3977 = vmax.f32 %v3447, 0.0
        %v3978 = vmax.f32 %v3449, 0.0
        %v3979 = vmax.f32 %v3640, 0.0
        %v3980 = vmax.f32 %v3642, 0.0
        %v3981 = vmax.f32 %v3825, 0.0
        %v3982 = vmax.f32 %v3258, 0.0
        %v3983 = vmax.f32 %v3260, 0.0
        %v3984 = vmax.f32 %v3451, 0.0
        %v3985 = vmax.f32 %v3453, 0.0
        %v3986 = vmax.f32 %v3644, 0.0
        %v3987 = vmax.f32 %v3646, 0.0
        %v3988 = vmax.f32 %v3828, 0.0
        %v3989 = vmax.f32 %v3264, 0.0
        %v3990 = vmax.f32 %v3266, 0.0
        %v3991 = vmax.f32 %v3457, 0.0
        %v3992 = vmax.f32 %v3459, 0.0
        %v3993 = vmax.f32 %v3650, 0.0
        %v3994 = vmax.f32 %v3652, 0.0
        %v3995 = vmax.f32 %v3833, 0.0
        %v3996 = vmax.f32 %v3268, 0.0
        %v3997 = vmax.f32 %v3270, 0.0
        %v3998 = vmax.f32 %v3461, 0.0
        %v3999 = vmax.f32 %v3463, 0.0
        %v4000 = vmax.f32 %v3654, 0.0
        %v4001 = vmax.f32 %v3656, 0.0
        %v4002 = vmax.f32 %v3836, 0.0
        %v4003 = vmax.f32 %v3274, 0.0
        %v4004 = vmax.f32 %v3276, 0.0
        %v4005 = vmax.f32 %v3467, 0.0
        %v4006 = vmax.f32 %v3469, 0.0
        %v4007 = vmax.f32 %v3660, 0.0
        %v4008 = vmax.f32 %v3662, 0.0
        %v4009 = vmax.f32 %v3841, 0.0
        %v4010 = vmax.f32 %v3278, 0.0
        %v4011 = vmax.f32 %v3280, 0.0
        %v4012 = vmax.f32 %v3471, 0.0
        %v4013 = vmax.f32 %v3473, 0.0
        %v4014 = vmax.f32 %v3664, 0.0
        %v4015 = vmax.f32 %v3666, 0.0
        %v4016 = vmax.f32 %v3844, 0.0
        %v4017 = vmax.f32 %v3284, 0.0
        %v4018 = vmax.f32 %v3286, 0.0
        %v4019 = vmax.f32 %v3477, 0.0
        %v4020 = vmax.f32 %v3479, 0.0
        %v4021 = vmax.f32 %v3670, 0.0
        %v4022 = vmax.f32 %v3672, 0.0
        %v4023 = vmax.f32 %v3849, 0.0
        %v4024 = vmax.f32 %v3288, 0.0
        %v4025 = vmax.f32 %v3290, 0.0
        %v4026 = vmax.f32 %v3481, 0.0
        %v4027 = vmax.f32 %v3483, 0.0
        %v4028 = vmax.f32 %v3674, 0.0
        %v4029 = vmax.f32 %v3676, 0.0
        %v4030 = vmax.f32 %v3852, 0.0
        %v4031 = vmax.f32 %v3294, 0.0
        %v4032 = vmax.f32 %v3296, 0.0
        %v4033 = vmax.f32 %v3487, 0.0
        %v4034 = vmax.f32 %v3489, 0.0
        %v4035 = vmax.f32 %v3680, 0.0
        %v4036 = vmax.f32 %v3682, 0.0
        %v4037 = vmax.f32 %v3857, 0.0
        %v4038 = vmax.f32 %v3298, 0.0
        %v4039 = vmax.f32 %v3300, 0.0
        %v4040 = vmax.f32 %v3491, 0.0
        %v4041 = vmax.f32 %v3493, 0.0
        %v4042 = vmax.f32 %v3684, 0.0
        %v4043 = vmax.f32 %v3686, 0.0
        %v4044 = vmax.f32 %v3860, 0.0
        %v4045 = vmax.f32 %v3304, 0.0
        %v4046 = vmax.f32 %v3306, 0.0
        %v4047 = vmax.f32 %v3497, 0.0
        %v4048 = vmax.f32 %v3499, 0.0
        %v4049 = vmax.f32 %v3690, 0.0
        %v4050 = vmax.f32 %v3692, 0.0
        %v4051 = vmax.f32 %v3865, 0.0
        %v4052 = vmax.f32 %v3308, 0.0
        %v4053 = vmax.f32 %v3310, 0.0
        %v4054 = vmax.f32 %v3501, 0.0
        %v4055 = vmax.f32 %v3503, 0.0
        %v4056 = vmax.f32 %v3694, 0.0
        %v4057 = vmax.f32 %v3696, 0.0
        %v4058 = vmax.f32 %v3868, 0.0
        %v4059 = vmax.f32 %v3314, 0.0
        %v4060 = vmax.f32 %v3316, 0.0
        %v4061 = vmax.f32 %v3507, 0.0
        %v4062 = vmax.f32 %v3509, 0.0
        %v4063 = vmax.f32 %v3700, 0.0
        %v4064 = vmax.f32 %v3702, 0.0
        %v4065 = vmax.f32 %v3873, 0.0
        %v4066 = vmax.f32 %v3318, 0.0
        %v4067 = vmax.f32 %v3320, 0.0
        %v4068 = vmax.f32 %v3511, 0.0
        %v4069 = vmax.f32 %v3513, 0.0
        %v4070 = vmax.f32 %v3704, 0.0
        %v4071 = vmax.f32 %v3706, 0.0
        %v4072 = vmax.f32 %v3876, 0.0
        %v4073 = vmax.f32 %v3324, 0.0
        %v4074 = vmax.f32 %v3326, 0.0
        %v4075 = vmax.f32 %v3517, 0.0
        %v4076 = vmax.f32 %v3519, 0.0
        %v4077 = vmax.f32 %v3710, 0.0
        %v4078 = vmax.f32 %v3712, 0.0
        %v4079 = vmax.f32 %v3881, 0.0
        %v4080 = vmax.f32 %v3328, 0.0
        %v4081 = vmax.f32 %v3330, 0.0
        %v4082 = vmax.f32 %v3521, 0.0
        %v4083 = vmax.f32 %v3523, 0.0
        %v4084 = vmax.f32 %v3714, 0.0
        %v4085 = vmax.f32 %v3716, 0.0
        %v4086 = vmax.f32 %v3884, 0.0
        %v4087 = vmax.f32 %v3334, 0.0
        %v4088 = vmax.f32 %v3336, 0.0
        %v4089 = vmax.f32 %v3527, 0.0
        %v4090 = vmax.f32 %v3529, 0.0
        %v4091 = vmax.f32 %v3720, 0.0
        %v4092 = vmax.f32 %v3722, 0.0
        %v4093 = vmax.f32 %v3889, 0.0
        %v4094 = vmax.f32 %v3338, 0.0
        %v4095 = vmax.f32 %v3340, 0.0
        %v4096 = vmax.f32 %v3531, 0.0
        %v4097 = vmax.f32 %v3533, 0.0
        %v4098 = vmax.f32 %v3724, 0.0
        %v4099 = vmax.f32 %v3726, 0.0
        %v4100 = vmax.f32 %v3892, 0.0
        %v4101 = vmax.f32 %v3344, 0.0
        %v4102 = vmax.f32 %v3346, 0.0
        %v4103 = vmax.f32 %v3537, 0.0
        %v4104 = vmax.f32 %v3539, 0.0
        %v4105 = vmax.f32 %v3730, 0.0
        %v4106 = vmax.f32 %v3732, 0.0
        %v4107 = vmax.f32 %v3897, 0.0
        %v4108 = vmax.f32 %v3348, 0.0
        %v4109 = vmax.f32 %v3350, 0.0
        %v4110 = vmax.f32 %v3541, 0.0
        %v4111 = vmax.f32 %v3543, 0.0
        %v4112 = vmax.f32 %v3734, 0.0
        %v4113 = vmax.f32 %v3736, 0.0
        %v4114 = vmax.f32 %v3900, 0.0
        %v4115 = vmax.f32 %v3354, 0.0
        %v4116 = vmax.f32 %v3356, 0.0
        %v4117 = vmax.f32 %v3547, 0.0
        %v4118 = vmax.f32 %v3549, 0.0
        %v4119 = vmax.f32 %v3740, 0.0
        %v4120 = vmax.f32 %v3742, 0.0
        %v4121 = vmax.f32 %v3905, 0.0
        %v4122 = vmax.f32 %v3358, 0.0
        %v4123 = vmax.f32 %v3360, 0.0
        %v4124 = vmax.f32 %v3551, 0.0
        %v4125 = vmax.f32 %v3553, 0.0
        %v4126 = vmax.f32 %v3744, 0.0
        %v4127 = vmax.f32 %v3746, 0.0
        %v4128 = vmax.f32 %v3908, 0.0
        %v4129 = vmax.f32 %v3364, 0.0
        %v4130 = vmax.f32 %v3366, 0.0
        %v4131 = vmax.f32 %v3557, 0.0
        %v4132 = vmax.f32 %v3559, 0.0
        %v4133 = vmax.f32 %v3750, 0.0
        %v4134 = vmax.f32 %v3752, 0.0
        %v4135 = vmax.f32 %v3913, 0.0
        %v4136 = vmax.f32 %v3368, 0.0
        %v4137 = vmax.f32 %v3370, 0.0
        %v4138 = vmax.f32 %v3561, 0.0
        %v4139 = vmax.f32 %v3563, 0.0
        %v4140 = vmax.f32 %v3754, 0.0
        %v4141 = vmax.f32 %v3756, 0.0
        %v4142 = vmax.f32 %v3916, 0.0
        %v4143 = vpack.c.bf16 %v3926, %v3919
        %v4144 = vpack.c.bf16 %v3927, %v3920
        %v4145 = vpack.c.bf16 %v3928, %v3921
        %v4146 = vpack.c.bf16 %v3929, %v3922
        %v4147 = vpack.c.bf16 %v3930, %v3923
        %v4148 = vpack.c.bf16 %v3931, %v3924
        %v4149 = vpack.c.bf16 %v3932, %v3925
        %v4150 = vpack.c.bf16 %v3940, %v3933
        %v4151 = vpack.c.bf16 %v3941, %v3934
        %v4152 = vpack.c.bf16 %v3942, %v3935
        %v4153 = vpack.c.bf16 %v3943, %v3936
        %v4154 = vpack.c.bf16 %v3944, %v3937
        %v4155 = vpack.c.bf16 %v3945, %v3938
        %v4156 = vpack.c.bf16 %v3946, %v3939
        %v4157 = vpack.c.bf16 %v3954, %v3947
        %v4158 = vpack.c.bf16 %v3955, %v3948
        %v4159 = vpack.c.bf16 %v3956, %v3949
        %v4160 = vpack.c.bf16 %v3957, %v3950
        %v4161 = vpack.c.bf16 %v3958, %v3951
        %v4162 = vpack.c.bf16 %v3959, %v3952
        %v4163 = vpack.c.bf16 %v3960, %v3953
        %v4164 = vpack.c.bf16 %v3968, %v3961
        %v4165 = vpack.c.bf16 %v3969, %v3962
        %v4166 = vpack.c.bf16 %v3970, %v3963
        %v4167 = vpack.c.bf16 %v3971, %v3964
        %v4168 = vpack.c.bf16 %v3972, %v3965
        %v4169 = vpack.c.bf16 %v3973, %v3966
        %v4170 = vpack.c.bf16 %v3974, %v3967
        %v4171 = vpack.c.bf16 %v3982, %v3975
        %v4172 = vpack.c.bf16 %v3983, %v3976
        %v4173 = vpack.c.bf16 %v3984, %v3977
        %v4174 = vpack.c.bf16 %v3985, %v3978
        %v4175 = vpack.c.bf16 %v3986, %v3979
        %v4176 = vpack.c.bf16 %v3987, %v3980
        %v4177 = vpack.c.bf16 %v3988, %v3981
        %v4178 = vpack.c.bf16 %v3996, %v3989
        %v4179 = vpack.c.bf16 %v3997, %v3990
        %v4180 = vpack.c.bf16 %v3998, %v3991
        %v4181 = vpack.c.bf16 %v3999, %v3992
        %v4182 = vpack.c.bf16 %v4000, %v3993
        %v4183 = vpack.c.bf16 %v4001, %v3994
        %v4184 = vpack.c.bf16 %v4002, %v3995
        %v4185 = vpack.c.bf16 %v4010, %v4003
        %v4186 = vpack.c.bf16 %v4011, %v4004
        %v4187 = vpack.c.bf16 %v4012, %v4005
        %v4188 = vpack.c.bf16 %v4013, %v4006
        %v4189 = vpack.c.bf16 %v4014, %v4007
        %v4190 = vpack.c.bf16 %v4015, %v4008
        %v4191 = vpack.c.bf16 %v4016, %v4009
        %v4192 = vpack.c.bf16 %v4024, %v4017
        %v4193 = vpack.c.bf16 %v4025, %v4018
        %v4194 = vpack.c.bf16 %v4026, %v4019
        %v4195 = vpack.c.bf16 %v4027, %v4020
        %v4196 = vpack.c.bf16 %v4028, %v4021
        %v4197 = vpack.c.bf16 %v4029, %v4022
        %v4198 = vpack.c.bf16 %v4030, %v4023
        %v4199 = vpack.c.bf16 %v4038, %v4031
        %v4200 = vpack.c.bf16 %v4039, %v4032
        %v4201 = vpack.c.bf16 %v4040, %v4033
        %v4202 = vpack.c.bf16 %v4041, %v4034
        %v4203 = vpack.c.bf16 %v4042, %v4035
        %v4204 = vpack.c.bf16 %v4043, %v4036
        %v4205 = vpack.c.bf16 %v4044, %v4037
        %v4206 = vpack.c.bf16 %v4052, %v4045
        %v4207 = vpack.c.bf16 %v4053, %v4046
        %v4208 = vpack.c.bf16 %v4054, %v4047
        %v4209 = vpack.c.bf16 %v4055, %v4048
        %v4210 = vpack.c.bf16 %v4056, %v4049
        %v4211 = vpack.c.bf16 %v4057, %v4050
        %v4212 = vpack.c.bf16 %v4058, %v4051
        %v4213 = vpack.c.bf16 %v4066, %v4059
        %v4214 = vpack.c.bf16 %v4067, %v4060
        %v4215 = vpack.c.bf16 %v4068, %v4061
        %v4216 = vpack.c.bf16 %v4069, %v4062
        %v4217 = vpack.c.bf16 %v4070, %v4063
        %v4218 = vpack.c.bf16 %v4071, %v4064
        %v4219 = vpack.c.bf16 %v4072, %v4065
        %v4220 = vpack.c.bf16 %v4080, %v4073
        %v4221 = vpack.c.bf16 %v4081, %v4074
        %v4222 = vpack.c.bf16 %v4082, %v4075
        %v4223 = vpack.c.bf16 %v4083, %v4076
        %v4224 = vpack.c.bf16 %v4084, %v4077
        %v4225 = vpack.c.bf16 %v4085, %v4078
        %v4226 = vpack.c.bf16 %v4086, %v4079
        %v4227 = vpack.c.bf16 %v4094, %v4087
        %v4228 = vpack.c.bf16 %v4095, %v4088
        %v4229 = vpack.c.bf16 %v4096, %v4089
        %v4230 = vpack.c.bf16 %v4097, %v4090
        %v4231 = vpack.c.bf16 %v4098, %v4091
        %v4232 = vpack.c.bf16 %v4099, %v4092
        %v4233 = vpack.c.bf16 %v4100, %v4093
        %v4234 = vpack.c.bf16 %v4108, %v4101
        %v4235 = vpack.c.bf16 %v4109, %v4102
        %v4236 = vpack.c.bf16 %v4110, %v4103
        %v4237 = vpack.c.bf16 %v4111, %v4104
        %v4238 = vpack.c.bf16 %v4112, %v4105
        %v4239 = vpack.c.bf16 %v4113, %v4106
        %v4240 = vpack.c.bf16 %v4114, %v4107
        %v4241 = vpack.c.bf16 %v4122, %v4115
        %v4242 = vpack.c.bf16 %v4123, %v4116
        %v4243 = vpack.c.bf16 %v4124, %v4117
        %v4244 = vpack.c.bf16 %v4125, %v4118
        %v4245 = vpack.c.bf16 %v4126, %v4119
        %v4246 = vpack.c.bf16 %v4127, %v4120
        %v4247 = vpack.c.bf16 %v4128, %v4121
        %v4248 = vpack.c.bf16 %v4136, %v4129
        %v4249 = vpack.c.bf16 %v4137, %v4130
        %v4250 = vpack.c.bf16 %v4138, %v4131
        %v4251 = vpack.c.bf16 %v4139, %v4132
        %v4252 = vpack.c.bf16 %v4140, %v4133
        %v4253 = vpack.c.bf16 %v4141, %v4134
        %v4254 = vpack.c.bf16 %v4142, %v4135
        %v4255 = vld [vmem:[%s7] sm:$0xf]
        %v4256 = vld [vmem:[%s7 + $0x4] sm:$0xf]
        %v4257 = vld [vmem:[%s7 + $0x8] sm:$0xf]
        %v4258 = vld [vmem:[%s7 + $0xc] sm:$0xf]
        %v4259 = vld [vmem:[%s7 + $0x10] sm:$0xf]
        %v4260 = vld [vmem:[%s7 + $0x14] sm:$0xf]
        %v4261 = vld [vmem:[%s7 + $0x18] sm:$0xf]
        %v4262 = vld [vmem:[%s7 + $0x1c] sm:$0xf]
        %v4263 = vld [vmem:[%s7 + $0x20] sm:$0xf]
        %v4264 = vld [vmem:[%s7 + $0x24] sm:$0xf]
        %v4265 = vld [vmem:[%s7 + $0x28] sm:$0xf]
        %v4266 = vld [vmem:[%s7 + $0x2c] sm:$0xf]
        %v4267 = vld [vmem:[%s7 + $0x30] sm:$0xf]
        %v4268 = vld [vmem:[%s7 + $0x34] sm:$0xf]
        %v4269 = vld [vmem:[%s7 + $0x38] sm:$0xf]
        %v4270 = vld [vmem:[%s7 + $0x3c] sm:$0xf]
        %v4271 = vld [vmem:[%s7 + $0x40] sm:$0xf]
        %v4272 = vld [vmem:[%s7 + $0x44] sm:$0xf]
        %v4273 = vld [vmem:[%s7 + $0x48] sm:$0xf]
        %v4274 = vld [vmem:[%s7 + $0x4c] sm:$0xf]
        %v4275 = vld [vmem:[%s7 + $0x50] sm:$0xf]
        %v4276 = vld [vmem:[%s7 + $0x54] sm:$0xf]
        %v4277 = vld [vmem:[%s7 + $0x58] sm:$0xf]
        %v4278 = vld [vmem:[%s7 + $0x5c] sm:$0xf]
        %v4279 = vld [vmem:[%s7 + $0x60] sm:$0xf]
        %v4280 = vld [vmem:[%s7 + $0x64] sm:$0xf]
        %v4281 = vld [vmem:[%s7 + $0x68] sm:$0xf]
        %v4282 = vld [vmem:[%s7 + $0x6c] sm:$0xf]
        %v4283 = vld [vmem:[%s7 + $0x70] sm:$0xf]
        %v4284 = vld [vmem:[%s7 + $0x74] sm:$0xf]
        %v4285 = vld [vmem:[%s7 + $0x78] sm:$0xf]
        %v4286 = vld [vmem:[%s7 + $0x7c] sm:$0xf]
        %v4287 = vld [vmem:[%s7 + $0x80] sm:$0xf]
        %v4288 = vld [vmem:[%s7 + $0x84] sm:$0xf]
        %v4289 = vld [vmem:[%s7 + $0x88] sm:$0xf]
        %v4290 = vld [vmem:[%s7 + $0x8c] sm:$0xf]
        %v4291 = vld [vmem:[%s7 + $0x90] sm:$0xf]
        %v4292 = vld [vmem:[%s7 + $0x94] sm:$0xf]
        %v4293 = vld [vmem:[%s7 + $0x98] sm:$0xf]
        %v4294 = vld [vmem:[%s7 + $0x9c] sm:$0xf]
        %v4295 = vld [vmem:[%s7 + $0xa0] sm:$0xf]
        %v4296 = vld [vmem:[%s7 + $0xa4] sm:$0xf]
        %v4297 = vld [vmem:[%s7 + $0xa8] sm:$0xf]
        %v4298 = vld [vmem:[%s7 + $0xac] sm:$0xf]
        %v4299 = vld [vmem:[%s7 + $0xb0] sm:$0xf]
        %v4300 = vld [vmem:[%s7 + $0xb4] sm:$0xf]
        %v4301 = vld [vmem:[%s7 + $0xb8] sm:$0xf]
        %v4302 = vld [vmem:[%s7 + $0xbc] sm:$0xf]
        %v4303 = vld [vmem:[%s7 + $0xc0] sm:$0xf]
        %v4304 = vld [vmem:[%s7 + $0xc4] sm:$0xf]
        %v4305 = vld [vmem:[%s7 + $0xc8] sm:$0xf]
        %v4306 = vld [vmem:[%s7 + $0xcc] sm:$0xf]
        %v4307 = vld [vmem:[%s7 + $0xd0] sm:$0xf]
        %v4308 = vld [vmem:[%s7 + $0xd4] sm:$0xf]
        %v4309 = vld [vmem:[%s7 + $0xd8] sm:$0xf]
        %v4310 = vld [vmem:[%s7 + $0xdc] sm:$0xf]
        %v4311 = vld [vmem:[%s7 + $0xe0] sm:$0xf]
        %v4312 = vld [vmem:[%s7 + $0xe4] sm:$0xf]
        %v4313 = vld [vmem:[%s7 + $0xe8] sm:$0xf]
        %v4314 = vld [vmem:[%s7 + $0xec] sm:$0xf]
        %v4315 = vld [vmem:[%s7 + $0xf0] sm:$0xf]
        %v4316 = vld [vmem:[%s7 + $0xf4] sm:$0xf]
        %v4317 = vld [vmem:[%s7 + $0xf8] sm:$0xf]
        %v4318 = vld [vmem:[%s7 + $0xfc] sm:$0xf]
        %v4319 = vld [vmem:[%s7 + $0x100] sm:$0xf]
        %v4320 = vld [vmem:[%s7 + $0x104] sm:$0xf]
        %v4321 = vld [vmem:[%s7 + $0x108] sm:$0xf]
        %v4322 = vld [vmem:[%s7 + $0x10c] sm:$0xf]
        %v4323 = vld [vmem:[%s7 + $0x110] sm:$0xf]
        %v4324 = vld [vmem:[%s7 + $0x114] sm:$0xf]
        %v4325 = vld [vmem:[%s7 + $0x118] sm:$0xf]
        %v4326 = vld [vmem:[%s7 + $0x11c] sm:$0xf]
        %v4327 = vld [vmem:[%s7 + $0x120] sm:$0xf]
        %v4328 = vld [vmem:[%s7 + $0x124] sm:$0xf]
        %v4329 = vld [vmem:[%s7 + $0x128] sm:$0xf]
        %v4330 = vld [vmem:[%s7 + $0x12c] sm:$0xf]
        %v4331 = vld [vmem:[%s7 + $0x130] sm:$0xf]
        %v4332 = vld [vmem:[%s7 + $0x134] sm:$0xf]
        %v4333 = vld [vmem:[%s7 + $0x138] sm:$0xf]
        %v4334 = vld [vmem:[%s7 + $0x13c] sm:$0xf]
        %v4335 = vld [vmem:[%s7 + $0x140] sm:$0xf]
        %v4336 = vld [vmem:[%s7 + $0x144] sm:$0xf]
        %v4337 = vld [vmem:[%s7 + $0x148] sm:$0xf]
        %v4338 = vld [vmem:[%s7 + $0x14c] sm:$0xf]
        %v4339 = vld [vmem:[%s7 + $0x150] sm:$0xf]
        %v4340 = vld [vmem:[%s7 + $0x154] sm:$0xf]
        %v4341 = vld [vmem:[%s7 + $0x158] sm:$0xf]
        %v4342 = vld [vmem:[%s7 + $0x15c] sm:$0xf]
        %v4343 = vld [vmem:[%s7 + $0x160] sm:$0xf]
        %v4344 = vld [vmem:[%s7 + $0x164] sm:$0xf]
        %v4345 = vld [vmem:[%s7 + $0x168] sm:$0xf]
        %v4346 = vld [vmem:[%s7 + $0x16c] sm:$0xf]
        %v4347 = vld [vmem:[%s7 + $0x170] sm:$0xf]
        %v4348 = vld [vmem:[%s7 + $0x174] sm:$0xf]
        %v4349 = vld [vmem:[%s7 + $0x178] sm:$0xf]
        %v4350 = vld [vmem:[%s7 + $0x17c] sm:$0xf]
        %v4351 = vld [vmem:[%s7 + $0x180] sm:$0xf]
        %v4352 = vld [vmem:[%s7 + $0x184] sm:$0xf]
        %v4353 = vld [vmem:[%s7 + $0x188] sm:$0xf]
        %v4354 = vld [vmem:[%s7 + $0x18c] sm:$0xf]
        %v4355 = vld [vmem:[%s7 + $0x190] sm:$0xf]
        %v4356 = vld [vmem:[%s7 + $0x194] sm:$0xf]
        %v4357 = vld [vmem:[%s7 + $0x198] sm:$0xf]
        %v4358 = vld [vmem:[%s7 + $0x19c] sm:$0xf]
        %v4359 = vld [vmem:[%s7 + $0x1a0] sm:$0xf]
        %v4360 = vld [vmem:[%s7 + $0x1a4] sm:$0xf]
        %v4361 = vld [vmem:[%s7 + $0x1a8] sm:$0xf]
        %v4362 = vld [vmem:[%s7 + $0x1ac] sm:$0xf]
        %v4363 = vld [vmem:[%s7 + $0x1b0] sm:$0xf]
        %v4364 = vld [vmem:[%s7 + $0x1b4] sm:$0xf]
        %v4365 = vld [vmem:[%s7 + $0x1b8] sm:$0xf]
        %v4366 = vld [vmem:[%s7 + $0x1bc] sm:$0xf]
        %v4367 = vld [vmem:[%s8] sm:$0x1]
        %v4369 = vlaneseq
        %v4370 = vshrl.u32 %v4369, 7
        %v4371 = vsub.s32 0, %v4370
        %v4372 = vrot.slane %v4367, %v4371
        %v4486 = vunpack.c.l.b16 %v4255
        %v4487 = vunpack.c.l.b16 %v4256
        %v4488 = vunpack.c.l.b16 %v4257
        %v4489 = vunpack.c.l.b16 %v4258
        %v4490 = vunpack.c.l.b16 %v4259
        %v4491 = vunpack.c.l.b16 %v4260
        %v4492 = vunpack.c.l.b16 %v4261
        %v4493 = vunpack.c.l.b16 %v4262
        %v4494 = vunpack.c.l.b16 %v4263
        %v4495 = vunpack.c.l.b16 %v4264
        %v4496 = vunpack.c.l.b16 %v4265
        %v4497 = vunpack.c.l.b16 %v4266
        %v4498 = vunpack.c.l.b16 %v4267
        %v4499 = vunpack.c.l.b16 %v4268
        %v4500 = vunpack.c.l.b16 %v4269
        %v4501 = vunpack.c.l.b16 %v4270
        %v4502 = vunpack.c.l.b16 %v4271
        %v4503 = vunpack.c.l.b16 %v4272
        %v4504 = vunpack.c.l.b16 %v4273
        %v4505 = vunpack.c.l.b16 %v4274
        %v4506 = vunpack.c.l.b16 %v4275
        %v4507 = vunpack.c.l.b16 %v4276
        %v4508 = vunpack.c.l.b16 %v4277
        %v4509 = vunpack.c.l.b16 %v4278
        %v4510 = vunpack.c.l.b16 %v4279
        %v4511 = vunpack.c.l.b16 %v4280
        %v4512 = vunpack.c.l.b16 %v4281
        %v4513 = vunpack.c.l.b16 %v4282
        %v4514 = vunpack.c.l.b16 %v4283
        %v4515 = vunpack.c.l.b16 %v4284
        %v4516 = vunpack.c.l.b16 %v4285
        %v4517 = vunpack.c.l.b16 %v4286
        %v4518 = vunpack.c.l.b16 %v4287
        %v4519 = vunpack.c.l.b16 %v4288
        %v4520 = vunpack.c.l.b16 %v4289
        %v4521 = vunpack.c.l.b16 %v4290
        %v4522 = vunpack.c.l.b16 %v4291
        %v4523 = vunpack.c.l.b16 %v4292
        %v4524 = vunpack.c.l.b16 %v4293
        %v4525 = vunpack.c.l.b16 %v4294
        %v4526 = vunpack.c.l.b16 %v4295
        %v4527 = vunpack.c.l.b16 %v4296
        %v4528 = vunpack.c.l.b16 %v4297
        %v4529 = vunpack.c.l.b16 %v4298
        %v4530 = vunpack.c.l.b16 %v4299
        %v4531 = vunpack.c.l.b16 %v4300
        %v4532 = vunpack.c.l.b16 %v4301
        %v4533 = vunpack.c.l.b16 %v4302
        %v4534 = vunpack.c.l.b16 %v4303
        %v4535 = vunpack.c.l.b16 %v4304
        %v4536 = vunpack.c.l.b16 %v4305
        %v4537 = vunpack.c.l.b16 %v4306
        %v4538 = vunpack.c.l.b16 %v4307
        %v4539 = vunpack.c.l.b16 %v4308
        %v4540 = vunpack.c.l.b16 %v4309
        %v4541 = vunpack.c.l.b16 %v4310
        %v4542 = vunpack.c.l.b16 %v4311
        %v4543 = vunpack.c.l.b16 %v4312
        %v4544 = vunpack.c.l.b16 %v4313
        %v4545 = vunpack.c.l.b16 %v4314
        %v4546 = vunpack.c.l.b16 %v4315
        %v4547 = vunpack.c.l.b16 %v4316
        %v4548 = vunpack.c.l.b16 %v4317
        %v4549 = vunpack.c.l.b16 %v4318
        %v4550 = vunpack.c.l.b16 %v4319
        %v4551 = vunpack.c.l.b16 %v4320
        %v4552 = vunpack.c.l.b16 %v4321
        %v4553 = vunpack.c.l.b16 %v4322
        %v4554 = vunpack.c.l.b16 %v4323
        %v4555 = vunpack.c.l.b16 %v4324
        %v4556 = vunpack.c.l.b16 %v4325
        %v4557 = vunpack.c.l.b16 %v4326
        %v4558 = vunpack.c.l.b16 %v4327
        %v4559 = vunpack.c.l.b16 %v4328
        %v4560 = vunpack.c.l.b16 %v4329
        %v4561 = vunpack.c.l.b16 %v4330
        %v4562 = vunpack.c.l.b16 %v4331
        %v4563 = vunpack.c.l.b16 %v4332
        %v4564 = vunpack.c.l.b16 %v4333
        %v4565 = vunpack.c.l.b16 %v4334
        %v4566 = vunpack.c.l.b16 %v4335
        %v4567 = vunpack.c.l.b16 %v4336
        %v4568 = vunpack.c.l.b16 %v4337
        %v4569 = vunpack.c.l.b16 %v4338
        %v4570 = vunpack.c.l.b16 %v4339
        %v4571 = vunpack.c.l.b16 %v4340
        %v4572 = vunpack.c.l.b16 %v4341
        %v4573 = vunpack.c.l.b16 %v4342
        %v4574 = vunpack.c.l.b16 %v4343
        %v4575 = vunpack.c.l.b16 %v4344
        %v4576 = vunpack.c.l.b16 %v4345
        %v4577 = vunpack.c.l.b16 %v4346
        %v4578 = vunpack.c.l.b16 %v4347
        %v4579 = vunpack.c.l.b16 %v4348
        %v4580 = vunpack.c.l.b16 %v4349
        %v4581 = vunpack.c.l.b16 %v4350
        %v4582 = vunpack.c.l.b16 %v4351
        %v4583 = vunpack.c.l.b16 %v4352
        %v4584 = vunpack.c.l.b16 %v4353
        %v4585 = vunpack.c.l.b16 %v4354
        %v4586 = vunpack.c.l.b16 %v4355
        %v4587 = vunpack.c.l.b16 %v4356
        %v4588 = vunpack.c.l.b16 %v4357
        %v4589 = vunpack.c.l.b16 %v4358
        %v4590 = vunpack.c.l.b16 %v4359
        %v4591 = vunpack.c.l.b16 %v4360
        %v4592 = vunpack.c.l.b16 %v4361
        %v4593 = vunpack.c.l.b16 %v4362
        %v4594 = vunpack.c.l.b16 %v4363
        %v4595 = vunpack.c.l.b16 %v4364
        %v4596 = vunpack.c.l.b16 %v4365
        %v4597 = vunpack.c.l.b16 %v4366
        %v4598 = vpack.c.b16 %v4487, %v4486
        %v4599 = vpack.c.b16 %v4489, %v4488
        %v4600 = vpack.c.b16 %v4491, %v4490
        %v4601 = vpack.c.b16 %v4493, %v4492
        %v4602 = vpack.c.b16 %v4495, %v4494
        %v4603 = vpack.c.b16 %v4497, %v4496
        %v4604 = vpack.c.b16 %v4499, %v4498
        %v4605 = vpack.c.b16 %v4501, %v4500
        %v4606 = vpack.c.b16 %v4503, %v4502
        %v4607 = vpack.c.b16 %v4505, %v4504
        %v4608 = vpack.c.b16 %v4507, %v4506
        %v4609 = vpack.c.b16 %v4509, %v4508
        %v4610 = vpack.c.b16 %v4511, %v4510
        %v4611 = vpack.c.b16 %v4513, %v4512
        %v4612 = vpack.c.b16 %v4515, %v4514
        %v4613 = vpack.c.b16 %v4517, %v4516
        %v4614 = vpack.c.b16 %v4519, %v4518
        %v4615 = vpack.c.b16 %v4521, %v4520
        %v4616 = vpack.c.b16 %v4523, %v4522
        %v4617 = vpack.c.b16 %v4525, %v4524
        %v4618 = vpack.c.b16 %v4527, %v4526
        %v4619 = vpack.c.b16 %v4529, %v4528
        %v4620 = vpack.c.b16 %v4531, %v4530
        %v4621 = vpack.c.b16 %v4533, %v4532
        %v4622 = vpack.c.b16 %v4535, %v4534
        %v4623 = vpack.c.b16 %v4537, %v4536
        %v4624 = vpack.c.b16 %v4539, %v4538
        %v4625 = vpack.c.b16 %v4541, %v4540
        %v4626 = vpack.c.b16 %v4543, %v4542
        %v4627 = vpack.c.b16 %v4545, %v4544
        %v4628 = vpack.c.b16 %v4547, %v4546
        %v4629 = vpack.c.b16 %v4549, %v4548
        %v4630 = vpack.c.b16 %v4551, %v4550
        %v4631 = vpack.c.b16 %v4553, %v4552
        %v4632 = vpack.c.b16 %v4555, %v4554
        %v4633 = vpack.c.b16 %v4557, %v4556
        %v4634 = vpack.c.b16 %v4559, %v4558
        %v4635 = vpack.c.b16 %v4561, %v4560
        %v4636 = vpack.c.b16 %v4563, %v4562
        %v4637 = vpack.c.b16 %v4565, %v4564
        %v4638 = vpack.c.b16 %v4567, %v4566
        %v4639 = vpack.c.b16 %v4569, %v4568
        %v4640 = vpack.c.b16 %v4571, %v4570
        %v4641 = vpack.c.b16 %v4573, %v4572
        %v4642 = vpack.c.b16 %v4575, %v4574
        %v4643 = vpack.c.b16 %v4577, %v4576
        %v4644 = vpack.c.b16 %v4579, %v4578
        %v4645 = vpack.c.b16 %v4581, %v4580
        %v4646 = vpack.c.b16 %v4583, %v4582
        %v4647 = vpack.c.b16 %v4585, %v4584
        %v4648 = vpack.c.b16 %v4587, %v4586
        %v4649 = vpack.c.b16 %v4589, %v4588
        %v4650 = vpack.c.b16 %v4591, %v4590
        %v4651 = vpack.c.b16 %v4593, %v4592
        %v4652 = vpack.c.b16 %v4595, %v4594
        %v4653 = vpack.c.b16 %v4597, %v4596
        %4710 = vmatprep.subr.bf16.mxu0 0
        %4711 = vmatpush1.bf16.msra.mxu0 %v4598
        %4712 = vmatprep.subr.bf16.mxu0 0
        %4713 = vmatpush1.bf16.msra.mxu0 %v4599
        %4714 = vmatprep.subr.bf16.mxu0 0
        %4715 = vmatpush1.bf16.msra.mxu0 %v4600
        %4716 = vmatprep.subr.bf16.mxu0 0
        %4717 = vmatpush1.bf16.msra.mxu0 %v4601
        %4718 = vmatprep.subr.bf16.mxu0 0
        %4719 = vmatpush1.bf16.msra.mxu0 %v4602
        %4720 = vmatprep.subr.bf16.mxu0 0
        %4721 = vmatpush1.bf16.msra.mxu0 %v4603
        %4722 = vmatprep.subr.bf16.mxu0 0
        %4723 = vmatpush1.bf16.msra.mxu0 %v4604
        %4724 = vmatprep.subr.bf16.mxu0 0
        %4725 = vmatpush1.bf16.msra.mxu0 %v4605
        %4726 = vmatprep.subr.bf16.mxu0 0
        %4727 = vmatpush1.bf16.msra.mxu0 %v4606
        %4728 = vmatprep.subr.bf16.mxu0 0
        %4729 = vmatpush1.bf16.msra.mxu0 %v4607
        %4730 = vmatprep.subr.bf16.mxu0 0
        %4731 = vmatpush1.bf16.msra.mxu0 %v4608
        %4732 = vmatprep.subr.bf16.mxu0 0
        %4733 = vmatpush1.bf16.msra.mxu0 %v4609
        %4734 = vmatprep.subr.bf16.mxu0 0
        %4735 = vmatpush1.bf16.msra.mxu0 %v4610
        %4736 = vmatprep.subr.bf16.mxu0 0
        %4737 = vmatpush1.bf16.msra.mxu0 %v4611
        %4738 = vmatprep.subr.bf16.mxu0 0
        %4739 = vmatpush1.bf16.msra.mxu0 %v4612
        %4740 = vmatprep.subr.bf16.mxu0 0
        %4741 = vmatpush1.bf16.msra.mxu0 %v4613
        %4742 = vmatprep.mubr.bf16.mxu0 %v4144
        %4743 = vmatmul.mubr.bf16.gmra.mrb[0].mxu0 %v4143
        %v4744 = vpop.f32.mrb[0].mxu0
        %v4745 = vadd.f32 %v4372, %v4744
        %v4746 = vpop.f32.mrb[0].mxu0
        %v4747 = vpop.f32.mrb[0].mxu0
        %v4748 = vadd.f32 %v4372, %v4747
        %v4749 = vpop.f32.mrb[0].mxu0
        %4750 = vmatprep.mubr.bf16.mxu0 %v4151
        %4751 = vmatmul.mubr.bf16.gmra.mrb[0].mxu0 %v4150
        %v4752 = vpop.f32.mrb[0].mxu0
        %v4753 = vadd.f32 %v4372, %v4752
        %v4754 = vpop.f32.mrb[0].mxu0
        %v4755 = vpop.f32.mrb[0].mxu0
        %v4756 = vadd.f32 %v4372, %v4755
        %v4757 = vpop.f32.mrb[0].mxu0
        %4758 = vmatprep.mubr.bf16.mxu0 %v4158
        %4759 = vmatmul.mubr.bf16.gmra.mrb[0].mxu0 %v4157
        %v4760 = vpop.f32.mrb[0].mxu0
        %v4761 = vadd.f32 %v4372, %v4760
        %v4762 = vpop.f32.mrb[0].mxu0
        %v4763 = vpop.f32.mrb[0].mxu0
        %v4764 = vadd.f32 %v4372, %v4763
        %v4765 = vpop.f32.mrb[0].mxu0
        %4766 = vmatprep.mubr.bf16.mxu0 %v4165
        %4767 = vmatmul.mubr.bf16.gmra.mrb[0].mxu0 %v4164
        %v4768 = vpop.f32.mrb[0].mxu0
        %v4769 = vadd.f32 %v4372, %v4768
        %v4770 = vpop.f32.mrb[0].mxu0
        %v4771 = vpop.f32.mrb[0].mxu0
        %v4772 = vadd.f32 %v4372, %v4771
        %v4773 = vpop.f32.mrb[0].mxu0
        %4774 = vmatprep.mubr.bf16.mxu0 %v4172
        %4775 = vmatmul.mubr.bf16.gmra.mrb[0].mxu0 %v4171
        %v4776 = vpop.f32.mrb[0].mxu0
        %v4777 = vadd.f32 %v4372, %v4776
        %v4778 = vpop.f32.mrb[0].mxu0
        %v4779 = vpop.f32.mrb[0].mxu0
        %v4780 = vadd.f32 %v4372, %v4779
        %v4781 = vpop.f32.mrb[0].mxu0
        %4782 = vmatprep.mubr.bf16.mxu0 %v4179
        %4783 = vmatmul.mubr.bf16.gmra.mrb[0].mxu0 %v4178
        %v4784 = vpop.f32.mrb[0].mxu0
        %v4785 = vadd.f32 %v4372, %v4784
        %v4786 = vpop.f32.mrb[0].mxu0
        %v4787 = vpop.f32.mrb[0].mxu0
        %v4788 = vadd.f32 %v4372, %v4787
        %v4789 = vpop.f32.mrb[0].mxu0
        %4790 = vmatprep.mubr.bf16.mxu0 %v4186
        %4791 = vmatmul.mubr.bf16.gmra.mrb[0].mxu0 %v4185
        %v4792 = vpop.f32.mrb[0].mxu0
        %v4793 = vadd.f32 %v4372, %v4792
        %v4794 = vpop.f32.mrb[0].mxu0
        %v4795 = vpop.f32.mrb[0].mxu0
        %v4796 = vadd.f32 %v4372, %v4795
        %v4797 = vpop.f32.mrb[0].mxu0
        %4798 = vmatprep.mubr.bf16.mxu0 %v4193
        %4799 = vmatmul.mubr.bf16.gmra.mrb[0].mxu0 %v4192
        %v4800 = vpop.f32.mrb[0].mxu0
        %v4801 = vadd.f32 %v4372, %v4800
        %v4802 = vpop.f32.mrb[0].mxu0
        %v4803 = vpop.f32.mrb[0].mxu0
        %v4804 = vadd.f32 %v4372, %v4803
        %v4805 = vpop.f32.mrb[0].mxu0
        %4806 = vmatprep.mubr.bf16.mxu0 %v4200
        %4807 = vmatmul.mubr.bf16.gmra.mrb[0].mxu0 %v4199
        %v4808 = vpop.f32.mrb[0].mxu0
        %v4809 = vadd.f32 %v4372, %v4808
        %v4810 = vpop.f32.mrb[0].mxu0
        %v4811 = vpop.f32.mrb[0].mxu0
        %v4812 = vadd.f32 %v4372, %v4811
        %v4813 = vpop.f32.mrb[0].mxu0
        %4814 = vmatprep.mubr.bf16.mxu0 %v4207
        %4815 = vmatmul.mubr.bf16.gmra.mrb[0].mxu0 %v4206
        %v4816 = vpop.f32.mrb[0].mxu0
        %v4817 = vadd.f32 %v4372, %v4816
        %v4818 = vpop.f32.mrb[0].mxu0
        %v4819 = vpop.f32.mrb[0].mxu0
        %v4820 = vadd.f32 %v4372, %v4819
        %v4821 = vpop.f32.mrb[0].mxu0
        %4822 = vmatprep.mubr.bf16.mxu0 %v4214
        %4823 = vmatmul.mubr.bf16.gmra.mrb[0].mxu0 %v4213
        %v4824 = vpop.f32.mrb[0].mxu0
        %v4825 = vadd.f32 %v4372, %v4824
        %v4826 = vpop.f32.mrb[0].mxu0
        %v4827 = vpop.f32.mrb[0].mxu0
        %v4828 = vadd.f32 %v4372, %v4827
        %v4829 = vpop.f32.mrb[0].mxu0
        %4830 = vmatprep.mubr.bf16.mxu0 %v4221
        %4831 = vmatmul.mubr.bf16.gmra.mrb[0].mxu0 %v4220
        %v4832 = vpop.f32.mrb[0].mxu0
        %v4833 = vadd.f32 %v4372, %v4832
        %v4834 = vpop.f32.mrb[0].mxu0
        %v4835 = vpop.f32.mrb[0].mxu0
        %v4836 = vadd.f32 %v4372, %v4835
        %v4837 = vpop.f32.mrb[0].mxu0
        %4838 = vmatprep.mubr.bf16.mxu0 %v4228
        %4839 = vmatmul.mubr.bf16.gmra.mrb[0].mxu0 %v4227
        %v4840 = vpop.f32.mrb[0].mxu0
        %v4841 = vadd.f32 %v4372, %v4840
        %v4842 = vpop.f32.mrb[0].mxu0
        %v4843 = vpop.f32.mrb[0].mxu0
        %v4844 = vadd.f32 %v4372, %v4843
        %v4845 = vpop.f32.mrb[0].mxu0
        %4846 = vmatprep.mubr.bf16.mxu0 %v4235
        %4847 = vmatmul.mubr.bf16.gmra.mrb[0].mxu0 %v4234
        %v4848 = vpop.f32.mrb[0].mxu0
        %v4849 = vadd.f32 %v4372, %v4848
        %v4850 = vpop.f32.mrb[0].mxu0
        %v4851 = vpop.f32.mrb[0].mxu0
        %v4852 = vadd.f32 %v4372, %v4851
        %v4853 = vpop.f32.mrb[0].mxu0
        %4854 = vmatprep.mubr.bf16.mxu0 %v4242
        %4855 = vmatmul.mubr.bf16.gmra.mrb[0].mxu0 %v4241
        %v4856 = vpop.f32.mrb[0].mxu0
        %v4857 = vadd.f32 %v4372, %v4856
        %v4858 = vpop.f32.mrb[0].mxu0
        %v4859 = vpop.f32.mrb[0].mxu0
        %v4860 = vadd.f32 %v4372, %v4859
        %v4861 = vpop.f32.mrb[0].mxu0
        %4862 = vmatprep.mubr.bf16.mxu0 %v4249
        %4863 = vmatmul.mubr.bf16.gmra.mrb[0].mxu0 %v4248
        %v4864 = vpop.f32.mrb[0].mxu0
        %v4865 = vadd.f32 %v4372, %v4864
        %v4866 = vpop.f32.mrb[0].mxu0
        %v4867 = vpop.f32.mrb[0].mxu0
        %v4868 = vadd.f32 %v4372, %v4867
        %v4869 = vpop.f32.mrb[0].mxu0
        %4870 = vdwg.mxu0
        %4871 = vmatprep.subr.bf16.mxu0 0
        %4872 = vmatpush1.bf16.msra.mxu0 %v4614
        %4873 = vmatprep.subr.bf16.mxu0 0
        %4874 = vmatpush1.bf16.msra.mxu0 %v4615
        %4875 = vmatprep.subr.bf16.mxu0 0
        %4876 = vmatpush1.bf16.msra.mxu0 %v4616
        %4877 = vmatprep.subr.bf16.mxu0 0
        %4878 = vmatpush1.bf16.msra.mxu0 %v4617
        %4879 = vmatprep.subr.bf16.mxu0 0
        %4880 = vmatpush1.bf16.msra.mxu0 %v4618
        %4881 = vmatprep.subr.bf16.mxu0 0
        %4882 = vmatpush1.bf16.msra.mxu0 %v4619
        %4883 = vmatprep.subr.bf16.mxu0 0
        %4884 = vmatpush1.bf16.msra.mxu0 %v4620
        %4885 = vmatprep.subr.bf16.mxu0 0
        %4886 = vmatpush1.bf16.msra.mxu0 %v4621
        %4887 = vmatprep.subr.bf16.mxu0 0
        %4888 = vmatpush1.bf16.msra.mxu0 %v4622
        %4889 = vmatprep.subr.bf16.mxu0 0
        %4890 = vmatpush1.bf16.msra.mxu0 %v4623
        %4891 = vmatprep.subr.bf16.mxu0 0
        %4892 = vmatpush1.bf16.msra.mxu0 %v4624
        %4893 = vmatprep.subr.bf16.mxu0 0
        %4894 = vmatpush1.bf16.msra.mxu0 %v4625
        %4895 = vmatprep.subr.bf16.mxu0 0
        %4896 = vmatpush1.bf16.msra.mxu0 %v4626
        %4897 = vmatprep.subr.bf16.mxu0 0
        %4898 = vmatpush1.bf16.msra.mxu0 %v4627
        %4899 = vmatprep.subr.bf16.mxu0 0
        %4900 = vmatpush1.bf16.msra.mxu0 %v4628
        %4901 = vmatprep.subr.bf16.mxu0 0
        %4902 = vmatpush1.bf16.msra.mxu0 %v4629
        %4903 = vmatprep.mubr.bf16.mxu0 %v4146
        %4904 = vmatmul.mubr.bf16.gmra.mrb[0].mxu0 %v4145
        %v4905 = vpop.f32.mrb[0].mxu0
        %v4906 = vadd.f32 %v4745, %v4905
        %v4907 = vpop.f32.mrb[0].mxu0
        %v4908 = vpop.f32.mrb[0].mxu0
        %v4909 = vadd.f32 %v4748, %v4908
        %v4910 = vpop.f32.mrb[0].mxu0
        %4911 = vmatprep.mubr.bf16.mxu0 %v4153
        %4912 = vmatmul.mubr.bf16.gmra.mrb[0].mxu0 %v4152
        %v4913 = vpop.f32.mrb[0].mxu0
        %v4914 = vadd.f32 %v4753, %v4913
        %v4915 = vpop.f32.mrb[0].mxu0
        %v4916 = vpop.f32.mrb[0].mxu0
        %v4917 = vadd.f32 %v4756, %v4916
        %v4918 = vpop.f32.mrb[0].mxu0
        %4919 = vmatprep.mubr.bf16.mxu0 %v4160
        %4920 = vmatmul.mubr.bf16.gmra.mrb[0].mxu0 %v4159
        %v4921 = vpop.f32.mrb[0].mxu0
        %v4922 = vadd.f32 %v4761, %v4921
        %v4923 = vpop.f32.mrb[0].mxu0
        %v4924 = vpop.f32.mrb[0].mxu0
        %v4925 = vadd.f32 %v4764, %v4924
        %v4926 = vpop.f32.mrb[0].mxu0
        %4927 = vmatprep.mubr.bf16.mxu0 %v4167
        %4928 = vmatmul.mubr.bf16.gmra.mrb[0].mxu0 %v4166
        %v4929 = vpop.f32.mrb[0].mxu0
        %v4930 = vadd.f32 %v4769, %v4929
        %v4931 = vpop.f32.mrb[0].mxu0
        %v4932 = vpop.f32.mrb[0].mxu0
        %v4933 = vadd.f32 %v4772, %v4932
        %v4934 = vpop.f32.mrb[0].mxu0
        %4935 = vmatprep.mubr.bf16.mxu0 %v4174
        %4936 = vmatmul.mubr.bf16.gmra.mrb[0].mxu0 %v4173
        %v4937 = vpop.f32.mrb[0].mxu0
        %v4938 = vadd.f32 %v4777, %v4937
        %v4939 = vpop.f32.mrb[0].mxu0
        %v4940 = vpop.f32.mrb[0].mxu0
        %v4941 = vadd.f32 %v4780, %v4940
        %v4942 = vpop.f32.mrb[0].mxu0
        %4943 = vmatprep.mubr.bf16.mxu0 %v4181
        %4944 = vmatmul.mubr.bf16.gmra.mrb[0].mxu0 %v4180
        %v4945 = vpop.f32.mrb[0].mxu0
        %v4946 = vadd.f32 %v4785, %v4945
        %v4947 = vpop.f32.mrb[0].mxu0
        %v4948 = vpop.f32.mrb[0].mxu0
        %v4949 = vadd.f32 %v4788, %v4948
        %v4950 = vpop.f32.mrb[0].mxu0
        %4951 = vmatprep.mubr.bf16.mxu0 %v4188
        %4952 = vmatmul.mubr.bf16.gmra.mrb[0].mxu0 %v4187
        %v4953 = vpop.f32.mrb[0].mxu0
        %v4954 = vadd.f32 %v4793, %v4953
        %v4955 = vpop.f32.mrb[0].mxu0
        %v4956 = vpop.f32.mrb[0].mxu0
        %v4957 = vadd.f32 %v4796, %v4956
        %v4958 = vpop.f32.mrb[0].mxu0
        %4959 = vmatprep.mubr.bf16.mxu0 %v4195
        %4960 = vmatmul.mubr.bf16.gmra.mrb[0].mxu0 %v4194
        %v4961 = vpop.f32.mrb[0].mxu0
        %v4962 = vadd.f32 %v4801, %v4961
        %v4963 = vpop.f32.mrb[0].mxu0
        %v4964 = vpop.f32.mrb[0].mxu0
        %v4965 = vadd.f32 %v4804, %v4964
        %v4966 = vpop.f32.mrb[0].mxu0
        %4967 = vmatprep.mubr.bf16.mxu0 %v4202
        %4968 = vmatmul.mubr.bf16.gmra.mrb[0].mxu0 %v4201
        %v4969 = vpop.f32.mrb[0].mxu0
        %v4970 = vadd.f32 %v4809, %v4969
        %v4971 = vpop.f32.mrb[0].mxu0
        %v4972 = vpop.f32.mrb[0].mxu0
        %v4973 = vadd.f32 %v4812, %v4972
        %v4974 = vpop.f32.mrb[0].mxu0
        %4975 = vmatprep.mubr.bf16.mxu0 %v4209
        %4976 = vmatmul.mubr.bf16.gmra.mrb[0].mxu0 %v4208
        %v4977 = vpop.f32.mrb[0].mxu0
        %v4978 = vadd.f32 %v4817, %v4977
        %v4979 = vpop.f32.mrb[0].mxu0
        %v4980 = vpop.f32.mrb[0].mxu0
        %v4981 = vadd.f32 %v4820, %v4980
        %v4982 = vpop.f32.mrb[0].mxu0
        %4983 = vmatprep.mubr.bf16.mxu0 %v4216
        %4984 = vmatmul.mubr.bf16.gmra.mrb[0].mxu0 %v4215
        %v4985 = vpop.f32.mrb[0].mxu0
        %v4986 = vadd.f32 %v4825, %v4985
        %v4987 = vpop.f32.mrb[0].mxu0
        %v4988 = vpop.f32.mrb[0].mxu0
        %v4989 = vadd.f32 %v4828, %v4988
        %v4990 = vpop.f32.mrb[0].mxu0
        %4991 = vmatprep.mubr.bf16.mxu0 %v4223
        %4992 = vmatmul.mubr.bf16.gmra.mrb[0].mxu0 %v4222
        %v4993 = vpop.f32.mrb[0].mxu0
        %v4994 = vadd.f32 %v4833, %v4993
        %v4995 = vpop.f32.mrb[0].mxu0
        %v4996 = vpop.f32.mrb[0].mxu0
        %v4997 = vadd.f32 %v4836, %v4996
        %v4998 = vpop.f32.mrb[0].mxu0
        %4999 = vmatprep.mubr.bf16.mxu0 %v4230
        %5000 = vmatmul.mubr.bf16.gmra.mrb[0].mxu0 %v4229
        %v5001 = vpop.f32.mrb[0].mxu0
        %v5002 = vadd.f32 %v4841, %v5001
        %v5003 = vpop.f32.mrb[0].mxu0
        %v5004 = vpop.f32.mrb[0].mxu0
        %v5005 = vadd.f32 %v4844, %v5004
        %v5006 = vpop.f32.mrb[0].mxu0
        %5007 = vmatprep.mubr.bf16.mxu0 %v4237
        %5008 = vmatmul.mubr.bf16.gmra.mrb[0].mxu0 %v4236
        %v5009 = vpop.f32.mrb[0].mxu0
        %v5010 = vadd.f32 %v4849, %v5009
        %v5011 = vpop.f32.mrb[0].mxu0
        %v5012 = vpop.f32.mrb[0].mxu0
        %v5013 = vadd.f32 %v4852, %v5012
        %v5014 = vpop.f32.mrb[0].mxu0
        %5015 = vmatprep.mubr.bf16.mxu0 %v4244
        %5016 = vmatmul.mubr.bf16.gmra.mrb[0].mxu0 %v4243
        %v5017 = vpop.f32.mrb[0].mxu0
        %v5018 = vadd.f32 %v4857, %v5017
        %v5019 = vpop.f32.mrb[0].mxu0
        %v5020 = vpop.f32.mrb[0].mxu0
        %v5021 = vadd.f32 %v4860, %v5020
        %v5022 = vpop.f32.mrb[0].mxu0
        %5023 = vmatprep.mubr.bf16.mxu0 %v4251
        %5024 = vmatmul.mubr.bf16.gmra.mrb[0].mxu0 %v4250
        %v5025 = vpop.f32.mrb[0].mxu0
        %v5026 = vadd.f32 %v4865, %v5025
        %v5027 = vpop.f32.mrb[0].mxu0
        %v5028 = vpop.f32.mrb[0].mxu0
        %v5029 = vadd.f32 %v4868, %v5028
        %v5030 = vpop.f32.mrb[0].mxu0
        %5031 = vdwg.mxu0
        %5032 = vmatprep.subr.bf16.mxu0 0
        %5033 = vmatpush1.bf16.msra.mxu0 %v4630
        %5034 = vmatprep.subr.bf16.mxu0 0
        %5035 = vmatpush1.bf16.msra.mxu0 %v4631
        %5036 = vmatprep.subr.bf16.mxu0 0
        %5037 = vmatpush1.bf16.msra.mxu0 %v4632
        %5038 = vmatprep.subr.bf16.mxu0 0
        %5039 = vmatpush1.bf16.msra.mxu0 %v4633
        %5040 = vmatprep.subr.bf16.mxu0 0
        %5041 = vmatpush1.bf16.msra.mxu0 %v4634
        %5042 = vmatprep.subr.bf16.mxu0 0
        %5043 = vmatpush1.bf16.msra.mxu0 %v4635
        %5044 = vmatprep.subr.bf16.mxu0 0
        %5045 = vmatpush1.bf16.msra.mxu0 %v4636
        %5046 = vmatprep.subr.bf16.mxu0 0
        %5047 = vmatpush1.bf16.msra.mxu0 %v4637
        %5048 = vmatprep.subr.bf16.mxu0 0
        %5049 = vmatpush1.bf16.msra.mxu0 %v4638
        %5050 = vmatprep.subr.bf16.mxu0 0
        %5051 = vmatpush1.bf16.msra.mxu0 %v4639
        %5052 = vmatprep.subr.bf16.mxu0 0
        %5053 = vmatpush1.bf16.msra.mxu0 %v4640
        %5054 = vmatprep.subr.bf16.mxu0 0
        %5055 = vmatpush1.bf16.msra.mxu0 %v4641
        %5056 = vmatprep.subr.bf16.mxu0 0
        %5057 = vmatpush1.bf16.msra.mxu0 %v4642
        %5058 = vmatprep.subr.bf16.mxu0 0
        %5059 = vmatpush1.bf16.msra.mxu0 %v4643
        %5060 = vmatprep.subr.bf16.mxu0 0
        %5061 = vmatpush1.bf16.msra.mxu0 %v4644
        %5062 = vmatprep.subr.bf16.mxu0 0
        %5063 = vmatpush1.bf16.msra.mxu0 %v4645
        %5064 = vmatprep.mubr.bf16.mxu0 %v4148
        %5065 = vmatmul.mubr.bf16.gmra.mrb[0].mxu0 %v4147
        %v5066 = vpop.f32.mrb[0].mxu0
        %v5067 = vadd.f32 %v4906, %v5066
        %v5068 = vpop.f32.mrb[0].mxu0
        %v5069 = vpop.f32.mrb[0].mxu0
        %v5070 = vadd.f32 %v4909, %v5069
        %v5071 = vpop.f32.mrb[0].mxu0
        %5072 = vmatprep.mubr.bf16.mxu0 %v4155
        %5073 = vmatmul.mubr.bf16.gmra.mrb[0].mxu0 %v4154
        %v5074 = vpop.f32.mrb[0].mxu0
        %v5075 = vadd.f32 %v4914, %v5074
        %v5076 = vpop.f32.mrb[0].mxu0
        %v5077 = vpop.f32.mrb[0].mxu0
        %v5078 = vadd.f32 %v4917, %v5077
        %v5079 = vpop.f32.mrb[0].mxu0
        %5080 = vmatprep.mubr.bf16.mxu0 %v4162
        %5081 = vmatmul.mubr.bf16.gmra.mrb[0].mxu0 %v4161
        %v5082 = vpop.f32.mrb[0].mxu0
        %v5083 = vadd.f32 %v4922, %v5082
        %v5084 = vpop.f32.mrb[0].mxu0
        %v5085 = vpop.f32.mrb[0].mxu0
        %v5086 = vadd.f32 %v4925, %v5085
        %v5087 = vpop.f32.mrb[0].mxu0
        %5088 = vmatprep.mubr.bf16.mxu0 %v4169
        %5089 = vmatmul.mubr.bf16.gmra.mrb[0].mxu0 %v4168
        %v5090 = vpop.f32.mrb[0].mxu0
        %v5091 = vadd.f32 %v4930, %v5090
        %v5092 = vpop.f32.mrb[0].mxu0
        %v5093 = vpop.f32.mrb[0].mxu0
        %v5094 = vadd.f32 %v4933, %v5093
        %v5095 = vpop.f32.mrb[0].mxu0
        %5096 = vmatprep.mubr.bf16.mxu0 %v4176
        %5097 = vmatmul.mubr.bf16.gmra.mrb[0].mxu0 %v4175
        %v5098 = vpop.f32.mrb[0].mxu0
        %v5099 = vadd.f32 %v4938, %v5098
        %v5100 = vpop.f32.mrb[0].mxu0
        %v5101 = vpop.f32.mrb[0].mxu0
        %v5102 = vadd.f32 %v4941, %v5101
        %v5103 = vpop.f32.mrb[0].mxu0
        %5104 = vmatprep.mubr.bf16.mxu0 %v4183
        %5105 = vmatmul.mubr.bf16.gmra.mrb[0].mxu0 %v4182
        %v5106 = vpop.f32.mrb[0].mxu0
        %v5107 = vadd.f32 %v4946, %v5106
        %v5108 = vpop.f32.mrb[0].mxu0
        %v5109 = vpop.f32.mrb[0].mxu0
        %v5110 = vadd.f32 %v4949, %v5109
        %v5111 = vpop.f32.mrb[0].mxu0
        %5112 = vmatprep.mubr.bf16.mxu0 %v4190
        %5113 = vmatmul.mubr.bf16.gmra.mrb[0].mxu0 %v4189
        %v5114 = vpop.f32.mrb[0].mxu0
        %v5115 = vadd.f32 %v4954, %v5114
        %v5116 = vpop.f32.mrb[0].mxu0
        %v5117 = vpop.f32.mrb[0].mxu0
        %v5118 = vadd.f32 %v4957, %v5117
        %v5119 = vpop.f32.mrb[0].mxu0
        %5120 = vmatprep.mubr.bf16.mxu0 %v4197
        %5121 = vmatmul.mubr.bf16.gmra.mrb[0].mxu0 %v4196
        %v5122 = vpop.f32.mrb[0].mxu0
        %v5123 = vadd.f32 %v4962, %v5122
        %v5124 = vpop.f32.mrb[0].mxu0
        %v5125 = vpop.f32.mrb[0].mxu0
        %v5126 = vadd.f32 %v4965, %v5125
        %v5127 = vpop.f32.mrb[0].mxu0
        %5128 = vmatprep.mubr.bf16.mxu0 %v4204
        %5129 = vmatmul.mubr.bf16.gmra.mrb[0].mxu0 %v4203
        %v5130 = vpop.f32.mrb[0].mxu0
        %v5131 = vadd.f32 %v4970, %v5130
        %v5132 = vpop.f32.mrb[0].mxu0
        %v5133 = vpop.f32.mrb[0].mxu0
        %v5134 = vadd.f32 %v4973, %v5133
        %v5135 = vpop.f32.mrb[0].mxu0
        %5136 = vmatprep.mubr.bf16.mxu0 %v4211
        %5137 = vmatmul.mubr.bf16.gmra.mrb[0].mxu0 %v4210
        %v5138 = vpop.f32.mrb[0].mxu0
        %v5139 = vadd.f32 %v4978, %v5138
        %v5140 = vpop.f32.mrb[0].mxu0
        %v5141 = vpop.f32.mrb[0].mxu0
        %v5142 = vadd.f32 %v4981, %v5141
        %v5143 = vpop.f32.mrb[0].mxu0
        %5144 = vmatprep.mubr.bf16.mxu0 %v4218
        %5145 = vmatmul.mubr.bf16.gmra.mrb[0].mxu0 %v4217
        %v5146 = vpop.f32.mrb[0].mxu0
        %v5147 = vadd.f32 %v4986, %v5146
        %v5148 = vpop.f32.mrb[0].mxu0
        %v5149 = vpop.f32.mrb[0].mxu0
        %v5150 = vadd.f32 %v4989, %v5149
        %v5151 = vpop.f32.mrb[0].mxu0
        %5152 = vmatprep.mubr.bf16.mxu0 %v4225
        %5153 = vmatmul.mubr.bf16.gmra.mrb[0].mxu0 %v4224
        %v5154 = vpop.f32.mrb[0].mxu0
        %v5155 = vadd.f32 %v4994, %v5154
        %v5156 = vpop.f32.mrb[0].mxu0
        %v5157 = vpop.f32.mrb[0].mxu0
        %v5158 = vadd.f32 %v4997, %v5157
        %v5159 = vpop.f32.mrb[0].mxu0
        %5160 = vmatprep.mubr.bf16.mxu0 %v4232
        %5161 = vmatmul.mubr.bf16.gmra.mrb[0].mxu0 %v4231
        %v5162 = vpop.f32.mrb[0].mxu0
        %v5163 = vadd.f32 %v5002, %v5162
        %v5164 = vpop.f32.mrb[0].mxu0
        %v5165 = vpop.f32.mrb[0].mxu0
        %v5166 = vadd.f32 %v5005, %v5165
        %v5167 = vpop.f32.mrb[0].mxu0
        %5168 = vmatprep.mubr.bf16.mxu0 %v4239
        %5169 = vmatmul.mubr.bf16.gmra.mrb[0].mxu0 %v4238
        %v5170 = vpop.f32.mrb[0].mxu0
        %v5171 = vadd.f32 %v5010, %v5170
        %v5172 = vpop.f32.mrb[0].mxu0
        %v5173 = vpop.f32.mrb[0].mxu0
        %v5174 = vadd.f32 %v5013, %v5173
        %v5175 = vpop.f32.mrb[0].mxu0
        %5176 = vmatprep.mubr.bf16.mxu0 %v4246
        %5177 = vmatmul.mubr.bf16.gmra.mrb[0].mxu0 %v4245
        %v5178 = vpop.f32.mrb[0].mxu0
        %v5179 = vadd.f32 %v5018, %v5178
        %v5180 = vpop.f32.mrb[0].mxu0
        %v5181 = vpop.f32.mrb[0].mxu0
        %v5182 = vadd.f32 %v5021, %v5181
        %v5183 = vpop.f32.mrb[0].mxu0
        %5184 = vmatprep.mubr.bf16.mxu0 %v4253
        %5185 = vmatmul.mubr.bf16.gmra.mrb[0].mxu0 %v4252
        %v5186 = vpop.f32.mrb[0].mxu0
        %v5187 = vadd.f32 %v5026, %v5186
        %v5188 = vpop.f32.mrb[0].mxu0
        %v5189 = vpop.f32.mrb[0].mxu0
        %v5190 = vadd.f32 %v5029, %v5189
        %v5191 = vpop.f32.mrb[0].mxu0
        %5192 = vdwg.mxu0
        %5193 = vmatprep.subr.bf16.mxu0 0
        %5194 = vmatpush1.bf16.msra.mxu0 %v4646
        %5195 = vmatprep.subr.bf16.mxu0 0
        %5196 = vmatpush1.bf16.msra.mxu0 %v4647
        %5197 = vmatprep.subr.bf16.mxu0 0
        %5198 = vmatpush1.bf16.msra.mxu0 %v4648
        %5199 = vmatprep.subr.bf16.mxu0 0
        %5200 = vmatpush1.bf16.msra.mxu0 %v4649
        %5201 = vmatprep.subr.bf16.mxu0 0
        %5202 = vmatpush1.bf16.msra.mxu0 %v4650
        %5203 = vmatprep.subr.bf16.mxu0 0
        %5204 = vmatpush1.bf16.msra.mxu0 %v4651
        %5205 = vmatprep.subr.bf16.mxu0 0
        %5206 = vmatpush1.bf16.msra.mxu0 %v4652
        %5207 = vmatprep.subr.bf16.mxu0 0
        %5208 = vmatpush1.bf16.msra.mxu0 %v4653
        %5209 = vmatprep.subr.bf16.mxu0 0
        %5210 = vmatpush1.bf16.msra.mxu0 0
        %5211 = vmatprep.subr.bf16.mxu0 0
        %5212 = vmatpush1.bf16.msra.mxu0 0
        %5213 = vmatprep.subr.bf16.mxu0 0
        %5214 = vmatpush1.bf16.msra.mxu0 0
        %5215 = vmatprep.subr.bf16.mxu0 0
        %5216 = vmatpush1.bf16.msra.mxu0 0
        %5217 = vmatprep.subr.bf16.mxu0 0
        %5218 = vmatpush1.bf16.msra.mxu0 0
        %5219 = vmatprep.subr.bf16.mxu0 0
        %5220 = vmatpush1.bf16.msra.mxu0 0
        %5221 = vmatprep.subr.bf16.mxu0 0
        %5222 = vmatpush1.bf16.msra.mxu0 0
        %5223 = vmatprep.subr.bf16.mxu0 0
        %5224 = vmatpush1.bf16.msra.mxu0 0
        %5225 = vmatprep.mubr.bf16.mxu0 0
        %5226 = vmatmul.mubr.bf16.gmra.mrb[0].mxu0 %v4149
        %v5227 = vpop.f32.mrb[0].mxu0
        %v5228 = vadd.f32 %v5067, %v5227
        %v5229 = vpop.f32.mrb[0].mxu0
        %v5230 = vpop.f32.mrb[0].mxu0
        %v5231 = vadd.f32 %v5070, %v5230
        %v5232 = vpop.f32.mrb[0].mxu0
        %5233 = vmatprep.mubr.bf16.mxu0 0
        %5234 = vmatmul.mubr.bf16.gmra.mrb[0].mxu0 %v4156
        %v5235 = vpop.f32.mrb[0].mxu0
        %v5236 = vadd.f32 %v5075, %v5235
        %v5237 = vpop.f32.mrb[0].mxu0
        %v5238 = vpop.f32.mrb[0].mxu0
        %v5239 = vadd.f32 %v5078, %v5238
        %v5240 = vpop.f32.mrb[0].mxu0
        %5241 = vmatprep.mubr.bf16.mxu0 0
        %5242 = vmatmul.mubr.bf16.gmra.mrb[0].mxu0 %v4163
        %v5243 = vpop.f32.mrb[0].mxu0
        %v5244 = vadd.f32 %v5083, %v5243
        %v5245 = vpop.f32.mrb[0].mxu0
        %v5246 = vpop.f32.mrb[0].mxu0
        %v5247 = vadd.f32 %v5086, %v5246
        %v5248 = vpop.f32.mrb[0].mxu0
        %5249 = vmatprep.mubr.bf16.mxu0 0
        %5250 = vmatmul.mubr.bf16.gmra.mrb[0].mxu0 %v4170
        %v5251 = vpop.f32.mrb[0].mxu0
        %v5252 = vadd.f32 %v5091, %v5251
        %v5253 = vpop.f32.mrb[0].mxu0
        %v5254 = vpop.f32.mrb[0].mxu0
        %v5255 = vadd.f32 %v5094, %v5254
        %v5256 = vpop.f32.mrb[0].mxu0
        %5257 = vmatprep.mubr.bf16.mxu0 0
        %5258 = vmatmul.mubr.bf16.gmra.mrb[0].mxu0 %v4177
        %v5259 = vpop.f32.mrb[0].mxu0
        %v5260 = vadd.f32 %v5099, %v5259
        %v5261 = vpop.f32.mrb[0].mxu0
        %v5262 = vpop.f32.mrb[0].mxu0
        %v5263 = vadd.f32 %v5102, %v5262
        %v5264 = vpop.f32.mrb[0].mxu0
        %5265 = vmatprep.mubr.bf16.mxu0 0
        %5266 = vmatmul.mubr.bf16.gmra.mrb[0].mxu0 %v4184
        %v5267 = vpop.f32.mrb[0].mxu0
        %v5268 = vadd.f32 %v5107, %v5267
        %v5269 = vpop.f32.mrb[0].mxu0
        %v5270 = vpop.f32.mrb[0].mxu0
        %v5271 = vadd.f32 %v5110, %v5270
        %v5272 = vpop.f32.mrb[0].mxu0
        %5273 = vmatprep.mubr.bf16.mxu0 0
        %5274 = vmatmul.mubr.bf16.gmra.mrb[0].mxu0 %v4191
        %v5275 = vpop.f32.mrb[0].mxu0
        %v5276 = vadd.f32 %v5115, %v5275
        %v5277 = vpop.f32.mrb[0].mxu0
        %v5278 = vpop.f32.mrb[0].mxu0
        %v5279 = vadd.f32 %v5118, %v5278
        %v5280 = vpop.f32.mrb[0].mxu0
        %5281 = vmatprep.mubr.bf16.mxu0 0
        %5282 = vmatmul.mubr.bf16.gmra.mrb[0].mxu0 %v4198
        %v5283 = vpop.f32.mrb[0].mxu0
        %v5284 = vadd.f32 %v5123, %v5283
        %v5285 = vpop.f32.mrb[0].mxu0
        %v5286 = vpop.f32.mrb[0].mxu0
        %v5287 = vadd.f32 %v5126, %v5286
        %v5288 = vpop.f32.mrb[0].mxu0
        %5289 = vmatprep.mubr.bf16.mxu0 0
        %5290 = vmatmul.mubr.bf16.gmra.mrb[0].mxu0 %v4205
        %v5291 = vpop.f32.mrb[0].mxu0
        %v5292 = vadd.f32 %v5131, %v5291
        %v5293 = vpop.f32.mrb[0].mxu0
        %v5294 = vpop.f32.mrb[0].mxu0
        %v5295 = vadd.f32 %v5134, %v5294
        %v5296 = vpop.f32.mrb[0].mxu0
        %5297 = vmatprep.mubr.bf16.mxu0 0
        %5298 = vmatmul.mubr.bf16.gmra.mrb[0].mxu0 %v4212
        %v5299 = vpop.f32.mrb[0].mxu0
        %v5300 = vadd.f32 %v5139, %v5299
        %v5301 = vpop.f32.mrb[0].mxu0
        %v5302 = vpop.f32.mrb[0].mxu0
        %v5303 = vadd.f32 %v5142, %v5302
        %v5304 = vpop.f32.mrb[0].mxu0
        %5305 = vmatprep.mubr.bf16.mxu0 0
        %5306 = vmatmul.mubr.bf16.gmra.mrb[0].mxu0 %v4219
        %v5307 = vpop.f32.mrb[0].mxu0
        %v5308 = vadd.f32 %v5147, %v5307
        %v5309 = vpop.f32.mrb[0].mxu0
        %v5310 = vpop.f32.mrb[0].mxu0
        %v5311 = vadd.f32 %v5150, %v5310
        %v5312 = vpop.f32.mrb[0].mxu0
        %5313 = vmatprep.mubr.bf16.mxu0 0
        %5314 = vmatmul.mubr.bf16.gmra.mrb[0].mxu0 %v4226
        %v5315 = vpop.f32.mrb[0].mxu0
        %v5316 = vadd.f32 %v5155, %v5315
        %v5317 = vpop.f32.mrb[0].mxu0
        %v5318 = vpop.f32.mrb[0].mxu0
        %v5319 = vadd.f32 %v5158, %v5318
        %v5320 = vpop.f32.mrb[0].mxu0
        %5321 = vmatprep.mubr.bf16.mxu0 0
        %5322 = vmatmul.mubr.bf16.gmra.mrb[0].mxu0 %v4233
        %v5323 = vpop.f32.mrb[0].mxu0
        %v5324 = vadd.f32 %v5163, %v5323
        %v5325 = vpop.f32.mrb[0].mxu0
        %v5326 = vpop.f32.mrb[0].mxu0
        %v5327 = vadd.f32 %v5166, %v5326
        %v5328 = vpop.f32.mrb[0].mxu0
        %5329 = vmatprep.mubr.bf16.mxu0 0
        %5330 = vmatmul.mubr.bf16.gmra.mrb[0].mxu0 %v4240
        %v5331 = vpop.f32.mrb[0].mxu0
        %v5332 = vadd.f32 %v5171, %v5331
        %v5333 = vpop.f32.mrb[0].mxu0
        %v5334 = vpop.f32.mrb[0].mxu0
        %v5335 = vadd.f32 %v5174, %v5334
        %v5336 = vpop.f32.mrb[0].mxu0
        %5337 = vmatprep.mubr.bf16.mxu0 0
        %5338 = vmatmul.mubr.bf16.gmra.mrb[0].mxu0 %v4247
        %v5339 = vpop.f32.mrb[0].mxu0
        %v5340 = vadd.f32 %v5179, %v5339
        %v5341 = vpop.f32.mrb[0].mxu0
        %v5342 = vpop.f32.mrb[0].mxu0
        %v5343 = vadd.f32 %v5182, %v5342
        %v5344 = vpop.f32.mrb[0].mxu0
        %5345 = vmatprep.mubr.bf16.mxu0 0
        %5346 = vmatmul.mubr.bf16.gmra.mrb[0].mxu0 %v4254
        %v5347 = vpop.f32.mrb[0].mxu0
        %v5348 = vadd.f32 %v5187, %v5347
        %v5349 = vpop.f32.mrb[0].mxu0
        %v5350 = vpop.f32.mrb[0].mxu0
        %v5351 = vadd.f32 %v5190, %v5350
        %v5352 = vpop.f32.mrb[0].mxu0
        %5353 = vdwg.mxu0
        %v5354 = vmax.f32 %v5228, 0.0
        %v5355 = vmax.f32 %v5231, 0.0
        %v5356 = vmax.f32 %v5236, 0.0
        %v5357 = vmax.f32 %v5239, 0.0
        %v5358 = vmax.f32 %v5244, 0.0
        %v5359 = vmax.f32 %v5247, 0.0
        %v5360 = vmax.f32 %v5252, 0.0
        %v5361 = vmax.f32 %v5255, 0.0
        %v5362 = vmax.f32 %v5260, 0.0
        %v5363 = vmax.f32 %v5263, 0.0
        %v5364 = vmax.f32 %v5268, 0.0
        %v5365 = vmax.f32 %v5271, 0.0
        %v5366 = vmax.f32 %v5276, 0.0
        %v5367 = vmax.f32 %v5279, 0.0
        %v5368 = vmax.f32 %v5284, 0.0
        %v5369 = vmax.f32 %v5287, 0.0
        %v5370 = vmax.f32 %v5292, 0.0
        %v5371 = vmax.f32 %v5295, 0.0
        %v5372 = vmax.f32 %v5300, 0.0
        %v5373 = vmax.f32 %v5303, 0.0
        %v5374 = vmax.f32 %v5308, 0.0
        %v5375 = vmax.f32 %v5311, 0.0
        %v5376 = vmax.f32 %v5316, 0.0
        %v5377 = vmax.f32 %v5319, 0.0
        %v5378 = vmax.f32 %v5324, 0.0
        %v5379 = vmax.f32 %v5327, 0.0
        %v5380 = vmax.f32 %v5332, 0.0
        %v5381 = vmax.f32 %v5335, 0.0
        %v5382 = vmax.f32 %v5340, 0.0
        %v5383 = vmax.f32 %v5343, 0.0
        %v5384 = vmax.f32 %v5348, 0.0
        %v5385 = vmax.f32 %v5351, 0.0
        %v5386 = vpack.c.bf16 %v5355, %v5354
        %v5387 = vpack.c.bf16 %v5357, %v5356
        %v5388 = vpack.c.bf16 %v5359, %v5358
        %v5389 = vpack.c.bf16 %v5361, %v5360
        %v5390 = vpack.c.bf16 %v5363, %v5362
        %v5391 = vpack.c.bf16 %v5365, %v5364
        %v5392 = vpack.c.bf16 %v5367, %v5366
        %v5393 = vpack.c.bf16 %v5369, %v5368
        %v5394 = vpack.c.bf16 %v5371, %v5370
        %v5395 = vpack.c.bf16 %v5373, %v5372
        %v5396 = vpack.c.bf16 %v5375, %v5374
        %v5397 = vpack.c.bf16 %v5377, %v5376
        %v5398 = vpack.c.bf16 %v5379, %v5378
        %v5399 = vpack.c.bf16 %v5381, %v5380
        %v5400 = vpack.c.bf16 %v5383, %v5382
        %v5401 = vpack.c.bf16 %v5385, %v5384
        %v5402 = vld [vmem:[%s9] sm:$0xf]
        %v5403 = vld [vmem:[%s10] sm:$0x1]
        %v5405 = vlaneseq
        %v5406 = vshrl.u32 %v5405, 7
        %v5407 = vsub.s32 0, %v5406
        %v5408 = vrot.slane %v5403, %v5407
        %v5411 = vsel %vm496, %v5386, 0
        %v5414 = vsel %vm496, %v5387, 0
        %v5417 = vsel %vm496, %v5388, 0
        %v5420 = vsel %vm496, %v5389, 0
        %v5423 = vsel %vm496, %v5390, 0
        %v5426 = vsel %vm496, %v5391, 0
        %v5429 = vsel %vm496, %v5392, 0
        %v5432 = vsel %vm496, %v5393, 0
        %v5435 = vsel %vm496, %v5394, 0
        %v5438 = vsel %vm496, %v5395, 0
        %v5441 = vsel %vm496, %v5396, 0
        %v5444 = vsel %vm496, %v5397, 0
        %v5447 = vsel %vm496, %v5398, 0
        %v5450 = vsel %vm496, %v5399, 0
        %v5453 = vsel %vm496, %v5400, 0
        %v5456 = vsel %vm496, %v5401, 0
        %v5459 = vsel %vm545, %v5402, 0
        %5461 = vmatprep.subr.bf16.mxu0 0
        %5462 = vmatpush1.bf16.msra.mxu0 %v5459
        %5463 = vmatprep.subr.bf16.mxu0 0
        %5464 = vmatpush1.bf16.msra.mxu0 0
        %5465 = vmatprep.subr.bf16.mxu0 0
        %5466 = vmatpush1.bf16.msra.mxu0 0
        %5467 = vmatprep.subr.bf16.mxu0 0
        %5468 = vmatpush1.bf16.msra.mxu0 0
        %5469 = vmatprep.subr.bf16.mxu0 0
        %5470 = vmatpush1.bf16.msra.mxu0 0
        %5471 = vmatprep.subr.bf16.mxu0 0
        %5472 = vmatpush1.bf16.msra.mxu0 0
        %5473 = vmatprep.subr.bf16.mxu0 0
        %5474 = vmatpush1.bf16.msra.mxu0 0
        %5475 = vmatprep.subr.bf16.mxu0 0
        %5476 = vmatpush1.bf16.msra.mxu0 0
        %5477 = vmatprep.subr.bf16.mxu0 0
        %5478 = vmatpush1.bf16.msra.mxu0 0
        %5479 = vmatprep.subr.bf16.mxu0 0
        %5480 = vmatpush1.bf16.msra.mxu0 0
        %5481 = vmatprep.subr.bf16.mxu0 0
        %5482 = vmatpush1.bf16.msra.mxu0 0
        %5483 = vmatprep.subr.bf16.mxu0 0
        %5484 = vmatpush1.bf16.msra.mxu0 0
        %5485 = vmatprep.subr.bf16.mxu0 0
        %5486 = vmatpush1.bf16.msra.mxu0 0
        %5487 = vmatprep.subr.bf16.mxu0 0
        %5488 = vmatpush1.bf16.msra.mxu0 0
        %5489 = vmatprep.subr.bf16.mxu0 0
        %5490 = vmatpush1.bf16.msra.mxu0 0
        %5491 = vmatprep.subr.bf16.mxu0 0
        %5492 = vmatpush1.bf16.msra.mxu0 0
        %5493 = vmatprep.mubr.bf16.mxu0 0
        %5494 = vmatmul.mubr.bf16.gmra.mrb[0].mxu0 %v5411
        %v5495 = vpop.f32.mrb[0].mxu0
        %v5496 = vadd.f32 %v5408, %v5495
        %v5497 = vpop.f32.mrb[0].mxu0
        %v5498 = vpop.f32.mrb[0].mxu0
        %v5499 = vadd.f32 %v5408, %v5498
        %v5500 = vpop.f32.mrb[0].mxu0
        %5501 = vmatprep.mubr.bf16.mxu0 0
        %5502 = vmatmul.mubr.bf16.gmra.mrb[0].mxu0 %v5414
        %v5503 = vpop.f32.mrb[0].mxu0
        %v5504 = vadd.f32 %v5408, %v5503
        %v5505 = vpop.f32.mrb[0].mxu0
        %v5506 = vpop.f32.mrb[0].mxu0
        %v5507 = vadd.f32 %v5408, %v5506
        %v5508 = vpop.f32.mrb[0].mxu0
        %5509 = vmatprep.mubr.bf16.mxu0 0
        %5510 = vmatmul.mubr.bf16.gmra.mrb[0].mxu0 %v5417
        %v5511 = vpop.f32.mrb[0].mxu0
        %v5512 = vadd.f32 %v5408, %v5511
        %v5513 = vpop.f32.mrb[0].mxu0
        %v5514 = vpop.f32.mrb[0].mxu0
        %v5515 = vadd.f32 %v5408, %v5514
        %v5516 = vpop.f32.mrb[0].mxu0
        %5517 = vmatprep.mubr.bf16.mxu0 0
        %5518 = vmatmul.mubr.bf16.gmra.mrb[0].mxu0 %v5420
        %v5519 = vpop.f32.mrb[0].mxu0
        %v5520 = vadd.f32 %v5408, %v5519
        %v5521 = vpop.f32.mrb[0].mxu0
        %v5522 = vpop.f32.mrb[0].mxu0
        %v5523 = vadd.f32 %v5408, %v5522
        %v5524 = vpop.f32.mrb[0].mxu0
        %5525 = vmatprep.mubr.bf16.mxu0 0
        %5526 = vmatmul.mubr.bf16.gmra.mrb[0].mxu0 %v5423
        %v5527 = vpop.f32.mrb[0].mxu0
        %v5528 = vadd.f32 %v5408, %v5527
        %v5529 = vpop.f32.mrb[0].mxu0
        %v5530 = vpop.f32.mrb[0].mxu0
        %v5531 = vadd.f32 %v5408, %v5530
        %v5532 = vpop.f32.mrb[0].mxu0
        %5533 = vmatprep.mubr.bf16.mxu0 0
        %5534 = vmatmul.mubr.bf16.gmra.mrb[0].mxu0 %v5426
        %v5535 = vpop.f32.mrb[0].mxu0
        %v5536 = vadd.f32 %v5408, %v5535
        %v5537 = vpop.f32.mrb[0].mxu0
        %v5538 = vpop.f32.mrb[0].mxu0
        %v5539 = vadd.f32 %v5408, %v5538
        %v5540 = vpop.f32.mrb[0].mxu0
        %5541 = vmatprep.mubr.bf16.mxu0 0
        %5542 = vmatmul.mubr.bf16.gmra.mrb[0].mxu0 %v5429
        %v5543 = vpop.f32.mrb[0].mxu0
        %v5544 = vadd.f32 %v5408, %v5543
        %v5545 = vpop.f32.mrb[0].mxu0
        %v5546 = vpop.f32.mrb[0].mxu0
        %v5547 = vadd.f32 %v5408, %v5546
        %v5548 = vpop.f32.mrb[0].mxu0
        %5549 = vmatprep.mubr.bf16.mxu0 0
        %5550 = vmatmul.mubr.bf16.gmra.mrb[0].mxu0 %v5432
        %v5551 = vpop.f32.mrb[0].mxu0
        %v5552 = vadd.f32 %v5408, %v5551
        %v5553 = vpop.f32.mrb[0].mxu0
        %v5554 = vpop.f32.mrb[0].mxu0
        %v5555 = vadd.f32 %v5408, %v5554
        %v5556 = vpop.f32.mrb[0].mxu0
        %5557 = vmatprep.mubr.bf16.mxu0 0
        %5558 = vmatmul.mubr.bf16.gmra.mrb[0].mxu0 %v5435
        %v5559 = vpop.f32.mrb[0].mxu0
        %v5560 = vadd.f32 %v5408, %v5559
        %v5561 = vpop.f32.mrb[0].mxu0
        %v5562 = vpop.f32.mrb[0].mxu0
        %v5563 = vadd.f32 %v5408, %v5562
        %v5564 = vpop.f32.mrb[0].mxu0
        %5565 = vmatprep.mubr.bf16.mxu0 0
        %5566 = vmatmul.mubr.bf16.gmra.mrb[0].mxu0 %v5438
        %v5567 = vpop.f32.mrb[0].mxu0
        %v5568 = vadd.f32 %v5408, %v5567
        %v5569 = vpop.f32.mrb[0].mxu0
        %v5570 = vpop.f32.mrb[0].mxu0
        %v5571 = vadd.f32 %v5408, %v5570
        %v5572 = vpop.f32.mrb[0].mxu0
        %5573 = vmatprep.mubr.bf16.mxu0 0
        %5574 = vmatmul.mubr.bf16.gmra.mrb[0].mxu0 %v5441
        %v5575 = vpop.f32.mrb[0].mxu0
        %v5576 = vadd.f32 %v5408, %v5575
        %v5577 = vpop.f32.mrb[0].mxu0
        %v5578 = vpop.f32.mrb[0].mxu0
        %v5579 = vadd.f32 %v5408, %v5578
        %v5580 = vpop.f32.mrb[0].mxu0
        %5581 = vmatprep.mubr.bf16.mxu0 0
        %5582 = vmatmul.mubr.bf16.gmra.mrb[0].mxu0 %v5444
        %v5583 = vpop.f32.mrb[0].mxu0
        %v5584 = vadd.f32 %v5408, %v5583
        %v5585 = vpop.f32.mrb[0].mxu0
        %v5586 = vpop.f32.mrb[0].mxu0
        %v5587 = vadd.f32 %v5408, %v5586
        %v5588 = vpop.f32.mrb[0].mxu0
        %5589 = vmatprep.mubr.bf16.mxu0 0
        %5590 = vmatmul.mubr.bf16.gmra.mrb[0].mxu0 %v5447
        %v5591 = vpop.f32.mrb[0].mxu0
        %v5592 = vadd.f32 %v5408, %v5591
        %v5593 = vpop.f32.mrb[0].mxu0
        %v5594 = vpop.f32.mrb[0].mxu0
        %v5595 = vadd.f32 %v5408, %v5594
        %v5596 = vpop.f32.mrb[0].mxu0
        %5597 = vmatprep.mubr.bf16.mxu0 0
        %5598 = vmatmul.mubr.bf16.gmra.mrb[0].mxu0 %v5450
        %v5599 = vpop.f32.mrb[0].mxu0
        %v5600 = vadd.f32 %v5408, %v5599
        %v5601 = vpop.f32.mrb[0].mxu0
        %v5602 = vpop.f32.mrb[0].mxu0
        %v5603 = vadd.f32 %v5408, %v5602
        %v5604 = vpop.f32.mrb[0].mxu0
        %5605 = vmatprep.mubr.bf16.mxu0 0
        %5606 = vmatmul.mubr.bf16.gmra.mrb[0].mxu0 %v5453
        %v5607 = vpop.f32.mrb[0].mxu0
        %v5608 = vadd.f32 %v5408, %v5607
        %v5609 = vpop.f32.mrb[0].mxu0
        %v5610 = vpop.f32.mrb[0].mxu0
        %v5611 = vadd.f32 %v5408, %v5610
        %v5612 = vpop.f32.mrb[0].mxu0
        %5613 = vmatprep.mubr.bf16.mxu0 0
        %5614 = vmatmul.mubr.bf16.gmra.mrb[0].mxu0 %v5456
        %v5615 = vpop.f32.mrb[0].mxu0
        %v5616 = vadd.f32 %v5408, %v5615
        %v5617 = vpop.f32.mrb[0].mxu0
        %v5618 = vpop.f32.mrb[0].mxu0
        %v5619 = vadd.f32 %v5408, %v5618
        %v5620 = vpop.f32.mrb[0].mxu0
        %5621 = vdwg.mxu0
        %v5622 = vlaneseq
        %v5623 = vand.u32 %v5622, 127
        %vm5624 = vcmp.lt.s32.totalorder %v5623, 16
        %v5625 = vsel %vm5624, %v5496, -1e+30
        %v5626 = vsel %vm5624, %v5499, -1e+30
        %v5627 = vsel %vm5624, %v5504, -1e+30
        %v5628 = vsel %vm5624, %v5507, -1e+30
        %v5629 = vsel %vm5624, %v5512, -1e+30
        %v5630 = vsel %vm5624, %v5515, -1e+30
        %v5631 = vsel %vm5624, %v5520, -1e+30
        %v5632 = vsel %vm5624, %v5523, -1e+30
        %v5633 = vsel %vm5624, %v5528, -1e+30
        %v5634 = vsel %vm5624, %v5531, -1e+30
        %v5635 = vsel %vm5624, %v5536, -1e+30
        %v5636 = vsel %vm5624, %v5539, -1e+30
        %v5637 = vsel %vm5624, %v5544, -1e+30
        %v5638 = vsel %vm5624, %v5547, -1e+30
        %v5639 = vsel %vm5624, %v5552, -1e+30
        %v5640 = vsel %vm5624, %v5555, -1e+30
        %v5641 = vsel %vm5624, %v5560, -1e+30
        %v5642 = vsel %vm5624, %v5563, -1e+30
        %v5643 = vsel %vm5624, %v5568, -1e+30
        %v5644 = vsel %vm5624, %v5571, -1e+30
        %v5645 = vsel %vm5624, %v5576, -1e+30
        %v5646 = vsel %vm5624, %v5579, -1e+30
        %v5647 = vsel %vm5624, %v5584, -1e+30
        %v5648 = vsel %vm5624, %v5587, -1e+30
        %v5649 = vsel %vm5624, %v5592, -1e+30
        %v5650 = vsel %vm5624, %v5595, -1e+30
        %v5651 = vsel %vm5624, %v5600, -1e+30
        %v5652 = vsel %vm5624, %v5603, -1e+30
        %v5653 = vsel %vm5624, %v5608, -1e+30
        %v5654 = vsel %vm5624, %v5611, -1e+30
        %v5655 = vsel %vm5624, %v5616, -1e+30
        %v5656 = vsel %vm5624, %v5619, -1e+30
        %5657 = vmax.xlane.f32.xlu0 %v5625
        %v5658 = vpop.xlane.xlu0 %5657
        %5659 = vmax.xlane.f32.xlu0 %v5626
        %v5660 = vpop.xlane.xlu0 %5659
        %5661 = vmax.xlane.f32.xlu0 %v5627
        %v5662 = vpop.xlane.xlu0 %5661
        %5663 = vmax.xlane.f32.xlu0 %v5628
        %v5664 = vpop.xlane.xlu0 %5663
        %5665 = vmax.xlane.f32.xlu0 %v5629
        %v5666 = vpop.xlane.xlu0 %5665
        %5667 = vmax.xlane.f32.xlu0 %v5630
        %v5668 = vpop.xlane.xlu0 %5667
        %5669 = vmax.xlane.f32.xlu0 %v5631
        %v5670 = vpop.xlane.xlu0 %5669
        %5671 = vmax.xlane.f32.xlu0 %v5632
        %v5672 = vpop.xlane.xlu0 %5671
        %5673 = vmax.xlane.f32.xlu0 %v5633
        %v5674 = vpop.xlane.xlu0 %5673
        %5675 = vmax.xlane.f32.xlu0 %v5634
        %v5676 = vpop.xlane.xlu0 %5675
        %5677 = vmax.xlane.f32.xlu0 %v5635
        %v5678 = vpop.xlane.xlu0 %5677
        %5679 = vmax.xlane.f32.xlu0 %v5636
        %v5680 = vpop.xlane.xlu0 %5679
        %5681 = vmax.xlane.f32.xlu0 %v5637
        %v5682 = vpop.xlane.xlu0 %5681
        %5683 = vmax.xlane.f32.xlu0 %v5638
        %v5684 = vpop.xlane.xlu0 %5683
        %5685 = vmax.xlane.f32.xlu0 %v5639
        %v5686 = vpop.xlane.xlu0 %5685
        %5687 = vmax.xlane.f32.xlu0 %v5640
        %v5688 = vpop.xlane.xlu0 %5687
        %5689 = vmax.xlane.f32.xlu0 %v5641
        %v5690 = vpop.xlane.xlu0 %5689
        %5691 = vmax.xlane.f32.xlu0 %v5642
        %v5692 = vpop.xlane.xlu0 %5691
        %5693 = vmax.xlane.f32.xlu0 %v5643
        %v5694 = vpop.xlane.xlu0 %5693
        %5695 = vmax.xlane.f32.xlu0 %v5644
        %v5696 = vpop.xlane.xlu0 %5695
        %5697 = vmax.xlane.f32.xlu0 %v5645
        %v5698 = vpop.xlane.xlu0 %5697
        %5699 = vmax.xlane.f32.xlu0 %v5646
        %v5700 = vpop.xlane.xlu0 %5699
        %5701 = vmax.xlane.f32.xlu0 %v5647
        %v5702 = vpop.xlane.xlu0 %5701
        %5703 = vmax.xlane.f32.xlu0 %v5648
        %v5704 = vpop.xlane.xlu0 %5703
        %5705 = vmax.xlane.f32.xlu0 %v5649
        %v5706 = vpop.xlane.xlu0 %5705
        %5707 = vmax.xlane.f32.xlu0 %v5650
        %v5708 = vpop.xlane.xlu0 %5707
        %5709 = vmax.xlane.f32.xlu0 %v5651
        %v5710 = vpop.xlane.xlu0 %5709
        %5711 = vmax.xlane.f32.xlu0 %v5652
        %v5712 = vpop.xlane.xlu0 %5711
        %5713 = vmax.xlane.f32.xlu0 %v5653
        %v5714 = vpop.xlane.xlu0 %5713
        %5715 = vmax.xlane.f32.xlu0 %v5654
        %v5716 = vpop.xlane.xlu0 %5715
        %5717 = vmax.xlane.f32.xlu0 %v5655
        %v5718 = vpop.xlane.xlu0 %5717
        %5719 = vmax.xlane.f32.xlu0 %v5656
        %v5720 = vpop.xlane.xlu0 %5719
        %v5721 = vsub.f32 %v5496, %v5658
        %v5722 = vsub.f32 %v5499, %v5660
        %v5723 = vsub.f32 %v5504, %v5662
        %v5724 = vsub.f32 %v5507, %v5664
        %v5725 = vsub.f32 %v5512, %v5666
        %v5726 = vsub.f32 %v5515, %v5668
        %v5727 = vsub.f32 %v5520, %v5670
        %v5728 = vsub.f32 %v5523, %v5672
        %v5729 = vsub.f32 %v5528, %v5674
        %v5730 = vsub.f32 %v5531, %v5676
        %v5731 = vsub.f32 %v5536, %v5678
        %v5732 = vsub.f32 %v5539, %v5680
        %v5733 = vsub.f32 %v5544, %v5682
        %v5734 = vsub.f32 %v5547, %v5684
        %v5735 = vsub.f32 %v5552, %v5686
        %v5736 = vsub.f32 %v5555, %v5688
        %v5737 = vsub.f32 %v5560, %v5690
        %v5738 = vsub.f32 %v5563, %v5692
        %v5739 = vsub.f32 %v5568, %v5694
        %v5740 = vsub.f32 %v5571, %v5696
        %v5741 = vsub.f32 %v5576, %v5698
        %v5742 = vsub.f32 %v5579, %v5700
        %v5743 = vsub.f32 %v5584, %v5702
        %v5744 = vsub.f32 %v5587, %v5704
        %v5745 = vsub.f32 %v5592, %v5706
        %v5746 = vsub.f32 %v5595, %v5708
        %v5747 = vsub.f32 %v5600, %v5710
        %v5748 = vsub.f32 %v5603, %v5712
        %v5749 = vsub.f32 %v5608, %v5714
        %v5750 = vsub.f32 %v5611, %v5716
        %v5751 = vsub.f32 %v5616, %v5718
        %v5752 = vsub.f32 %v5619, %v5720
        %v5753 = vmul.f32 %v5721, 1.442695
        %v5754 = vpow.pop %v5753
        %v5755 = vmul.f32 %v5722, 1.442695
        %v5756 = vpow.pop %v5755
        %v5757 = vmul.f32 %v5723, 1.442695
        %v5758 = vpow.pop %v5757
        %v5759 = vmul.f32 %v5724, 1.442695
        %v5760 = vpow.pop %v5759
        %v5761 = vmul.f32 %v5725, 1.442695
        %v5762 = vpow.pop %v5761
        %v5763 = vmul.f32 %v5726, 1.442695
        %v5764 = vpow.pop %v5763
        %v5765 = vmul.f32 %v5727, 1.442695
        %v5766 = vpow.pop %v5765
        %v5767 = vmul.f32 %v5728, 1.442695
        %v5768 = vpow.pop %v5767
        %v5769 = vmul.f32 %v5729, 1.442695
        %v5770 = vpow.pop %v5769
        %v5771 = vmul.f32 %v5730, 1.442695
        %v5772 = vpow.pop %v5771
        %v5773 = vmul.f32 %v5731, 1.442695
        %v5774 = vpow.pop %v5773
        %v5775 = vmul.f32 %v5732, 1.442695
        %v5776 = vpow.pop %v5775
        %v5777 = vmul.f32 %v5733, 1.442695
        %v5778 = vpow.pop %v5777
        %v5779 = vmul.f32 %v5734, 1.442695
        %v5780 = vpow.pop %v5779
        %v5781 = vmul.f32 %v5735, 1.442695
        %v5782 = vpow.pop %v5781
        %v5783 = vmul.f32 %v5736, 1.442695
        %v5784 = vpow.pop %v5783
        %v5785 = vmul.f32 %v5737, 1.442695
        %v5786 = vpow.pop %v5785
        %v5787 = vmul.f32 %v5738, 1.442695
        %v5788 = vpow.pop %v5787
        %v5789 = vmul.f32 %v5739, 1.442695
        %v5790 = vpow.pop %v5789
        %v5791 = vmul.f32 %v5740, 1.442695
        %v5792 = vpow.pop %v5791
        %v5793 = vmul.f32 %v5741, 1.442695
        %v5794 = vpow.pop %v5793
        %v5795 = vmul.f32 %v5742, 1.442695
        %v5796 = vpow.pop %v5795
        %v5797 = vmul.f32 %v5743, 1.442695
        %v5798 = vpow.pop %v5797
        %v5799 = vmul.f32 %v5744, 1.442695
        %v5800 = vpow.pop %v5799
        %v5801 = vmul.f32 %v5745, 1.442695
        %v5802 = vpow.pop %v5801
        %v5803 = vmul.f32 %v5746, 1.442695
        %v5804 = vpow.pop %v5803
        %v5805 = vmul.f32 %v5747, 1.442695
        %v5806 = vpow.pop %v5805
        %v5807 = vmul.f32 %v5748, 1.442695
        %v5808 = vpow.pop %v5807
        %v5809 = vmul.f32 %v5749, 1.442695
        %v5810 = vpow.pop %v5809
        %v5811 = vmul.f32 %v5750, 1.442695
        %v5812 = vpow.pop %v5811
        %v5813 = vmul.f32 %v5751, 1.442695
        %v5814 = vpow.pop %v5813
        %v5815 = vmul.f32 %v5752, 1.442695
        %v5816 = vpow.pop %v5815
        %v5817 = vsel %vm5624, %v5754, 0.0
        %v5818 = vsel %vm5624, %v5756, 0.0
        %v5819 = vsel %vm5624, %v5758, 0.0
        %v5820 = vsel %vm5624, %v5760, 0.0
        %v5821 = vsel %vm5624, %v5762, 0.0
        %v5822 = vsel %vm5624, %v5764, 0.0
        %v5823 = vsel %vm5624, %v5766, 0.0
        %v5824 = vsel %vm5624, %v5768, 0.0
        %v5825 = vsel %vm5624, %v5770, 0.0
        %v5826 = vsel %vm5624, %v5772, 0.0
        %v5827 = vsel %vm5624, %v5774, 0.0
        %v5828 = vsel %vm5624, %v5776, 0.0
        %v5829 = vsel %vm5624, %v5778, 0.0
        %v5830 = vsel %vm5624, %v5780, 0.0
        %v5831 = vsel %vm5624, %v5782, 0.0
        %v5832 = vsel %vm5624, %v5784, 0.0
        %v5833 = vsel %vm5624, %v5786, 0.0
        %v5834 = vsel %vm5624, %v5788, 0.0
        %v5835 = vsel %vm5624, %v5790, 0.0
        %v5836 = vsel %vm5624, %v5792, 0.0
        %v5837 = vsel %vm5624, %v5794, 0.0
        %v5838 = vsel %vm5624, %v5796, 0.0
        %v5839 = vsel %vm5624, %v5798, 0.0
        %v5840 = vsel %vm5624, %v5800, 0.0
        %v5841 = vsel %vm5624, %v5802, 0.0
        %v5842 = vsel %vm5624, %v5804, 0.0
        %v5843 = vsel %vm5624, %v5806, 0.0
        %v5844 = vsel %vm5624, %v5808, 0.0
        %v5845 = vsel %vm5624, %v5810, 0.0
        %v5846 = vsel %vm5624, %v5812, 0.0
        %v5847 = vsel %vm5624, %v5814, 0.0
        %v5848 = vsel %vm5624, %v5816, 0.0
        %5849 = vadd.xlane.f32.xlu0 %v5817
        %v5850 = vpop.xlane.xlu0 %5849
        %5851 = vadd.xlane.f32.xlu0 %v5818
        %v5852 = vpop.xlane.xlu0 %5851
        %5853 = vadd.xlane.f32.xlu0 %v5819
        %v5854 = vpop.xlane.xlu0 %5853
        %5855 = vadd.xlane.f32.xlu0 %v5820
        %v5856 = vpop.xlane.xlu0 %5855
        %5857 = vadd.xlane.f32.xlu0 %v5821
        %v5858 = vpop.xlane.xlu0 %5857
        %5859 = vadd.xlane.f32.xlu0 %v5822
        %v5860 = vpop.xlane.xlu0 %5859
        %5861 = vadd.xlane.f32.xlu0 %v5823
        %v5862 = vpop.xlane.xlu0 %5861
        %5863 = vadd.xlane.f32.xlu0 %v5824
        %v5864 = vpop.xlane.xlu0 %5863
        %5865 = vadd.xlane.f32.xlu0 %v5825
        %v5866 = vpop.xlane.xlu0 %5865
        %5867 = vadd.xlane.f32.xlu0 %v5826
        %v5868 = vpop.xlane.xlu0 %5867
        %5869 = vadd.xlane.f32.xlu0 %v5827
        %v5870 = vpop.xlane.xlu0 %5869
        %5871 = vadd.xlane.f32.xlu0 %v5828
        %v5872 = vpop.xlane.xlu0 %5871
        %5873 = vadd.xlane.f32.xlu0 %v5829
        %v5874 = vpop.xlane.xlu0 %5873
        %5875 = vadd.xlane.f32.xlu0 %v5830
        %v5876 = vpop.xlane.xlu0 %5875
        %5877 = vadd.xlane.f32.xlu0 %v5831
        %v5878 = vpop.xlane.xlu0 %5877
        %5879 = vadd.xlane.f32.xlu0 %v5832
        %v5880 = vpop.xlane.xlu0 %5879
        %5881 = vadd.xlane.f32.xlu0 %v5833
        %v5882 = vpop.xlane.xlu0 %5881
        %5883 = vadd.xlane.f32.xlu0 %v5834
        %v5884 = vpop.xlane.xlu0 %5883
        %5885 = vadd.xlane.f32.xlu0 %v5835
        %v5886 = vpop.xlane.xlu0 %5885
        %5887 = vadd.xlane.f32.xlu0 %v5836
        %v5888 = vpop.xlane.xlu0 %5887
        %5889 = vadd.xlane.f32.xlu0 %v5837
        %v5890 = vpop.xlane.xlu0 %5889
        %5891 = vadd.xlane.f32.xlu0 %v5838
        %v5892 = vpop.xlane.xlu0 %5891
        %5893 = vadd.xlane.f32.xlu0 %v5839
        %v5894 = vpop.xlane.xlu0 %5893
        %5895 = vadd.xlane.f32.xlu0 %v5840
        %v5896 = vpop.xlane.xlu0 %5895
        %5897 = vadd.xlane.f32.xlu0 %v5841
        %v5898 = vpop.xlane.xlu0 %5897
        %5899 = vadd.xlane.f32.xlu0 %v5842
        %v5900 = vpop.xlane.xlu0 %5899
        %5901 = vadd.xlane.f32.xlu0 %v5843
        %v5902 = vpop.xlane.xlu0 %5901
        %5903 = vadd.xlane.f32.xlu0 %v5844
        %v5904 = vpop.xlane.xlu0 %5903
        %5905 = vadd.xlane.f32.xlu0 %v5845
        %v5906 = vpop.xlane.xlu0 %5905
        %5907 = vadd.xlane.f32.xlu0 %v5846
        %v5908 = vpop.xlane.xlu0 %5907
        %5909 = vadd.xlane.f32.xlu0 %v5847
        %v5910 = vpop.xlane.xlu0 %5909
        %5911 = vadd.xlane.f32.xlu0 %v5848
        %v5912 = vpop.xlane.xlu0 %5911
        %v5913 = vrcp.pop %v5850
        %v5914 = vmul.f32 1.0, %v5913
        %v5915 = vrcp.pop %v5852
        %v5916 = vmul.f32 1.0, %v5915
        %v5917 = vrcp.pop %v5854
        %v5918 = vmul.f32 1.0, %v5917
        %v5919 = vrcp.pop %v5856
        %v5920 = vmul.f32 1.0, %v5919
        %v5921 = vrcp.pop %v5858
        %v5922 = vmul.f32 1.0, %v5921
        %v5923 = vrcp.pop %v5860
        %v5924 = vmul.f32 1.0, %v5923
        %v5925 = vrcp.pop %v5862
        %v5926 = vmul.f32 1.0, %v5925
        %v5927 = vrcp.pop %v5864
        %v5928 = vmul.f32 1.0, %v5927
        %v5929 = vrcp.pop %v5866
        %v5930 = vmul.f32 1.0, %v5929
        %v5931 = vrcp.pop %v5868
        %v5932 = vmul.f32 1.0, %v5931
        %v5933 = vrcp.pop %v5870
        %v5934 = vmul.f32 1.0, %v5933
        %v5935 = vrcp.pop %v5872
        %v5936 = vmul.f32 1.0, %v5935
        %v5937 = vrcp.pop %v5874
        %v5938 = vmul.f32 1.0, %v5937
        %v5939 = vrcp.pop %v5876
        %v5940 = vmul.f32 1.0, %v5939
        %v5941 = vrcp.pop %v5878
        %v5942 = vmul.f32 1.0, %v5941
        %v5943 = vrcp.pop %v5880
        %v5944 = vmul.f32 1.0, %v5943
        %v5945 = vrcp.pop %v5882
        %v5946 = vmul.f32 1.0, %v5945
        %v5947 = vrcp.pop %v5884
        %v5948 = vmul.f32 1.0, %v5947
        %v5949 = vrcp.pop %v5886
        %v5950 = vmul.f32 1.0, %v5949
        %v5951 = vrcp.pop %v5888
        %v5952 = vmul.f32 1.0, %v5951
        %v5953 = vrcp.pop %v5890
        %v5954 = vmul.f32 1.0, %v5953
        %v5955 = vrcp.pop %v5892
        %v5956 = vmul.f32 1.0, %v5955
        %v5957 = vrcp.pop %v5894
        %v5958 = vmul.f32 1.0, %v5957
        %v5959 = vrcp.pop %v5896
        %v5960 = vmul.f32 1.0, %v5959
        %v5961 = vrcp.pop %v5898
        %v5962 = vmul.f32 1.0, %v5961
        %v5963 = vrcp.pop %v5900
        %v5964 = vmul.f32 1.0, %v5963
        %v5965 = vrcp.pop %v5902
        %v5966 = vmul.f32 1.0, %v5965
        %v5967 = vrcp.pop %v5904
        %v5968 = vmul.f32 1.0, %v5967
        %v5969 = vrcp.pop %v5906
        %v5970 = vmul.f32 1.0, %v5969
        %v5971 = vrcp.pop %v5908
        %v5972 = vmul.f32 1.0, %v5971
        %v5973 = vrcp.pop %v5910
        %v5974 = vmul.f32 1.0, %v5973
        %v5975 = vrcp.pop %v5912
        %v5976 = vmul.f32 1.0, %v5975
        %v5977 = vmul.f32 %v5817, %v5914
        %v5978 = vmul.f32 %v5818, %v5916
        %v5979 = vmul.f32 %v5819, %v5918
        %v5980 = vmul.f32 %v5820, %v5920
        %v5981 = vmul.f32 %v5821, %v5922
        %v5982 = vmul.f32 %v5822, %v5924
        %v5983 = vmul.f32 %v5823, %v5926
        %v5984 = vmul.f32 %v5824, %v5928
        %v5985 = vmul.f32 %v5825, %v5930
        %v5986 = vmul.f32 %v5826, %v5932
        %v5987 = vmul.f32 %v5827, %v5934
        %v5988 = vmul.f32 %v5828, %v5936
        %v5989 = vmul.f32 %v5829, %v5938
        %v5990 = vmul.f32 %v5830, %v5940
        %v5991 = vmul.f32 %v5831, %v5942
        %v5992 = vmul.f32 %v5832, %v5944
        %v5993 = vmul.f32 %v5833, %v5946
        %v5994 = vmul.f32 %v5834, %v5948
        %v5995 = vmul.f32 %v5835, %v5950
        %v5996 = vmul.f32 %v5836, %v5952
        %v5997 = vmul.f32 %v5837, %v5954
        %v5998 = vmul.f32 %v5838, %v5956
        %v5999 = vmul.f32 %v5839, %v5958
        %v6000 = vmul.f32 %v5840, %v5960
        %v6001 = vmul.f32 %v5841, %v5962
        %v6002 = vmul.f32 %v5842, %v5964
        %v6003 = vmul.f32 %v5843, %v5966
        %v6004 = vmul.f32 %v5844, %v5968
        %v6005 = vmul.f32 %v5845, %v5970
        %v6006 = vmul.f32 %v5846, %v5972
        %v6007 = vmul.f32 %v5847, %v5974
        %v6008 = vmul.f32 %v5848, %v5976
        %6009 = vst [vmem:[%s380] sm:$0xff] %v5977
        %6010 = vst [vmem:[%s380 + $0x8] sm:$0xff] %v5978
        %6011 = vst [vmem:[%s380 + $0x10] sm:$0xff] %v5979
        %6012 = vst [vmem:[%s380 + $0x18] sm:$0xff] %v5980
        %6013 = vst [vmem:[%s380 + $0x20] sm:$0xff] %v5981
        %6014 = vst [vmem:[%s380 + $0x28] sm:$0xff] %v5982
        %6015 = vst [vmem:[%s380 + $0x30] sm:$0xff] %v5983
        %6016 = vst [vmem:[%s380 + $0x38] sm:$0xff] %v5984
        %6017 = vst [vmem:[%s380 + $0x40] sm:$0xff] %v5985
        %6018 = vst [vmem:[%s380 + $0x48] sm:$0xff] %v5986
        %6019 = vst [vmem:[%s380 + $0x50] sm:$0xff] %v5987
        %6020 = vst [vmem:[%s380 + $0x58] sm:$0xff] %v5988
        %6021 = vst [vmem:[%s380 + $0x60] sm:$0xff] %v5989
        %6022 = vst [vmem:[%s380 + $0x68] sm:$0xff] %v5990
        %6023 = vst [vmem:[%s380 + $0x70] sm:$0xff] %v5991
        %6024 = vst [vmem:[%s380 + $0x78] sm:$0xff] %v5992
        %6025 = vst [vmem:[%s380 + $0x80] sm:$0xff] %v5993
        %6026 = vst [vmem:[%s380 + $0x88] sm:$0xff] %v5994
        %6027 = vst [vmem:[%s380 + $0x90] sm:$0xff] %v5995
        %6028 = vst [vmem:[%s380 + $0x98] sm:$0xff] %v5996
        %6029 = vst [vmem:[%s380 + $0xa0] sm:$0xff] %v5997
        %6030 = vst [vmem:[%s380 + $0xa8] sm:$0xff] %v5998
        %6031 = vst [vmem:[%s380 + $0xb0] sm:$0xff] %v5999
        %6032 = vst [vmem:[%s380 + $0xb8] sm:$0xff] %v6000
        %6033 = vst [vmem:[%s380 + $0xc0] sm:$0xff] %v6001
        %6034 = vst [vmem:[%s380 + $0xc8] sm:$0xff] %v6002
        %6035 = vst [vmem:[%s380 + $0xd0] sm:$0xff] %v6003
        %6036 = vst [vmem:[%s380 + $0xd8] sm:$0xff] %v6004
        %6037 = vst [vmem:[%s380 + $0xe0] sm:$0xff] %v6005
        %6038 = vst [vmem:[%s380 + $0xe8] sm:$0xff] %v6006
        %6039 = vst [vmem:[%s380 + $0xf0] sm:$0xff] %v6007
        %6040 = vst [vmem:[%s380 + $0xf8] sm:$0xff] %v6008
        %s6041 = sand.u32 %s269, 1
        %s6042 = scalar_lea.sflag [#allocation3], %s6041
        %s6043 = sand.u32 %s269, 1
        %s6044 = smul.addr %s6043, 256
        %s6045 = scalar_lea.vmem [#allocation2], %s6044
        // Predicated region
        $region65: #{tpu_custom_call.1} parent=63 // pred_check
          %p6046 = pneg %p279
        $region66: #{tpu_custom_call.1} parent=63 // pred_check_branch
          %6048 = sbr.rel (%p6046) target = $region68
        $region67: #{tpu_custom_call.1} parent=63 // pred_region
          %s6049 = smul.u32 32, %s25
          %s6051 = ssub.s32 4096, 4096
          %6052 = vsyncadd %s6042, %s6051
          %s6053 = smul.addr %s6049, 128
          %s6054 = scalar_lea.hbm %s11, %s6053
          %s6055 = sshll.u32 %s6045, 4
          %s6056 = int_to_ptr.vmem [resolvable:$true] %s6055
          %6061 = dma.vmem_to_hbm [thread:$0]  %s6056, 4096, %s6054, %s6042, 128, 128, 8
        $region68: #{tpu_custom_call.1} parent=63 // pred_fallthru
          _
      $region64: #{tpu_custom_call.1} parent=5 // pred_fallthru
        _
      %p6062 = scmp.le.s32.totalorder 2, %s20
      // Predicated region
      $region69: #{tpu_custom_call.1} parent=5 // pred_check
        %p6063 = pneg %p6062
      $region70: #{tpu_custom_call.1} parent=5 // pred_check_branch
        %6065 = sbr.rel (%p6063) target = $region72
      $region71: #{tpu_custom_call.1} parent=5 // pred_region
        %s6066 = ssub.s32 %s20, 2
        // Predicated region
        $region73: #{tpu_custom_call.1} parent=71 // pred_check
          %p6067 = pneg %p285
        $region74: #{tpu_custom_call.1} parent=71 // pred_check_branch
          %6069 = sbr.rel (%p6067) target = $region76
        $region75: #{tpu_custom_call.1} parent=71 // pred_region
          %s6070 = sand.u32 %s270, 1
          %s6071 = scalar_lea.sflag [#allocation3], %s6070
          %s6072 = sand.u32 %s270, 1
          %s6073 = smul.addr %s6072, 256
          %s6074 = scalar_lea.vmem [#allocation2], %s6073
          %6075 = dma.done %s6071, 4096
        $region76: #{tpu_custom_call.1} parent=71 // pred_fallthru
          _
      $region72: #{tpu_custom_call.1} parent=5 // pred_fallthru
        _
    $region6: #{tpu_custom_call.1} parent=1 // loop_footer
      %s24 = sadd.s32 1, %s20
    $region7: #{tpu_custom_call.1} parent=1 // loop_footer_branch
      %19 = sbr.rel target = $region3
    $region8: #{tpu_custom_call.1} parent=1 // loop_exit
      _
    %6076 = vsyncpa [#allocation3], 1
    %s6077 = scalar_lea.sflag [#allocation3], 1
    %6078 = vsyncpa %s6077, 1

</llo_original>
